<compile_context>
chip_gen: v7x
topology: tpu7x:2x2x1
jax: 0.10.0
libtpu: 0.0.40
codegen_flags: <defaults>
</compile_context>

<pallas_src>
import jax
import jax.numpy as jnp
from jax.experimental import pallas as pl
from jax.experimental.pallas import tpu as pltpu


# ----------------------------------------------------------------------------
# Single fused kernel: conv branches + ReLU + MaxPool + GRU + Linear/ReLU/Linear/Sigmoid
# ----------------------------------------------------------------------------
def _fused_forward_kernel(emb_ref, wconv_ref, bconv_ref,
                          wih_ref, bih_ref, whh_ref, bhh_ref,
                          w9_ref, b9_ref, w11_ref, b11_ref,
                          o_ref):
    # emb_ref:   (B, L, Cp=128)          padded embedding output
    # wconv_ref: (K*Cp, Fp=512)          both conv branches, K=5 taps
    # wih_ref:   (Fp, 3*Hp=384)          gate slabs at 128-aligned offsets (r,z,n)
    # whh_ref:   (Hp=128, 3*Hp)
    # w9_ref:    (Hp, 512)   w11_ref: (512, 128)
    B, L, Cp = emb_ref.shape
    KCp, Fp = wconv_ref.shape
    K = KCp // Cp                 # 5
    t_out = L - K + 1             # 12
    T = t_out // 2                # 6 pooled steps
    Hp = whh_ref.shape[0]         # 128
    G3 = whh_ref.shape[1]         # 384

    emb = emb_ref[...]            # (B, L, Cp)

    # ---- both Conv1d branches as ONE matmul over a K-tap window stack ------
    per_batch = []
    for b in range(B):            # B static, tiny
        xb = emb[b]                                               # (L, Cp)
        per_batch.append(jnp.concatenate(
            [xb[k:k + t_out, :] for k in range(K)], axis=-1))     # (t_out, K*Cp)
    stacked = jnp.concatenate(per_batch, axis=0)                  # (B*t_out, K*Cp)

    conv = jnp.dot(stacked, wconv_ref[...],
                   preferred_element_type=jnp.float32) + bconv_ref[...]
    conv = jnp.maximum(conv, 0.0)                                 # ReLU, (B*t_out, Fp)

    # ---- MaxPool1d(k=2, s=2): adjacent-row max with unit-stride slices.
    #      Pooled value for (batch b, time t) lives at row b*t_out + 2*t. ----
    pairmax = jnp.maximum(conv[:-1, :], conv[1:, :])              # (B*t_out-1, Fp)

    # ---- GRU input projection hoisted out of the recurrence (one matmul) ---
    gx_all = jnp.dot(pairmax, wih_ref[...],
                     preferred_element_type=jnp.float32) + bih_ref[...]   # (.., 3*Hp)

    whh = whh_ref[...]
    bhh = jnp.broadcast_to(bhh_ref[...], (B, G3))   # hoist bias broadcast
    h = jnp.zeros((B, Hp), jnp.float32)

    # ---- GRU recurrence, fully unrolled (T small & static); PyTorch gate
    #      order r,z,n with b_hn inside the r-gating ---------------------------
    for t in range(T):
        gx_t = jnp.concatenate(
            [gx_all[b * t_out + 2 * t: b * t_out + 2 * t + 1, :]
             for b in range(B)], axis=0)                          # (B, 3*Hp)
        gh = jnp.dot(h, whh, preferred_element_type=jnp.float32) + bhh
        r = jax.nn.sigmoid(gx_t[:, 0:Hp] + gh[:, 0:Hp])           # 128-aligned slices
        z = jax.nn.sigmoid(gx_t[:, Hp:2 * Hp] + gh[:, Hp:2 * Hp])
        n = jnp.tanh(gx_t[:, 2 * Hp:3 * Hp] + r * gh[:, 2 * Hp:3 * Hp])
        h = (1.0 - z) * n + z * h

    # ---- l9 + ReLU + l11 + Sigmoid (padded cols are exact zeros / ignored) --
    y = jnp.maximum(
        jnp.dot(h, w9_ref[...], preferred_element_type=jnp.float32) + b9_ref[...],
        0.0)                                                      # (B, 512)
    logits = jnp.dot(y, w11_ref[...],
                     preferred_element_type=jnp.float32) + b11_ref[...]   # (B, 128)
    o_ref[...] = jax.nn.sigmoid(logits).astype(o_ref.dtype)       # col 0 is the real output


_VMEM = pl.BlockSpec(memory_space=pltpu.MemorySpace.VMEM)


@jax.jit
def neural_network_forward(ids, packed):
    # l1 Embedding: plain-JAX gather on the feature-padded table.
    # TODO(synk): embedding gather could move in-kernel via scalar-prefetch row DMA.
    # l2 / l7 / l10 Dropout: inference-mode identities.
    emb = jnp.take(packed["emb_table"], ids, axis=0)              # (B, L, 128)
    B = ids.shape[0]
    out = pl.pallas_call(
        _fused_forward_kernel,
        out_shape=jax.ShapeDtypeStruct((B, 128), jnp.float32),
        in_specs=[_VMEM] * 11,
        out_specs=_VMEM,
    )(emb, packed["w_conv"], packed["b_conv"],
      packed["w_ih"], packed["b_ih"], packed["w_hh"], packed["b_hh"],
      packed["w9"], packed["b9"], packed["w11"], packed["b11"])
    return out[:, :1]                                             # (B, 1)


# ----------------------------------------------------------------------------
# Parameters: PyTorch-layout init + one-time packing into padded kernel layouts
# ----------------------------------------------------------------------------
def init_params(key):
    ks = jax.random.split(key, 12)
    H, EMB, VOCAB = 100, 50, 5000

    def w(k, shape, fan_in):
        return jax.random.normal(k, shape, jnp.float32) / jnp.sqrt(float(fan_in))

    return {
        "embedding": w(ks[0], (VOCAB, EMB), EMB),
        "w3": w(ks[1], (200, 50, 4), 50 * 4), "b3": jnp.zeros((200,), jnp.float32),
        "w5": w(ks[2], (200, 50, 5), 50 * 5), "b5": jnp.zeros((200,), jnp.float32),
        "w_ih": w(ks[3], (3 * H, 400), 400),
        "w_hh": w(ks[4], (3 * H, H), H),
        "b_ih": 0.01 * jax.random.normal(ks[5], (3 * H,), jnp.float32),
        "b_hh": 0.01 * jax.random.normal(ks[6], (3 * H,), jnp.float32),
        "w9": w(ks[7], (400, H), H), "b9": jnp.zeros((400,), jnp.float32),
        "w11": w(ks[8], (1, 400), 400), "b11": jnp.zeros((1,), jnp.float32),
    }


def pack_params(p):
    """One-time conversion from PyTorch layouts to lane-dense padded kernel layouts."""
    H, Hp = 100, 128          # GRU hidden (real / padded per-gate slab width)
    C, Cp = 50, 128           # embedding features (real / padded)
    K = 5                     # unified conv tap count (k=4 branch zero-padded)
    F, Fp = 400, 512          # conv-out / GRU-in features (real / padded)
    N9, N9p = 400, 512        # l9 output features
    Op = 128                  # padded final-output width
    f32 = jnp.float32

    emb_table = jnp.pad(p["embedding"], ((0, 0), (0, Cp - C)))    # (5000, 128)

    # Conv branches fused along output channels. Zero-padding the k=4 filter's
    # 5th tap is exact: MaxPool1d(2,2) truncates that branch's 13th output anyway.
    w3 = jnp.pad(p["w3"], ((0, 0), (0, 0), (0, 1)))               # (200, 50, 5)
    w_oc_k = jnp.concatenate([w3, p["w5"]], axis=0)               # (400, 50, 5)
    w_kco = jnp.transpose(w_oc_k, (2, 1, 0))                      # (K, C, O)
    w_kco = jnp.pad(w_kco, ((0, 0), (0, Cp - C), (0, Fp - F)))    # (K, Cp, Fp)
    w_conv = w_kco.reshape(K * Cp, Fp)                            # (640, 512)
    b_conv = jnp.pad(jnp.concatenate([p["b3"], p["b5"]]), (0, Fp - F)).reshape(1, Fp)

    # GRU weights -> per-gate 128-aligned slabs (PyTorch gate order r, z, n).
    w_ih = jnp.zeros((Fp, 3 * Hp), f32)
    w_hh = jnp.zeros((Hp, 3 * Hp), f32)
    b_ih = jnp.zeros((1, 3 * Hp), f32)
    b_hh = jnp.zeros((1, 3 * Hp), f32)
    for g in range(3):
        w_ih = w_ih.at[:F, g * Hp:g * Hp + H].set(p["w_ih"][g * H:(g + 1) * H, :].T)
        w_hh = w_hh.at[:H, g * Hp:g * Hp + H].set(p["w_hh"][g * H:(g + 1) * H, :].T)
        b_ih = b_ih.at[0, g * Hp:g * Hp + H].set(p["b_ih"][g * H:(g + 1) * H])
        b_hh = b_hh.at[0, g * Hp:g * Hp + H].set(p["b_hh"][g * H:(g + 1) * H])

    w9 = jnp.zeros((Hp, N9p), f32).at[:H, :N9].set(p["w9"].T)
    b9 = jnp.pad(p["b9"], (0, N9p - N9)).reshape(1, N9p)
    w11 = jnp.zeros((N9p, Op), f32).at[:N9, :1].set(p["w11"].T)
    b11 = jnp.zeros((1, Op), f32).at[0, 0].set(p["b11"][0])

    return dict(emb_table=emb_table, w_conv=w_conv, b_conv=b_conv,
                w_ih=w_ih, b_ih=b_ih, w_hh=w_hh, b_hh=b_hh,
                w9=w9, b9=b9, w11=w11, b11=b11)


if __name__ == "__main__":
    B, L = 2, 16
    key = jax.random.PRNGKey(0)
    k_ids, k_par = jax.random.split(key)
    ids = jax.random.randint(k_ids, (B, L), 0, 5000, dtype=jnp.int32)

    params = init_params(k_par)
    packed = pack_params(params)          # one-time weight padding / repacking

    out = neural_network_forward(ids, packed)
    jax.block_until_ready(out)
    assert out.shape == (B, 1) and out.dtype == jnp.float32
    print("KERNEL_OK")
</pallas_src>

<mosaic_0001>
module attributes {stable_mosaic.version = 11 : i64} {
  func.func @_fused_forward_kernel(%arg0: memref<2x16x128xf32, #tpu.memory_space<vmem>>, %arg1: memref<640x512xf32, #tpu.memory_space<vmem>>, %arg2: memref<1x512xf32, #tpu.memory_space<vmem>>, %arg3: memref<512x384xf32, #tpu.memory_space<vmem>>, %arg4: memref<1x384xf32, #tpu.memory_space<vmem>>, %arg5: memref<128x384xf32, #tpu.memory_space<vmem>>, %arg6: memref<1x384xf32, #tpu.memory_space<vmem>>, %arg7: memref<128x512xf32, #tpu.memory_space<vmem>>, %arg8: memref<1x512xf32, #tpu.memory_space<vmem>>, %arg9: memref<512x128xf32, #tpu.memory_space<vmem>>, %arg10: memref<1x128xf32, #tpu.memory_space<vmem>>, %arg11: memref<2x128xf32, #tpu.memory_space<vmem>>) attributes {dimension_semantics = [], scalar_prefetch = 0 : i64, scratch_operands = 0 : i64, tpu.core_type = #tpu.core_type<tc>} {
    %c0 = arith.constant 0 : index
    %c0_0 = arith.constant 0 : index
    %c0_1 = arith.constant 0 : index
    %0 = vector.load %arg0[%c0, %c0_0, %c0_1] : memref<2x16x128xf32, #tpu.memory_space<vmem>>, vector<2x16x128xf32>
    %1 = vector.extract_strided_slice %0 {offsets = [0, 0, 0], sizes = [1, 16, 128], strides = [1, 1, 1]} : vector<2x16x128xf32> to vector<1x16x128xf32>
    %2 = vector.shape_cast %1 : vector<1x16x128xf32> to vector<16x128xf32>
    %3 = vector.extract_strided_slice %2 {offsets = [0, 0], sizes = [12, 128], strides = [1, 1]} : vector<16x128xf32> to vector<12x128xf32>
    %4 = vector.extract_strided_slice %2 {offsets = [1, 0], sizes = [12, 128], strides = [1, 1]} : vector<16x128xf32> to vector<12x128xf32>
    %5 = vector.extract_strided_slice %2 {offsets = [2, 0], sizes = [12, 128], strides = [1, 1]} : vector<16x128xf32> to vector<12x128xf32>
    %6 = vector.extract_strided_slice %2 {offsets = [3, 0], sizes = [12, 128], strides = [1, 1]} : vector<16x128xf32> to vector<12x128xf32>
    %7 = vector.extract_strided_slice %2 {offsets = [4, 0], sizes = [12, 128], strides = [1, 1]} : vector<16x128xf32> to vector<12x128xf32>
    %8 = tpu.concatenate %3, %4, %5, %6, %7 in 1 : vector<12x128xf32>, vector<12x128xf32>, vector<12x128xf32>, vector<12x128xf32>, vector<12x128xf32> -> vector<12x640xf32>
    %9 = vector.extract_strided_slice %0 {offsets = [1, 0, 0], sizes = [1, 16, 128], strides = [1, 1, 1]} : vector<2x16x128xf32> to vector<1x16x128xf32>
    %10 = vector.shape_cast %9 : vector<1x16x128xf32> to vector<16x128xf32>
    %11 = vector.extract_strided_slice %10 {offsets = [0, 0], sizes = [12, 128], strides = [1, 1]} : vector<16x128xf32> to vector<12x128xf32>
    %12 = vector.extract_strided_slice %10 {offsets = [1, 0], sizes = [12, 128], strides = [1, 1]} : vector<16x128xf32> to vector<12x128xf32>
    %13 = vector.extract_strided_slice %10 {offsets = [2, 0], sizes = [12, 128], strides = [1, 1]} : vector<16x128xf32> to vector<12x128xf32>
    %14 = vector.extract_strided_slice %10 {offsets = [3, 0], sizes = [12, 128], strides = [1, 1]} : vector<16x128xf32> to vector<12x128xf32>
    %15 = vector.extract_strided_slice %10 {offsets = [4, 0], sizes = [12, 128], strides = [1, 1]} : vector<16x128xf32> to vector<12x128xf32>
    %16 = tpu.concatenate %11, %12, %13, %14, %15 in 1 : vector<12x128xf32>, vector<12x128xf32>, vector<12x128xf32>, vector<12x128xf32>, vector<12x128xf32> -> vector<12x640xf32>
    %17 = tpu.concatenate %8, %16 in 0 : vector<12x640xf32>, vector<12x640xf32> -> vector<24x640xf32>
    %c0_2 = arith.constant 0 : index
    %c0_3 = arith.constant 0 : index
    %18 = vector.load %arg1[%c0_2, %c0_3] : memref<640x512xf32, #tpu.memory_space<vmem>>, vector<640x512xf32>
    %cst = arith.constant dense<0.000000e+00> : vector<24x512xf32>
    %19 = tpu.matmul %17, %18, %cst {dimension_numbers = #tpu.dot_dimension_numbers<[1], [0], [0], [1], [0, 0, 1, 1], [], []>} : vector<24x640xf32>, vector<640x512xf32>, vector<24x512xf32> -> vector<24x512xf32>
    %c0_4 = arith.constant 0 : index
    %c0_5 = arith.constant 0 : index
    %20 = vector.load %arg2[%c0_4, %c0_5] : memref<1x512xf32, #tpu.memory_space<vmem>>, vector<1x512xf32>
    %21 = vector.broadcast %20 : vector<1x512xf32> to vector<24x512xf32>
    %22 = arith.addf %19, %21 : vector<24x512xf32>
    %cst_6 = arith.constant 0.000000e+00 : f32
    %23 = vector.broadcast %cst_6 : f32 to vector<24x512xf32>
    %24 = arith.maximumf %22, %23 : vector<24x512xf32>
    %25 = vector.extract_strided_slice %24 {offsets = [0, 0], sizes = [23, 512], strides = [1, 1]} : vector<24x512xf32> to vector<23x512xf32>
    %26 = vector.extract_strided_slice %24 {offsets = [1, 0], sizes = [23, 512], strides = [1, 1]} : vector<24x512xf32> to vector<23x512xf32>
    %27 = arith.maximumf %25, %26 : vector<23x512xf32>
    %c0_7 = arith.constant 0 : index
    %c0_8 = arith.constant 0 : index
    %28 = vector.load %arg3[%c0_7, %c0_8] : memref<512x384xf32, #tpu.memory_space<vmem>>, vector<512x384xf32>
    %cst_9 = arith.constant dense<0.000000e+00> : vector<23x384xf32>
    %29 = tpu.matmul %27, %28, %cst_9 {dimension_numbers = #tpu.dot_dimension_numbers<[1], [0], [0], [1], [0, 0, 1, 1], [], []>} : vector<23x512xf32>, vector<512x384xf32>, vector<23x384xf32> -> vector<23x384xf32>
    %c0_10 = arith.constant 0 : index
    %c0_11 = arith.constant 0 : index
    %30 = vector.load %arg4[%c0_10, %c0_11] : memref<1x384xf32, #tpu.memory_space<vmem>>, vector<1x384xf32>
    %31 = vector.broadcast %30 : vector<1x384xf32> to vector<23x384xf32>
    %32 = arith.addf %29, %31 : vector<23x384xf32>
    %c0_12 = arith.constant 0 : index
    %c0_13 = arith.constant 0 : index
    %33 = vector.load %arg5[%c0_12, %c0_13] : memref<128x384xf32, #tpu.memory_space<vmem>>, vector<128x384xf32>
    %c0_14 = arith.constant 0 : index
    %c0_15 = arith.constant 0 : index
    %34 = vector.load %arg6[%c0_14, %c0_15] : memref<1x384xf32, #tpu.memory_space<vmem>>, vector<1x384xf32>
    %35 = vector.shape_cast %34 : vector<1x384xf32> to vector<1x384xf32>
    %36 = vector.broadcast %35 : vector<1x384xf32> to vector<2x384xf32>
    %cst_16 = arith.constant 0.000000e+00 : f32
    %37 = vector.broadcast %cst_16 : f32 to vector<2x128xf32>
    %38 = vector.extract_strided_slice %32 {offsets = [0, 0], sizes = [1, 384], strides = [1, 1]} : vector<23x384xf32> to vector<1x384xf32>
    %39 = vector.extract_strided_slice %32 {offsets = [12, 0], sizes = [1, 384], strides = [1, 1]} : vector<23x384xf32> to vector<1x384xf32>
    %40 = tpu.concatenate %38, %39 in 0 : vector<1x384xf32>, vector<1x384xf32> -> vector<2x384xf32>
    %cst_17 = arith.constant dense<0.000000e+00> : vector<2x384xf32>
    %41 = tpu.matmul %37, %33, %cst_17 {dimension_numbers = #tpu.dot_dimension_numbers<[1], [0], [0], [1], [0, 0, 1, 1], [], []>} : vector<2x128xf32>, vector<128x384xf32>, vector<2x384xf32> -> vector<2x384xf32>
    %42 = arith.addf %41, %36 : vector<2x384xf32>
    %43 = vector.extract_strided_slice %40 {offsets = [0, 0], sizes = [2, 128], strides = [1, 1]} : vector<2x384xf32> to vector<2x128xf32>
    %44 = vector.extract_strided_slice %42 {offsets = [0, 0], sizes = [2, 128], strides = [1, 1]} : vector<2x384xf32> to vector<2x128xf32>
    %45 = arith.addf %43, %44 : vector<2x128xf32>
    %46 = arith.negf %45 : vector<2x128xf32>
    %47 = math.exp %46 : vector<2x128xf32>
    %cst_18 = arith.constant 1.000000e+00 : f32
    %48 = vector.broadcast %cst_18 : f32 to vector<2x128xf32>
    %49 = arith.addf %48, %47 : vector<2x128xf32>
    %50 = arith.divf %48, %49 : vector<2x128xf32>
    %51 = vector.extract_strided_slice %40 {offsets = [0, 128], sizes = [2, 128], strides = [1, 1]} : vector<2x384xf32> to vector<2x128xf32>
    %52 = vector.extract_strided_slice %42 {offsets = [0, 128], sizes = [2, 128], strides = [1, 1]} : vector<2x384xf32> to vector<2x128xf32>
    %53 = arith.addf %51, %52 : vector<2x128xf32>
    %54 = arith.negf %53 : vector<2x128xf32>
    %55 = math.exp %54 : vector<2x128xf32>
    %cst_19 = arith.constant 1.000000e+00 : f32
    %56 = vector.broadcast %cst_19 : f32 to vector<2x128xf32>
    %57 = arith.addf %56, %55 : vector<2x128xf32>
    %58 = arith.divf %56, %57 : vector<2x128xf32>
    %59 = vector.extract_strided_slice %40 {offsets = [0, 256], sizes = [2, 128], strides = [1, 1]} : vector<2x384xf32> to vector<2x128xf32>
    %60 = vector.extract_strided_slice %42 {offsets = [0, 256], sizes = [2, 128], strides = [1, 1]} : vector<2x384xf32> to vector<2x128xf32>
    %61 = arith.mulf %50, %60 : vector<2x128xf32>
    %62 = arith.addf %59, %61 : vector<2x128xf32>
    %63 = math.tanh %62 : vector<2x128xf32>
    %cst_20 = arith.constant 1.000000e+00 : f32
    %64 = vector.broadcast %cst_20 : f32 to vector<2x128xf32>
    %65 = arith.subf %64, %58 : vector<2x128xf32>
    %66 = arith.mulf %65, %63 : vector<2x128xf32>
    %67 = arith.mulf %58, %37 : vector<2x128xf32>
    %68 = arith.addf %66, %67 : vector<2x128xf32>
    %69 = vector.extract_strided_slice %32 {offsets = [2, 0], sizes = [1, 384], strides = [1, 1]} : vector<23x384xf32> to vector<1x384xf32>
    %70 = vector.extract_strided_slice %32 {offsets = [14, 0], sizes = [1, 384], strides = [1, 1]} : vector<23x384xf32> to vector<1x384xf32>
    %71 = tpu.concatenate %69, %70 in 0 : vector<1x384xf32>, vector<1x384xf32> -> vector<2x384xf32>
    %cst_21 = arith.constant dense<0.000000e+00> : vector<2x384xf32>
    %72 = tpu.matmul %68, %33, %cst_21 {dimension_numbers = #tpu.dot_dimension_numbers<[1], [0], [0], [1], [0, 0, 1, 1], [], []>} : vector<2x128xf32>, vector<128x384xf32>, vector<2x384xf32> -> vector<2x384xf32>
    %73 = arith.addf %72, %36 : vector<2x384xf32>
    %74 = vector.extract_strided_slice %71 {offsets = [0, 0], sizes = [2, 128], strides = [1, 1]} : vector<2x384xf32> to vector<2x128xf32>
    %75 = vector.extract_strided_slice %73 {offsets = [0, 0], sizes = [2, 128], strides = [1, 1]} : vector<2x384xf32> to vector<2x128xf32>
    %76 = arith.addf %74, %75 : vector<2x128xf32>
    %77 = arith.negf %76 : vector<2x128xf32>
    %78 = math.exp %77 : vector<2x128xf32>
    %cst_22 = arith.constant 1.000000e+00 : f32
    %79 = vector.broadcast %cst_22 : f32 to vector<2x128xf32>
    %80 = arith.addf %79, %78 : vector<2x128xf32>
    %81 = arith.divf %79, %80 : vector<2x128xf32>
    %82 = vector.extract_strided_slice %71 {offsets = [0, 128], sizes = [2, 128], strides = [1, 1]} : vector<2x384xf32> to vector<2x128xf32>
    %83 = vector.extract_strided_slice %73 {offsets = [0, 128], sizes = [2, 128], strides = [1, 1]} : vector<2x384xf32> to vector<2x128xf32>
    %84 = arith.addf %82, %83 : vector<2x128xf32>
    %85 = arith.negf %84 : vector<2x128xf32>
    %86 = math.exp %85 : vector<2x128xf32>
    %cst_23 = arith.constant 1.000000e+00 : f32
    %87 = vector.broadcast %cst_23 : f32 to vector<2x128xf32>
    %88 = arith.addf %87, %86 : vector<2x128xf32>
    %89 = arith.divf %87, %88 : vector<2x128xf32>
    %90 = vector.extract_strided_slice %71 {offsets = [0, 256], sizes = [2, 128], strides = [1, 1]} : vector<2x384xf32> to vector<2x128xf32>
    %91 = vector.extract_strided_slice %73 {offsets = [0, 256], sizes = [2, 128], strides = [1, 1]} : vector<2x384xf32> to vector<2x128xf32>
    %92 = arith.mulf %81, %91 : vector<2x128xf32>
    %93 = arith.addf %90, %92 : vector<2x128xf32>
    %94 = math.tanh %93 : vector<2x128xf32>
    %cst_24 = arith.constant 1.000000e+00 : f32
    %95 = vector.broadcast %cst_24 : f32 to vector<2x128xf32>
    %96 = arith.subf %95, %89 : vector<2x128xf32>
    %97 = arith.mulf %96, %94 : vector<2x128xf32>
    %98 = arith.mulf %89, %68 : vector<2x128xf32>
    %99 = arith.addf %97, %98 : vector<2x128xf32>
    %100 = vector.extract_strided_slice %32 {offsets = [4, 0], sizes = [1, 384], strides = [1, 1]} : vector<23x384xf32> to vector<1x384xf32>
    %101 = vector.extract_strided_slice %32 {offsets = [16, 0], sizes = [1, 384], strides = [1, 1]} : vector<23x384xf32> to vector<1x384xf32>
    %102 = tpu.concatenate %100, %101 in 0 : vector<1x384xf32>, vector<1x384xf32> -> vector<2x384xf32>
    %cst_25 = arith.constant dense<0.000000e+00> : vector<2x384xf32>
    %103 = tpu.matmul %99, %33, %cst_25 {dimension_numbers = #tpu.dot_dimension_numbers<[1], [0], [0], [1], [0, 0, 1, 1], [], []>} : vector<2x128xf32>, vector<128x384xf32>, vector<2x384xf32> -> vector<2x384xf32>
    %104 = arith.addf %103, %36 : vector<2x384xf32>
    %105 = vector.extract_strided_slice %102 {offsets = [0, 0], sizes = [2, 128], strides = [1, 1]} : vector<2x384xf32> to vector<2x128xf32>
    %106 = vector.extract_strided_slice %104 {offsets = [0, 0], sizes = [2, 128], strides = [1, 1]} : vector<2x384xf32> to vector<2x128xf32>
    %107 = arith.addf %105, %106 : vector<2x128xf32>
    %108 = arith.negf %107 : vector<2x128xf32>
    %109 = math.exp %108 : vector<2x128xf32>
    %cst_26 = arith.constant 1.000000e+00 : f32
    %110 = vector.broadcast %cst_26 : f32 to vector<2x128xf32>
    %111 = arith.addf %110, %109 : vector<2x128xf32>
    %112 = arith.divf %110, %111 : vector<2x128xf32>
    %113 = vector.extract_strided_slice %102 {offsets = [0, 128], sizes = [2, 128], strides = [1, 1]} : vector<2x384xf32> to vector<2x128xf32>
    %114 = vector.extract_strided_slice %104 {offsets = [0, 128], sizes = [2, 128], strides = [1, 1]} : vector<2x384xf32> to vector<2x128xf32>
    %115 = arith.addf %113, %114 : vector<2x128xf32>
    %116 = arith.negf %115 : vector<2x128xf32>
    %117 = math.exp %116 : vector<2x128xf32>
    %cst_27 = arith.constant 1.000000e+00 : f32
    %118 = vector.broadcast %cst_27 : f32 to vector<2x128xf32>
    %119 = arith.addf %118, %117 : vector<2x128xf32>
    %120 = arith.divf %118, %119 : vector<2x128xf32>
    %121 = vector.extract_strided_slice %102 {offsets = [0, 256], sizes = [2, 128], strides = [1, 1]} : vector<2x384xf32> to vector<2x128xf32>
    %122 = vector.extract_strided_slice %104 {offsets = [0, 256], sizes = [2, 128], strides = [1, 1]} : vector<2x384xf32> to vector<2x128xf32>
    %123 = arith.mulf %112, %122 : vector<2x128xf32>
    %124 = arith.addf %121, %123 : vector<2x128xf32>
    %125 = math.tanh %124 : vector<2x128xf32>
    %cst_28 = arith.constant 1.000000e+00 : f32
    %126 = vector.broadcast %cst_28 : f32 to vector<2x128xf32>
    %127 = arith.subf %126, %120 : vector<2x128xf32>
    %128 = arith.mulf %127, %125 : vector<2x128xf32>
    %129 = arith.mulf %120, %99 : vector<2x128xf32>
    %130 = arith.addf %128, %129 : vector<2x128xf32>
    %131 = vector.extract_strided_slice %32 {offsets = [6, 0], sizes = [1, 384], strides = [1, 1]} : vector<23x384xf32> to vector<1x384xf32>
    %132 = vector.extract_strided_slice %32 {offsets = [18, 0], sizes = [1, 384], strides = [1, 1]} : vector<23x384xf32> to vector<1x384xf32>
    %133 = tpu.concatenate %131, %132 in 0 : vector<1x384xf32>, vector<1x384xf32> -> vector<2x384xf32>
    %cst_29 = arith.constant dense<0.000000e+00> : vector<2x384xf32>
    %134 = tpu.matmul %130, %33, %cst_29 {dimension_numbers = #tpu.dot_dimension_numbers<[1], [0], [0], [1], [0, 0, 1, 1], [], []>} : vector<2x128xf32>, vector<128x384xf32>, vector<2x384xf32> -> vector<2x384xf32>
    %135 = arith.addf %134, %36 : vector<2x384xf32>
    %136 = vector.extract_strided_slice %133 {offsets = [0, 0], sizes = [2, 128], strides = [1, 1]} : vector<2x384xf32> to vector<2x128xf32>
    %137 = vector.extract_strided_slice %135 {offsets = [0, 0], sizes = [2, 128], strides = [1, 1]} : vector<2x384xf32> to vector<2x128xf32>
    %138 = arith.addf %136, %137 : vector<2x128xf32>
    %139 = arith.negf %138 : vector<2x128xf32>
    %140 = math.exp %139 : vector<2x128xf32>
    %cst_30 = arith.constant 1.000000e+00 : f32
    %141 = vector.broadcast %cst_30 : f32 to vector<2x128xf32>
    %142 = arith.addf %141, %140 : vector<2x128xf32>
    %143 = arith.divf %141, %142 : vector<2x128xf32>
    %144 = vector.extract_strided_slice %133 {offsets = [0, 128], sizes = [2, 128], strides = [1, 1]} : vector<2x384xf32> to vector<2x128xf32>
    %145 = vector.extract_strided_slice %135 {offsets = [0, 128], sizes = [2, 128], strides = [1, 1]} : vector<2x384xf32> to vector<2x128xf32>
    %146 = arith.addf %144, %145 : vector<2x128xf32>
    %147 = arith.negf %146 : vector<2x128xf32>
    %148 = math.exp %147 : vector<2x128xf32>
    %cst_31 = arith.constant 1.000000e+00 : f32
    %149 = vector.broadcast %cst_31 : f32 to vector<2x128xf32>
    %150 = arith.addf %149, %148 : vector<2x128xf32>
    %151 = arith.divf %149, %150 : vector<2x128xf32>
    %152 = vector.extract_strided_slice %133 {offsets = [0, 256], sizes = [2, 128], strides = [1, 1]} : vector<2x384xf32> to vector<2x128xf32>
    %153 = vector.extract_strided_slice %135 {offsets = [0, 256], sizes = [2, 128], strides = [1, 1]} : vector<2x384xf32> to vector<2x128xf32>
    %154 = arith.mulf %143, %153 : vector<2x128xf32>
    %155 = arith.addf %152, %154 : vector<2x128xf32>
    %156 = math.tanh %155 : vector<2x128xf32>
    %cst_32 = arith.constant 1.000000e+00 : f32
    %157 = vector.broadcast %cst_32 : f32 to vector<2x128xf32>
    %158 = arith.subf %157, %151 : vector<2x128xf32>
    %159 = arith.mulf %158, %156 : vector<2x128xf32>
    %160 = arith.mulf %151, %130 : vector<2x128xf32>
    %161 = arith.addf %159, %160 : vector<2x128xf32>
    %162 = vector.extract_strided_slice %32 {offsets = [8, 0], sizes = [1, 384], strides = [1, 1]} : vector<23x384xf32> to vector<1x384xf32>
    %163 = vector.extract_strided_slice %32 {offsets = [20, 0], sizes = [1, 384], strides = [1, 1]} : vector<23x384xf32> to vector<1x384xf32>
    %164 = tpu.concatenate %162, %163 in 0 : vector<1x384xf32>, vector<1x384xf32> -> vector<2x384xf32>
    %cst_33 = arith.constant dense<0.000000e+00> : vector<2x384xf32>
    %165 = tpu.matmul %161, %33, %cst_33 {dimension_numbers = #tpu.dot_dimension_numbers<[1], [0], [0], [1], [0, 0, 1, 1], [], []>} : vector<2x128xf32>, vector<128x384xf32>, vector<2x384xf32> -> vector<2x384xf32>
    %166 = arith.addf %165, %36 : vector<2x384xf32>
    %167 = vector.extract_strided_slice %164 {offsets = [0, 0], sizes = [2, 128], strides = [1, 1]} : vector<2x384xf32> to vector<2x128xf32>
    %168 = vector.extract_strided_slice %166 {offsets = [0, 0], sizes = [2, 128], strides = [1, 1]} : vector<2x384xf32> to vector<2x128xf32>
    %169 = arith.addf %167, %168 : vector<2x128xf32>
    %170 = arith.negf %169 : vector<2x128xf32>
    %171 = math.exp %170 : vector<2x128xf32>
    %cst_34 = arith.constant 1.000000e+00 : f32
    %172 = vector.broadcast %cst_34 : f32 to vector<2x128xf32>
    %173 = arith.addf %172, %171 : vector<2x128xf32>
    %174 = arith.divf %172, %173 : vector<2x128xf32>
    %175 = vector.extract_strided_slice %164 {offsets = [0, 128], sizes = [2, 128], strides = [1, 1]} : vector<2x384xf32> to vector<2x128xf32>
    %176 = vector.extract_strided_slice %166 {offsets = [0, 128], sizes = [2, 128], strides = [1, 1]} : vector<2x384xf32> to vector<2x128xf32>
    %177 = arith.addf %175, %176 : vector<2x128xf32>
    %178 = arith.negf %177 : vector<2x128xf32>
    %179 = math.exp %178 : vector<2x128xf32>
    %cst_35 = arith.constant 1.000000e+00 : f32
    %180 = vector.broadcast %cst_35 : f32 to vector<2x128xf32>
    %181 = arith.addf %180, %179 : vector<2x128xf32>
    %182 = arith.divf %180, %181 : vector<2x128xf32>
    %183 = vector.extract_strided_slice %164 {offsets = [0, 256], sizes = [2, 128], strides = [1, 1]} : vector<2x384xf32> to vector<2x128xf32>
    %184 = vector.extract_strided_slice %166 {offsets = [0, 256], sizes = [2, 128], strides = [1, 1]} : vector<2x384xf32> to vector<2x128xf32>
    %185 = arith.mulf %174, %184 : vector<2x128xf32>
    %186 = arith.addf %183, %185 : vector<2x128xf32>
    %187 = math.tanh %186 : vector<2x128xf32>
    %cst_36 = arith.constant 1.000000e+00 : f32
    %188 = vector.broadcast %cst_36 : f32 to vector<2x128xf32>
    %189 = arith.subf %188, %182 : vector<2x128xf32>
    %190 = arith.mulf %189, %187 : vector<2x128xf32>
    %191 = arith.mulf %182, %161 : vector<2x128xf32>
    %192 = arith.addf %190, %191 : vector<2x128xf32>
    %193 = vector.extract_strided_slice %32 {offsets = [10, 0], sizes = [1, 384], strides = [1, 1]} : vector<23x384xf32> to vector<1x384xf32>
    %194 = vector.extract_strided_slice %32 {offsets = [22, 0], sizes = [1, 384], strides = [1, 1]} : vector<23x384xf32> to vector<1x384xf32>
    %195 = tpu.concatenate %193, %194 in 0 : vector<1x384xf32>, vector<1x384xf32> -> vector<2x384xf32>
    %cst_37 = arith.constant dense<0.000000e+00> : vector<2x384xf32>
    %196 = tpu.matmul %192, %33, %cst_37 {dimension_numbers = #tpu.dot_dimension_numbers<[1], [0], [0], [1], [0, 0, 1, 1], [], []>} : vector<2x128xf32>, vector<128x384xf32>, vector<2x384xf32> -> vector<2x384xf32>
    %197 = arith.addf %196, %36 : vector<2x384xf32>
    %198 = vector.extract_strided_slice %195 {offsets = [0, 0], sizes = [2, 128], strides = [1, 1]} : vector<2x384xf32> to vector<2x128xf32>
    %199 = vector.extract_strided_slice %197 {offsets = [0, 0], sizes = [2, 128], strides = [1, 1]} : vector<2x384xf32> to vector<2x128xf32>
    %200 = arith.addf %198, %199 : vector<2x128xf32>
    %201 = arith.negf %200 : vector<2x128xf32>
    %202 = math.exp %201 : vector<2x128xf32>
    %cst_38 = arith.constant 1.000000e+00 : f32
    %203 = vector.broadcast %cst_38 : f32 to vector<2x128xf32>
    %204 = arith.addf %203, %202 : vector<2x128xf32>
    %205 = arith.divf %203, %204 : vector<2x128xf32>
    %206 = vector.extract_strided_slice %195 {offsets = [0, 128], sizes = [2, 128], strides = [1, 1]} : vector<2x384xf32> to vector<2x128xf32>
    %207 = vector.extract_strided_slice %197 {offsets = [0, 128], sizes = [2, 128], strides = [1, 1]} : vector<2x384xf32> to vector<2x128xf32>
    %208 = arith.addf %206, %207 : vector<2x128xf32>
    %209 = arith.negf %208 : vector<2x128xf32>
    %210 = math.exp %209 : vector<2x128xf32>
    %cst_39 = arith.constant 1.000000e+00 : f32
    %211 = vector.broadcast %cst_39 : f32 to vector<2x128xf32>
    %212 = arith.addf %211, %210 : vector<2x128xf32>
    %213 = arith.divf %211, %212 : vector<2x128xf32>
    %214 = vector.extract_strided_slice %195 {offsets = [0, 256], sizes = [2, 128], strides = [1, 1]} : vector<2x384xf32> to vector<2x128xf32>
    %215 = vector.extract_strided_slice %197 {offsets = [0, 256], sizes = [2, 128], strides = [1, 1]} : vector<2x384xf32> to vector<2x128xf32>
    %216 = arith.mulf %205, %215 : vector<2x128xf32>
    %217 = arith.addf %214, %216 : vector<2x128xf32>
    %218 = math.tanh %217 : vector<2x128xf32>
    %cst_40 = arith.constant 1.000000e+00 : f32
    %219 = vector.broadcast %cst_40 : f32 to vector<2x128xf32>
    %220 = arith.subf %219, %213 : vector<2x128xf32>
    %221 = arith.mulf %220, %218 : vector<2x128xf32>
    %222 = arith.mulf %213, %192 : vector<2x128xf32>
    %223 = arith.addf %221, %222 : vector<2x128xf32>
    %c0_41 = arith.constant 0 : index
    %c0_42 = arith.constant 0 : index
    %224 = vector.load %arg7[%c0_41, %c0_42] : memref<128x512xf32, #tpu.memory_space<vmem>>, vector<128x512xf32>
    %cst_43 = arith.constant dense<0.000000e+00> : vector<2x512xf32>
    %225 = tpu.matmul %223, %224, %cst_43 {dimension_numbers = #tpu.dot_dimension_numbers<[1], [0], [0], [1], [0, 0, 1, 1], [], []>} : vector<2x128xf32>, vector<128x512xf32>, vector<2x512xf32> -> vector<2x512xf32>
    %c0_44 = arith.constant 0 : index
    %c0_45 = arith.constant 0 : index
    %226 = vector.load %arg8[%c0_44, %c0_45] : memref<1x512xf32, #tpu.memory_space<vmem>>, vector<1x512xf32>
    %227 = vector.broadcast %226 : vector<1x512xf32> to vector<2x512xf32>
    %228 = arith.addf %225, %227 : vector<2x512xf32>
    %cst_46 = arith.constant 0.000000e+00 : f32
    %229 = vector.broadcast %cst_46 : f32 to vector<2x512xf32>
    %230 = arith.maximumf %228, %229 : vector<2x512xf32>
    %c0_47 = arith.constant 0 : index
    %c0_48 = arith.constant 0 : index
    %231 = vector.load %arg9[%c0_47, %c0_48] : memref<512x128xf32, #tpu.memory_space<vmem>>, vector<512x128xf32>
    %cst_49 = arith.constant dense<0.000000e+00> : vector<2x128xf32>
    %232 = tpu.matmul %230, %231, %cst_49 {dimension_numbers = #tpu.dot_dimension_numbers<[1], [0], [0], [1], [0, 0, 1, 1], [], []>} : vector<2x512xf32>, vector<512x128xf32>, vector<2x128xf32> -> vector<2x128xf32>
    %c0_50 = arith.constant 0 : index
    %c0_51 = arith.constant 0 : index
    %233 = vector.load %arg10[%c0_50, %c0_51] : memref<1x128xf32, #tpu.memory_space<vmem>>, vector<1x128xf32>
    %234 = vector.broadcast %233 : vector<1x128xf32> to vector<2x128xf32>
    %235 = arith.addf %232, %234 : vector<2x128xf32>
    %236 = arith.negf %235 : vector<2x128xf32>
    %237 = math.exp %236 : vector<2x128xf32>
    %cst_52 = arith.constant 1.000000e+00 : f32
    %238 = vector.broadcast %cst_52 : f32 to vector<2x128xf32>
    %239 = arith.addf %238, %237 : vector<2x128xf32>
    %240 = arith.divf %238, %239 : vector<2x128xf32>
    %c0_53 = arith.constant 0 : index
    %c0_54 = arith.constant 0 : index
    %241 = vector.load %arg11[%c0_53, %c0_54] : memref<2x128xf32, #tpu.memory_space<vmem>>, vector<2x128xf32>
    tpu.vector_store %arg11[%c0_53, %c0_54], %240 {strides = array<i32>} : memref<2x128xf32, #tpu.memory_space<vmem>>, vector<2x128xf32>,
    return
  }
}

</mosaic_0001>

<llo_original>
// kernel: neural_network_forward.1
$region0: #{neural_network_forward.1}
  #allocation0 [shape = 'u32[]', space=smem, size = 0x4, offset = 0x4, fixed_abs, tag = 'smem constant byte address 0x4 - core index']
  #allocation1 [shape = 'u32[144,128]{1,0:T(1,128)}', space=vmem, size = 0x12000, scoped, tag = 'internal scratch']
  %s0 = inlined_call_operand.vmem [shape: f32[2,16,128], index: 0, kind: input, shape index: {}]
  %s1 = inlined_call_operand.hbm [shape: f32[640,512], index: 1, kind: input, shape index: {}]
  %s2 = inlined_call_operand.hbm [shape: f32[1,512], index: 2, kind: input, shape index: {}]
  %s3 = inlined_call_operand.hbm [shape: f32[512,384], index: 3, kind: input, shape index: {}]
  %s4 = inlined_call_operand.hbm [shape: f32[1,384], index: 4, kind: input, shape index: {}]
  %s5 = inlined_call_operand.hbm [shape: f32[128,384], index: 5, kind: input, shape index: {}]
  %s6 = inlined_call_operand.hbm [shape: f32[1,384], index: 6, kind: input, shape index: {}]
  %s7 = inlined_call_operand.hbm [shape: f32[128,512], index: 7, kind: input, shape index: {}]
  %s8 = inlined_call_operand.hbm [shape: f32[1,512], index: 8, kind: input, shape index: {}]
  %s9 = inlined_call_operand.hbm [shape: f32[512,128], index: 9, kind: input, shape index: {}]
  %s10 = inlined_call_operand.hbm [shape: f32[1,128], index: 10, kind: input, shape index: {}]
  %s11 = inlined_call_operand.vmem [shape: f32[2,128], index: 11, kind: output, shape index: {}]
  %s12 = sld [smem:[#allocation0]]
  $region94: #{neural_network_forward.1} parent=0
    _
  %s14 = ssub.s32 1, %s12
  %s15 = scalar_select 0, %s14, %s12
  $region1: #{neural_network_forward.1} parent=0
    #allocation2 [shape = 'u8[1310720]{0}', space=vmem, size = 0x140000, scoped, tag = 'input window, operand 1, single buffered']
    #allocation3 [shape = 's32[1]{0}', space=sflag, size = 0x4, scoped, tag = 'scoped memory for neural_network_forward.1']
    #allocation4 [shape = 'u8[2048]{0}', space=vmem, size = 0x800, scoped, tag = 'input window, operand 2, single buffered']
    #allocation5 [shape = 's32[1]{0}', space=sflag, size = 0x4, scoped, tag = 'scoped memory for neural_network_forward.1']
    #allocation6 [shape = 'u8[786432]{0}', space=vmem, size = 0xc0000, scoped, tag = 'input window, operand 3, single buffered']
    #allocation7 [shape = 'u8[1536]{0}', space=vmem, size = 0x800, scoped, tag = 'input window, operand 4, single buffered']
    #allocation8 [shape = 's32[1]{0}', space=sflag, size = 0x4, scoped, tag = 'scoped memory for neural_network_forward.1']
    #allocation9 [shape = 'u8[196608]{0}', space=vmem, size = 0x30000, scoped, tag = 'input window, operand 5, single buffered']
    #allocation10 [shape = 'u8[1536]{0}', space=vmem, size = 0x800, scoped, tag = 'input window, operand 6, single buffered']
    #allocation11 [shape = 's32[1]{0}', space=sflag, size = 0x4, scoped, tag = 'scoped memory for neural_network_forward.1']
    #allocation12 [shape = 'u8[262144]{0}', space=vmem, size = 0x40000, scoped, tag = 'input window, operand 7, single buffered']
    #allocation13 [shape = 'u8[2048]{0}', space=vmem, size = 0x800, scoped, tag = 'input window, operand 8, single buffered']
    #allocation14 [shape = 's32[1]{0}', space=sflag, size = 0x4, scoped, tag = 'scoped memory for neural_network_forward.1']
    #allocation15 [shape = 'u8[262144]{0}', space=vmem, size = 0x40000, scoped, tag = 'input window, operand 9, single buffered']
    #allocation16 [shape = 'u8[512]{0}', space=vmem, size = 0x400, scoped, tag = 'input window, operand 10, single buffered']
    #allocation17 [shape = 's32[1]{0}', space=sflag, size = 0x4, scoped, tag = 'scoped memory for neural_network_forward.1']
    %16 = vsyncpa [#allocation3], 0
    %17 = vsyncpa [#allocation5], 0
    %18 = vsyncpa [#allocation8], 0
    %19 = vsyncpa [#allocation11], 0
    %20 = vsyncpa [#allocation14], 0
    %21 = vsyncpa [#allocation17], 0
    // Predicated region
    $region2: #{neural_network_forward.1} parent=1 // pred_check
      _
    $region3: #{neural_network_forward.1} parent=1 // pred_check_branch
      %23 = sbr.rel (0) target = $region5
    $region4: #{neural_network_forward.1} parent=1 // pred_region
      _
    $region5: #{neural_network_forward.1} parent=1 // pred_fallthru
      _
    // Predicated region
    $region6: #{neural_network_forward.1} parent=1 // pred_check
      _
    $region7: #{neural_network_forward.1} parent=1 // pred_check_branch
      %25 = sbr.rel (0) target = $region9
    $region8: #{neural_network_forward.1} parent=1 // pred_region
      %s27 = ssub.s32 40960, 40960
      %28 = vsyncadd [#allocation3], %s27
      %s29 = sshll.u32 [#allocation2], 4
      %s30 = int_to_ptr.vmem [resolvable:$true] %s29
      %35 = dma.hbm_to_vmem [thread:$0]  %s1, 40960, %s30, [#allocation3], 512, 512, 32
    $region9: #{neural_network_forward.1} parent=1 // pred_fallthru
      _
    // Predicated region
    $region10: #{neural_network_forward.1} parent=1 // pred_check
      _
    $region11: #{neural_network_forward.1} parent=1 // pred_check_branch
      %37 = sbr.rel (0) target = $region13
    $region12: #{neural_network_forward.1} parent=1 // pred_region
      %s39 = ssub.s32 64, 64
      %40 = vsyncadd [#allocation5], %s39
      %s42 = sshll.u32 [#allocation4], 4
      %s43 = int_to_ptr.vmem [resolvable:$true] %s42
      %45 = dma.hbm_to_vmem [thread:$0]  %s2, 64, %s43, [#allocation5]
    $region13: #{neural_network_forward.1} parent=1 // pred_fallthru
      _
    // Predicated region
    $region14: #{neural_network_forward.1} parent=1 // pred_check
      _
    $region15: #{neural_network_forward.1} parent=1 // pred_check_branch
      %47 = sbr.rel (0) target = $region17
    $region16: #{neural_network_forward.1} parent=1 // pred_region
      %s49 = ssub.s32 24576, 24576
      %50 = vsyncadd [#allocation5], %s49
      %s51 = sshll.u32 [#allocation6], 4
      %s52 = int_to_ptr.vmem [resolvable:$true] %s51
      %57 = dma.hbm_to_vmem [thread:$0]  %s3, 24576, %s52, [#allocation5], 384, 384, 24
    $region17: #{neural_network_forward.1} parent=1 // pred_fallthru
      _
    // Predicated region
    $region18: #{neural_network_forward.1} parent=1 // pred_check
      _
    $region19: #{neural_network_forward.1} parent=1 // pred_check_branch
      %59 = sbr.rel (0) target = $region21
    $region20: #{neural_network_forward.1} parent=1 // pred_region
      %s61 = ssub.s32 48, 48
      %62 = vsyncadd [#allocation8], %s61
      %s64 = sshll.u32 [#allocation7], 4
      %s65 = int_to_ptr.vmem [resolvable:$true] %s64
      %67 = dma.hbm_to_vmem [thread:$0]  %s4, 48, %s65, [#allocation8]
    $region21: #{neural_network_forward.1} parent=1 // pred_fallthru
      _
    // Predicated region
    $region22: #{neural_network_forward.1} parent=1 // pred_check
      _
    $region23: #{neural_network_forward.1} parent=1 // pred_check_branch
      %69 = sbr.rel (0) target = $region25
    $region24: #{neural_network_forward.1} parent=1 // pred_region
      %s71 = ssub.s32 6144, 6144
      %72 = vsyncadd [#allocation8], %s71
      %s73 = sshll.u32 [#allocation9], 4
      %s74 = int_to_ptr.vmem [resolvable:$true] %s73
      %79 = dma.hbm_to_vmem [thread:$0]  %s5, 6144, %s74, [#allocation8], 384, 384, 24
    $region25: #{neural_network_forward.1} parent=1 // pred_fallthru
      _
    // Predicated region
    $region26: #{neural_network_forward.1} parent=1 // pred_check
      _
    $region27: #{neural_network_forward.1} parent=1 // pred_check_branch
      %81 = sbr.rel (0) target = $region29
    $region28: #{neural_network_forward.1} parent=1 // pred_region
      %s83 = ssub.s32 48, 48
      %84 = vsyncadd [#allocation11], %s83
      %s86 = sshll.u32 [#allocation10], 4
      %s87 = int_to_ptr.vmem [resolvable:$true] %s86
      %89 = dma.hbm_to_vmem [thread:$0]  %s6, 48, %s87, [#allocation11]
    $region29: #{neural_network_forward.1} parent=1 // pred_fallthru
      _
    // Predicated region
    $region30: #{neural_network_forward.1} parent=1 // pred_check
      _
    $region31: #{neural_network_forward.1} parent=1 // pred_check_branch
      %91 = sbr.rel (0) target = $region33
    $region32: #{neural_network_forward.1} parent=1 // pred_region
      %s93 = ssub.s32 8192, 8192
      %94 = vsyncadd [#allocation11], %s93
      %s95 = sshll.u32 [#allocation12], 4
      %s96 = int_to_ptr.vmem [resolvable:$true] %s95
      %101 = dma.hbm_to_vmem [thread:$0]  %s7, 8192, %s96, [#allocation11], 512, 512, 32
    $region33: #{neural_network_forward.1} parent=1 // pred_fallthru
      _
    // Predicated region
    $region34: #{neural_network_forward.1} parent=1 // pred_check
      _
    $region35: #{neural_network_forward.1} parent=1 // pred_check_branch
      %103 = sbr.rel (0) target = $region37
    $region36: #{neural_network_forward.1} parent=1 // pred_region
      %s105 = ssub.s32 64, 64
      %106 = vsyncadd [#allocation14], %s105
      %s108 = sshll.u32 [#allocation13], 4
      %s109 = int_to_ptr.vmem [resolvable:$true] %s108
      %111 = dma.hbm_to_vmem [thread:$0]  %s8, 64, %s109, [#allocation14]
    $region37: #{neural_network_forward.1} parent=1 // pred_fallthru
      _
    // Predicated region
    $region38: #{neural_network_forward.1} parent=1 // pred_check
      _
    $region39: #{neural_network_forward.1} parent=1 // pred_check_branch
      %113 = sbr.rel (0) target = $region41
    $region40: #{neural_network_forward.1} parent=1 // pred_region
      %s115 = ssub.s32 8192, 8192
      %116 = vsyncadd [#allocation14], %s115
      %s117 = sshll.u32 [#allocation15], 4
      %s118 = int_to_ptr.vmem [resolvable:$true] %s117
      %123 = dma.hbm_to_vmem [thread:$0]  %s9, 8192, %s118, [#allocation14], 128, 128, 8
    $region41: #{neural_network_forward.1} parent=1 // pred_fallthru
      _
    // Predicated region
    $region42: #{neural_network_forward.1} parent=1 // pred_check
      _
    $region43: #{neural_network_forward.1} parent=1 // pred_check_branch
      %125 = sbr.rel (0) target = $region45
    $region44: #{neural_network_forward.1} parent=1 // pred_region
      %s127 = ssub.s32 16, 16
      %128 = vsyncadd [#allocation17], %s127
      %s130 = sshll.u32 [#allocation16], 4
      %s131 = int_to_ptr.vmem [resolvable:$true] %s130
      %133 = dma.hbm_to_vmem [thread:$0]  %s10, 16, %s131, [#allocation17]
    $region45: #{neural_network_forward.1} parent=1 // pred_fallthru
      _
    // Predicated region
    $region46: #{neural_network_forward.1} parent=1 // pred_check
      _
    $region47: #{neural_network_forward.1} parent=1 // pred_check_branch
      %135 = sbr.rel (0) target = $region49
    $region48: #{neural_network_forward.1} parent=1 // pred_region
      %136 = dma.done [#allocation3], 40960
    $region49: #{neural_network_forward.1} parent=1 // pred_fallthru
      _
    // Predicated region
    $region50: #{neural_network_forward.1} parent=1 // pred_check
      _
    $region51: #{neural_network_forward.1} parent=1 // pred_check_branch
      %138 = sbr.rel (0) target = $region53
    $region52: #{neural_network_forward.1} parent=1 // pred_region
      %139 = dma.done [#allocation5], 64
    $region53: #{neural_network_forward.1} parent=1 // pred_fallthru
      _
    // Predicated region
    $region54: #{neural_network_forward.1} parent=1 // pred_check
      _
    $region55: #{neural_network_forward.1} parent=1 // pred_check_branch
      %141 = sbr.rel (0) target = $region57
    $region56: #{neural_network_forward.1} parent=1 // pred_region
      %142 = dma.done [#allocation5], 24576
    $region57: #{neural_network_forward.1} parent=1 // pred_fallthru
      _
    // Predicated region
    $region58: #{neural_network_forward.1} parent=1 // pred_check
      _
    $region59: #{neural_network_forward.1} parent=1 // pred_check_branch
      %144 = sbr.rel (0) target = $region61
    $region60: #{neural_network_forward.1} parent=1 // pred_region
      %145 = dma.done [#allocation8], 48
    $region61: #{neural_network_forward.1} parent=1 // pred_fallthru
      _
    // Predicated region
    $region62: #{neural_network_forward.1} parent=1 // pred_check
      _
    $region63: #{neural_network_forward.1} parent=1 // pred_check_branch
      %147 = sbr.rel (0) target = $region65
    $region64: #{neural_network_forward.1} parent=1 // pred_region
      %148 = dma.done [#allocation8], 6144
    $region65: #{neural_network_forward.1} parent=1 // pred_fallthru
      _
    // Predicated region
    $region66: #{neural_network_forward.1} parent=1 // pred_check
      _
    $region67: #{neural_network_forward.1} parent=1 // pred_check_branch
      %150 = sbr.rel (0) target = $region69
    $region68: #{neural_network_forward.1} parent=1 // pred_region
      %151 = dma.done [#allocation11], 48
    $region69: #{neural_network_forward.1} parent=1 // pred_fallthru
      _
    // Predicated region
    $region70: #{neural_network_forward.1} parent=1 // pred_check
      _
    $region71: #{neural_network_forward.1} parent=1 // pred_check_branch
      %153 = sbr.rel (0) target = $region73
    $region72: #{neural_network_forward.1} parent=1 // pred_region
      %154 = dma.done [#allocation11], 8192
    $region73: #{neural_network_forward.1} parent=1 // pred_fallthru
      _
    // Predicated region
    $region74: #{neural_network_forward.1} parent=1 // pred_check
      _
    $region75: #{neural_network_forward.1} parent=1 // pred_check_branch
      %156 = sbr.rel (0) target = $region77
    $region76: #{neural_network_forward.1} parent=1 // pred_region
      %157 = dma.done [#allocation14], 64
    $region77: #{neural_network_forward.1} parent=1 // pred_fallthru
      _
    // Predicated region
    $region78: #{neural_network_forward.1} parent=1 // pred_check
      _
    $region79: #{neural_network_forward.1} parent=1 // pred_check_branch
      %159 = sbr.rel (0) target = $region81
    $region80: #{neural_network_forward.1} parent=1 // pred_region
      %160 = dma.done [#allocation14], 8192
    $region81: #{neural_network_forward.1} parent=1 // pred_fallthru
      _
    // Predicated region
    $region82: #{neural_network_forward.1} parent=1 // pred_check
      _
    $region83: #{neural_network_forward.1} parent=1 // pred_check_branch
      %162 = sbr.rel (0) target = $region85
    $region84: #{neural_network_forward.1} parent=1 // pred_region
      %163 = dma.done [#allocation17], 16
    $region85: #{neural_network_forward.1} parent=1 // pred_fallthru
      _
    %v164 = vld [vmem:[%s0] sm:$0xff]
    %v165 = vld [vmem:[%s0 + $0x8] sm:$0xff]
    %v166 = vld [vmem:[%s0 + $0x10] sm:$0xff]
    %v167 = vld [vmem:[%s0 + $0x18] sm:$0xff]
    %vm170 = vcmask 1046528
    %v171 = vrot.slane %v164, 1
    %v172 = vrot.slane %v165, 1
    %v173 = vsel %vm170, %v171, %v172
    %vm176 = vcmask 1045504
    %v177 = vrot.slane %v164, 2
    %v178 = vrot.slane %v165, 2
    %v179 = vsel %vm176, %v177, %v178
    %vm182 = vcmask 1044480
    %v183 = vrot.slane %v164, 3
    %v184 = vrot.slane %v165, 3
    %v185 = vsel %vm182, %v183, %v184
    %vm188 = vcmask 1043456
    %v189 = vrot.slane %v164, 4
    %v190 = vrot.slane %v165, 4
    %v191 = vsel %vm188, %v189, %v190
    %v196 = vrot.slane %v166, 1
    %v197 = vrot.slane %v167, 1
    %v198 = vsel %vm170, %v196, %v197
    %v199 = vrot.slane %v166, 2
    %v200 = vrot.slane %v167, 2
    %v201 = vsel %vm176, %v199, %v200
    %v202 = vrot.slane %v166, 3
    %v203 = vrot.slane %v167, 3
    %v204 = vsel %vm182, %v202, %v203
    %v205 = vrot.slane %v166, 4
    %v206 = vrot.slane %v167, 4
    %v207 = vsel %vm188, %v205, %v206
    %v208 = vrot.slane %v198, 4
    %v209 = vrot.slane %v201, 4
    %v210 = vrot.slane %v204, 4
    %v211 = vrot.slane %v207, 4
    %v212 = vrot.slane %v197, 4
    %v213 = vsel %vm188, %v208, %v212
    %v214 = vrot.slane %v200, 4
    %v215 = vsel %vm188, %v209, %v214
    %v216 = vrot.slane %v203, 4
    %v217 = vsel %vm188, %v210, %v216
    %v218 = vrot.slane %v206, 4
    %v219 = vsel %vm188, %v211, %v218
    %v230 = vsel %vm188, %v165, %v205
    %v231 = vsel %vm188, %v172, %v208
    %v232 = vsel %vm188, %v178, %v209
    %v233 = vsel %vm188, %v184, %v210
    %v234 = vsel %vm188, %v190, %v211
    %v235 = vld [vmem:[#allocation2] sm:$0xff]
    %v236 = vld [vmem:[#allocation2 + $0x8] sm:$0xff]
    %v237 = vld [vmem:[#allocation2 + $0x10] sm:$0xff]
    %v238 = vld [vmem:[#allocation2 + $0x18] sm:$0xff]
    %v239 = vld [vmem:[#allocation2 + $0x20] sm:$0xff]
    %v240 = vld [vmem:[#allocation2 + $0x28] sm:$0xff]
    %v241 = vld [vmem:[#allocation2 + $0x30] sm:$0xff]
    %v242 = vld [vmem:[#allocation2 + $0x38] sm:$0xff]
    %v243 = vld [vmem:[#allocation2 + $0x40] sm:$0xff]
    %v244 = vld [vmem:[#allocation2 + $0x48] sm:$0xff]
    %v245 = vld [vmem:[#allocation2 + $0x50] sm:$0xff]
    %v246 = vld [vmem:[#allocation2 + $0x58] sm:$0xff]
    %v247 = vld [vmem:[#allocation2 + $0x60] sm:$0xff]
    %v248 = vld [vmem:[#allocation2 + $0x68] sm:$0xff]
    %v249 = vld [vmem:[#allocation2 + $0x70] sm:$0xff]
    %v250 = vld [vmem:[#allocation2 + $0x78] sm:$0xff]
    %v251 = vld [vmem:[#allocation2 + $0x80] sm:$0xff]
    %v252 = vld [vmem:[#allocation2 + $0x88] sm:$0xff]
    %v253 = vld [vmem:[#allocation2 + $0x90] sm:$0xff]
    %v254 = vld [vmem:[#allocation2 + $0x98] sm:$0xff]
    %v255 = vld [vmem:[#allocation2 + $0xa0] sm:$0xff]
    %v256 = vld [vmem:[#allocation2 + $0xa8] sm:$0xff]
    %v257 = vld [vmem:[#allocation2 + $0xb0] sm:$0xff]
    %v258 = vld [vmem:[#allocation2 + $0xb8] sm:$0xff]
    %v259 = vld [vmem:[#allocation2 + $0xc0] sm:$0xff]
    %v260 = vld [vmem:[#allocation2 + $0xc8] sm:$0xff]
    %v261 = vld [vmem:[#allocation2 + $0xd0] sm:$0xff]
    %v262 = vld [vmem:[#allocation2 + $0xd8] sm:$0xff]
    %v263 = vld [vmem:[#allocation2 + $0xe0] sm:$0xff]
    %v264 = vld [vmem:[#allocation2 + $0xe8] sm:$0xff]
    %v265 = vld [vmem:[#allocation2 + $0xf0] sm:$0xff]
    %v266 = vld [vmem:[#allocation2 + $0xf8] sm:$0xff]
    %v267 = vld [vmem:[#allocation2 + $0x100] sm:$0xff]
    %v268 = vld [vmem:[#allocation2 + $0x108] sm:$0xff]
    %v269 = vld [vmem:[#allocation2 + $0x110] sm:$0xff]
    %v270 = vld [vmem:[#allocation2 + $0x118] sm:$0xff]
    %v271 = vld [vmem:[#allocation2 + $0x120] sm:$0xff]
    %v272 = vld [vmem:[#allocation2 + $0x128] sm:$0xff]
    %v273 = vld [vmem:[#allocation2 + $0x130] sm:$0xff]
    %v274 = vld [vmem:[#allocation2 + $0x138] sm:$0xff]
    %v275 = vld [vmem:[#allocation2 + $0x140] sm:$0xff]
    %v276 = vld [vmem:[#allocation2 + $0x148] sm:$0xff]
    %v277 = vld [vmem:[#allocation2 + $0x150] sm:$0xff]
    %v278 = vld [vmem:[#allocation2 + $0x158] sm:$0xff]
    %v279 = vld [vmem:[#allocation2 + $0x160] sm:$0xff]
    %v280 = vld [vmem:[#allocation2 + $0x168] sm:$0xff]
    %v281 = vld [vmem:[#allocation2 + $0x170] sm:$0xff]
    %v282 = vld [vmem:[#allocation2 + $0x178] sm:$0xff]
    %v283 = vld [vmem:[#allocation2 + $0x180] sm:$0xff]
    %v284 = vld [vmem:[#allocation2 + $0x188] sm:$0xff]
    %v285 = vld [vmem:[#allocation2 + $0x190] sm:$0xff]
    %v286 = vld [vmem:[#allocation2 + $0x198] sm:$0xff]
    %v287 = vld [vmem:[#allocation2 + $0x1a0] sm:$0xff]
    %v288 = vld [vmem:[#allocation2 + $0x1a8] sm:$0xff]
    %v289 = vld [vmem:[#allocation2 + $0x1b0] sm:$0xff]
    %v290 = vld [vmem:[#allocation2 + $0x1b8] sm:$0xff]
    %v291 = vld [vmem:[#allocation2 + $0x1c0] sm:$0xff]
    %v292 = vld [vmem:[#allocation2 + $0x1c8] sm:$0xff]
    %v293 = vld [vmem:[#allocation2 + $0x1d0] sm:$0xff]
    %v294 = vld [vmem:[#allocation2 + $0x1d8] sm:$0xff]
    %v295 = vld [vmem:[#allocation2 + $0x1e0] sm:$0xff]
    %v296 = vld [vmem:[#allocation2 + $0x1e8] sm:$0xff]
    %v297 = vld [vmem:[#allocation2 + $0x1f0] sm:$0xff]
    %v298 = vld [vmem:[#allocation2 + $0x1f8] sm:$0xff]
    %v299 = vld [vmem:[#allocation2 + $0x200] sm:$0xff]
    %v300 = vld [vmem:[#allocation2 + $0x208] sm:$0xff]
    %v301 = vld [vmem:[#allocation2 + $0x210] sm:$0xff]
    %v302 = vld [vmem:[#allocation2 + $0x218] sm:$0xff]
    %v303 = vld [vmem:[#allocation2 + $0x220] sm:$0xff]
    %v304 = vld [vmem:[#allocation2 + $0x228] sm:$0xff]
    %v305 = vld [vmem:[#allocation2 + $0x230] sm:$0xff]
    %v306 = vld [vmem:[#allocation2 + $0x238] sm:$0xff]
    %v307 = vld [vmem:[#allocation2 + $0x240] sm:$0xff]
    %v308 = vld [vmem:[#allocation2 + $0x248] sm:$0xff]
    %v309 = vld [vmem:[#allocation2 + $0x250] sm:$0xff]
    %v310 = vld [vmem:[#allocation2 + $0x258] sm:$0xff]
    %v311 = vld [vmem:[#allocation2 + $0x260] sm:$0xff]
    %v312 = vld [vmem:[#allocation2 + $0x268] sm:$0xff]
    %v313 = vld [vmem:[#allocation2 + $0x270] sm:$0xff]
    %v314 = vld [vmem:[#allocation2 + $0x278] sm:$0xff]
    %v315 = vld [vmem:[#allocation2 + $0x280] sm:$0xff]
    %v316 = vld [vmem:[#allocation2 + $0x288] sm:$0xff]
    %v317 = vld [vmem:[#allocation2 + $0x290] sm:$0xff]
    %v318 = vld [vmem:[#allocation2 + $0x298] sm:$0xff]
    %v319 = vld [vmem:[#allocation2 + $0x2a0] sm:$0xff]
    %v320 = vld [vmem:[#allocation2 + $0x2a8] sm:$0xff]
    %v321 = vld [vmem:[#allocation2 + $0x2b0] sm:$0xff]
    %v322 = vld [vmem:[#allocation2 + $0x2b8] sm:$0xff]
    %v323 = vld [vmem:[#allocation2 + $0x2c0] sm:$0xff]
    %v324 = vld [vmem:[#allocation2 + $0x2c8] sm:$0xff]
    %v325 = vld [vmem:[#allocation2 + $0x2d0] sm:$0xff]
    %v326 = vld [vmem:[#allocation2 + $0x2d8] sm:$0xff]
    %v327 = vld [vmem:[#allocation2 + $0x2e0] sm:$0xff]
    %v328 = vld [vmem:[#allocation2 + $0x2e8] sm:$0xff]
    %v329 = vld [vmem:[#allocation2 + $0x2f0] sm:$0xff]
    %v330 = vld [vmem:[#allocation2 + $0x2f8] sm:$0xff]
    %v331 = vld [vmem:[#allocation2 + $0x300] sm:$0xff]
    %v332 = vld [vmem:[#allocation2 + $0x308] sm:$0xff]
    %v333 = vld [vmem:[#allocation2 + $0x310] sm:$0xff]
    %v334 = vld [vmem:[#allocation2 + $0x318] sm:$0xff]
    %v335 = vld [vmem:[#allocation2 + $0x320] sm:$0xff]
    %v336 = vld [vmem:[#allocation2 + $0x328] sm:$0xff]
    %v337 = vld [vmem:[#allocation2 + $0x330] sm:$0xff]
    %v338 = vld [vmem:[#allocation2 + $0x338] sm:$0xff]
    %v339 = vld [vmem:[#allocation2 + $0x340] sm:$0xff]
    %v340 = vld [vmem:[#allocation2 + $0x348] sm:$0xff]
    %v341 = vld [vmem:[#allocation2 + $0x350] sm:$0xff]
    %v342 = vld [vmem:[#allocation2 + $0x358] sm:$0xff]
    %v343 = vld [vmem:[#allocation2 + $0x360] sm:$0xff]
    %v344 = vld [vmem:[#allocation2 + $0x368] sm:$0xff]
    %v345 = vld [vmem:[#allocation2 + $0x370] sm:$0xff]
    %v346 = vld [vmem:[#allocation2 + $0x378] sm:$0xff]
    %v347 = vld [vmem:[#allocation2 + $0x380] sm:$0xff]
    %v348 = vld [vmem:[#allocation2 + $0x388] sm:$0xff]
    %v349 = vld [vmem:[#allocation2 + $0x390] sm:$0xff]
    %v350 = vld [vmem:[#allocation2 + $0x398] sm:$0xff]
    %v351 = vld [vmem:[#allocation2 + $0x3a0] sm:$0xff]
    %v352 = vld [vmem:[#allocation2 + $0x3a8] sm:$0xff]
    %v353 = vld [vmem:[#allocation2 + $0x3b0] sm:$0xff]
    %v354 = vld [vmem:[#allocation2 + $0x3b8] sm:$0xff]
    %v355 = vld [vmem:[#allocation2 + $0x3c0] sm:$0xff]
    %v356 = vld [vmem:[#allocation2 + $0x3c8] sm:$0xff]
    %v357 = vld [vmem:[#allocation2 + $0x3d0] sm:$0xff]
    %v358 = vld [vmem:[#allocation2 + $0x3d8] sm:$0xff]
    %v359 = vld [vmem:[#allocation2 + $0x3e0] sm:$0xff]
    %v360 = vld [vmem:[#allocation2 + $0x3e8] sm:$0xff]
    %v361 = vld [vmem:[#allocation2 + $0x3f0] sm:$0xff]
    %v362 = vld [vmem:[#allocation2 + $0x3f8] sm:$0xff]
    %v363 = vld [vmem:[#allocation2 + $0x400] sm:$0xff]
    %v364 = vld [vmem:[#allocation2 + $0x408] sm:$0xff]
    %v365 = vld [vmem:[#allocation2 + $0x410] sm:$0xff]
    %v366 = vld [vmem:[#allocation2 + $0x418] sm:$0xff]
    %v367 = vld [vmem:[#allocation2 + $0x420] sm:$0xff]
    %v368 = vld [vmem:[#allocation2 + $0x428] sm:$0xff]
    %v369 = vld [vmem:[#allocation2 + $0x430] sm:$0xff]
    %v370 = vld [vmem:[#allocation2 + $0x438] sm:$0xff]
    %v371 = vld [vmem:[#allocation2 + $0x440] sm:$0xff]
    %v372 = vld [vmem:[#allocation2 + $0x448] sm:$0xff]
    %v373 = vld [vmem:[#allocation2 + $0x450] sm:$0xff]
    %v374 = vld [vmem:[#allocation2 + $0x458] sm:$0xff]
    %v375 = vld [vmem:[#allocation2 + $0x460] sm:$0xff]
    %v376 = vld [vmem:[#allocation2 + $0x468] sm:$0xff]
    %v377 = vld [vmem:[#allocation2 + $0x470] sm:$0xff]
    %v378 = vld [vmem:[#allocation2 + $0x478] sm:$0xff]
    %v379 = vld [vmem:[#allocation2 + $0x480] sm:$0xff]
    %v380 = vld [vmem:[#allocation2 + $0x488] sm:$0xff]
    %v381 = vld [vmem:[#allocation2 + $0x490] sm:$0xff]
    %v382 = vld [vmem:[#allocation2 + $0x498] sm:$0xff]
    %v383 = vld [vmem:[#allocation2 + $0x4a0] sm:$0xff]
    %v384 = vld [vmem:[#allocation2 + $0x4a8] sm:$0xff]
    %v385 = vld [vmem:[#allocation2 + $0x4b0] sm:$0xff]
    %v386 = vld [vmem:[#allocation2 + $0x4b8] sm:$0xff]
    %v387 = vld [vmem:[#allocation2 + $0x4c0] sm:$0xff]
    %v388 = vld [vmem:[#allocation2 + $0x4c8] sm:$0xff]
    %v389 = vld [vmem:[#allocation2 + $0x4d0] sm:$0xff]
    %v390 = vld [vmem:[#allocation2 + $0x4d8] sm:$0xff]
    %v391 = vld [vmem:[#allocation2 + $0x4e0] sm:$0xff]
    %v392 = vld [vmem:[#allocation2 + $0x4e8] sm:$0xff]
    %v393 = vld [vmem:[#allocation2 + $0x4f0] sm:$0xff]
    %v394 = vld [vmem:[#allocation2 + $0x4f8] sm:$0xff]
    %v395 = vld [vmem:[#allocation2 + $0x500] sm:$0xff]
    %v396 = vld [vmem:[#allocation2 + $0x508] sm:$0xff]
    %v397 = vld [vmem:[#allocation2 + $0x510] sm:$0xff]
    %v398 = vld [vmem:[#allocation2 + $0x518] sm:$0xff]
    %v399 = vld [vmem:[#allocation2 + $0x520] sm:$0xff]
    %v400 = vld [vmem:[#allocation2 + $0x528] sm:$0xff]
    %v401 = vld [vmem:[#allocation2 + $0x530] sm:$0xff]
    %v402 = vld [vmem:[#allocation2 + $0x538] sm:$0xff]
    %v403 = vld [vmem:[#allocation2 + $0x540] sm:$0xff]
    %v404 = vld [vmem:[#allocation2 + $0x548] sm:$0xff]
    %v405 = vld [vmem:[#allocation2 + $0x550] sm:$0xff]
    %v406 = vld [vmem:[#allocation2 + $0x558] sm:$0xff]
    %v407 = vld [vmem:[#allocation2 + $0x560] sm:$0xff]
    %v408 = vld [vmem:[#allocation2 + $0x568] sm:$0xff]
    %v409 = vld [vmem:[#allocation2 + $0x570] sm:$0xff]
    %v410 = vld [vmem:[#allocation2 + $0x578] sm:$0xff]
    %v411 = vld [vmem:[#allocation2 + $0x580] sm:$0xff]
    %v412 = vld [vmem:[#allocation2 + $0x588] sm:$0xff]
    %v413 = vld [vmem:[#allocation2 + $0x590] sm:$0xff]
    %v414 = vld [vmem:[#allocation2 + $0x598] sm:$0xff]
    %v415 = vld [vmem:[#allocation2 + $0x5a0] sm:$0xff]
    %v416 = vld [vmem:[#allocation2 + $0x5a8] sm:$0xff]
    %v417 = vld [vmem:[#allocation2 + $0x5b0] sm:$0xff]
    %v418 = vld [vmem:[#allocation2 + $0x5b8] sm:$0xff]
    %v419 = vld [vmem:[#allocation2 + $0x5c0] sm:$0xff]
    %v420 = vld [vmem:[#allocation2 + $0x5c8] sm:$0xff]
    %v421 = vld [vmem:[#allocation2 + $0x5d0] sm:$0xff]
    %v422 = vld [vmem:[#allocation2 + $0x5d8] sm:$0xff]
    %v423 = vld [vmem:[#allocation2 + $0x5e0] sm:$0xff]
    %v424 = vld [vmem:[#allocation2 + $0x5e8] sm:$0xff]
    %v425 = vld [vmem:[#allocation2 + $0x5f0] sm:$0xff]
    %v426 = vld [vmem:[#allocation2 + $0x5f8] sm:$0xff]
    %v427 = vld [vmem:[#allocation2 + $0x600] sm:$0xff]
    %v428 = vld [vmem:[#allocation2 + $0x608] sm:$0xff]
    %v429 = vld [vmem:[#allocation2 + $0x610] sm:$0xff]
    %v430 = vld [vmem:[#allocation2 + $0x618] sm:$0xff]
    %v431 = vld [vmem:[#allocation2 + $0x620] sm:$0xff]
    %v432 = vld [vmem:[#allocation2 + $0x628] sm:$0xff]
    %v433 = vld [vmem:[#allocation2 + $0x630] sm:$0xff]
    %v434 = vld [vmem:[#allocation2 + $0x638] sm:$0xff]
    %v435 = vld [vmem:[#allocation2 + $0x640] sm:$0xff]
    %v436 = vld [vmem:[#allocation2 + $0x648] sm:$0xff]
    %v437 = vld [vmem:[#allocation2 + $0x650] sm:$0xff]
    %v438 = vld [vmem:[#allocation2 + $0x658] sm:$0xff]
    %v439 = vld [vmem:[#allocation2 + $0x660] sm:$0xff]
    %v440 = vld [vmem:[#allocation2 + $0x668] sm:$0xff]
    %v441 = vld [vmem:[#allocation2 + $0x670] sm:$0xff]
    %v442 = vld [vmem:[#allocation2 + $0x678] sm:$0xff]
    %v443 = vld [vmem:[#allocation2 + $0x680] sm:$0xff]
    %v444 = vld [vmem:[#allocation2 + $0x688] sm:$0xff]
    %v445 = vld [vmem:[#allocation2 + $0x690] sm:$0xff]
    %v446 = vld [vmem:[#allocation2 + $0x698] sm:$0xff]
    %v447 = vld [vmem:[#allocation2 + $0x6a0] sm:$0xff]
    %v448 = vld [vmem:[#allocation2 + $0x6a8] sm:$0xff]
    %v449 = vld [vmem:[#allocation2 + $0x6b0] sm:$0xff]
    %v450 = vld [vmem:[#allocation2 + $0x6b8] sm:$0xff]
    %v451 = vld [vmem:[#allocation2 + $0x6c0] sm:$0xff]
    %v452 = vld [vmem:[#allocation2 + $0x6c8] sm:$0xff]
    %v453 = vld [vmem:[#allocation2 + $0x6d0] sm:$0xff]
    %v454 = vld [vmem:[#allocation2 + $0x6d8] sm:$0xff]
    %v455 = vld [vmem:[#allocation2 + $0x6e0] sm:$0xff]
    %v456 = vld [vmem:[#allocation2 + $0x6e8] sm:$0xff]
    %v457 = vld [vmem:[#allocation2 + $0x6f0] sm:$0xff]
    %v458 = vld [vmem:[#allocation2 + $0x6f8] sm:$0xff]
    %v459 = vld [vmem:[#allocation2 + $0x700] sm:$0xff]
    %v460 = vld [vmem:[#allocation2 + $0x708] sm:$0xff]
    %v461 = vld [vmem:[#allocation2 + $0x710] sm:$0xff]
    %v462 = vld [vmem:[#allocation2 + $0x718] sm:$0xff]
    %v463 = vld [vmem:[#allocation2 + $0x720] sm:$0xff]
    %v464 = vld [vmem:[#allocation2 + $0x728] sm:$0xff]
    %v465 = vld [vmem:[#allocation2 + $0x730] sm:$0xff]
    %v466 = vld [vmem:[#allocation2 + $0x738] sm:$0xff]
    %v467 = vld [vmem:[#allocation2 + $0x740] sm:$0xff]
    %v468 = vld [vmem:[#allocation2 + $0x748] sm:$0xff]
    %v469 = vld [vmem:[#allocation2 + $0x750] sm:$0xff]
    %v470 = vld [vmem:[#allocation2 + $0x758] sm:$0xff]
    %v471 = vld [vmem:[#allocation2 + $0x760] sm:$0xff]
    %v472 = vld [vmem:[#allocation2 + $0x768] sm:$0xff]
    %v473 = vld [vmem:[#allocation2 + $0x770] sm:$0xff]
    %v474 = vld [vmem:[#allocation2 + $0x778] sm:$0xff]
    %v475 = vld [vmem:[#allocation2 + $0x780] sm:$0xff]
    %v476 = vld [vmem:[#allocation2 + $0x788] sm:$0xff]
    %v477 = vld [vmem:[#allocation2 + $0x790] sm:$0xff]
    %v478 = vld [vmem:[#allocation2 + $0x798] sm:$0xff]
    %v479 = vld [vmem:[#allocation2 + $0x7a0] sm:$0xff]
    %v480 = vld [vmem:[#allocation2 + $0x7a8] sm:$0xff]
    %v481 = vld [vmem:[#allocation2 + $0x7b0] sm:$0xff]
    %v482 = vld [vmem:[#allocation2 + $0x7b8] sm:$0xff]
    %v483 = vld [vmem:[#allocation2 + $0x7c0] sm:$0xff]
    %v484 = vld [vmem:[#allocation2 + $0x7c8] sm:$0xff]
    %v485 = vld [vmem:[#allocation2 + $0x7d0] sm:$0xff]
    %v486 = vld [vmem:[#allocation2 + $0x7d8] sm:$0xff]
    %v487 = vld [vmem:[#allocation2 + $0x7e0] sm:$0xff]
    %v488 = vld [vmem:[#allocation2 + $0x7e8] sm:$0xff]
    %v489 = vld [vmem:[#allocation2 + $0x7f0] sm:$0xff]
    %v490 = vld [vmem:[#allocation2 + $0x7f8] sm:$0xff]
    %v491 = vld [vmem:[#allocation2 + $0x800] sm:$0xff]
    %v492 = vld [vmem:[#allocation2 + $0x808] sm:$0xff]
    %v493 = vld [vmem:[#allocation2 + $0x810] sm:$0xff]
    %v494 = vld [vmem:[#allocation2 + $0x818] sm:$0xff]
    %v495 = vld [vmem:[#allocation2 + $0x820] sm:$0xff]
    %v496 = vld [vmem:[#allocation2 + $0x828] sm:$0xff]
    %v497 = vld [vmem:[#allocation2 + $0x830] sm:$0xff]
    %v498 = vld [vmem:[#allocation2 + $0x838] sm:$0xff]
    %v499 = vld [vmem:[#allocation2 + $0x840] sm:$0xff]
    %v500 = vld [vmem:[#allocation2 + $0x848] sm:$0xff]
    %v501 = vld [vmem:[#allocation2 + $0x850] sm:$0xff]
    %v502 = vld [vmem:[#allocation2 + $0x858] sm:$0xff]
    %v503 = vld [vmem:[#allocation2 + $0x860] sm:$0xff]
    %v504 = vld [vmem:[#allocation2 + $0x868] sm:$0xff]
    %v505 = vld [vmem:[#allocation2 + $0x870] sm:$0xff]
    %v506 = vld [vmem:[#allocation2 + $0x878] sm:$0xff]
    %v507 = vld [vmem:[#allocation2 + $0x880] sm:$0xff]
    %v508 = vld [vmem:[#allocation2 + $0x888] sm:$0xff]
    %v509 = vld [vmem:[#allocation2 + $0x890] sm:$0xff]
    %v510 = vld [vmem:[#allocation2 + $0x898] sm:$0xff]
    %v511 = vld [vmem:[#allocation2 + $0x8a0] sm:$0xff]
    %v512 = vld [vmem:[#allocation2 + $0x8a8] sm:$0xff]
    %v513 = vld [vmem:[#allocation2 + $0x8b0] sm:$0xff]
    %v514 = vld [vmem:[#allocation2 + $0x8b8] sm:$0xff]
    %v515 = vld [vmem:[#allocation2 + $0x8c0] sm:$0xff]
    %v516 = vld [vmem:[#allocation2 + $0x8c8] sm:$0xff]
    %v517 = vld [vmem:[#allocation2 + $0x8d0] sm:$0xff]
    %v518 = vld [vmem:[#allocation2 + $0x8d8] sm:$0xff]
    %v519 = vld [vmem:[#allocation2 + $0x8e0] sm:$0xff]
    %v520 = vld [vmem:[#allocation2 + $0x8e8] sm:$0xff]
    %v521 = vld [vmem:[#allocation2 + $0x8f0] sm:$0xff]
    %v522 = vld [vmem:[#allocation2 + $0x8f8] sm:$0xff]
    %v523 = vld [vmem:[#allocation2 + $0x900] sm:$0xff]
    %v524 = vld [vmem:[#allocation2 + $0x908] sm:$0xff]
    %v525 = vld [vmem:[#allocation2 + $0x910] sm:$0xff]
    %v526 = vld [vmem:[#allocation2 + $0x918] sm:$0xff]
    %v527 = vld [vmem:[#allocation2 + $0x920] sm:$0xff]
    %v528 = vld [vmem:[#allocation2 + $0x928] sm:$0xff]
    %v529 = vld [vmem:[#allocation2 + $0x930] sm:$0xff]
    %v530 = vld [vmem:[#allocation2 + $0x938] sm:$0xff]
    %v531 = vld [vmem:[#allocation2 + $0x940] sm:$0xff]
    %v532 = vld [vmem:[#allocation2 + $0x948] sm:$0xff]
    %v533 = vld [vmem:[#allocation2 + $0x950] sm:$0xff]
    %v534 = vld [vmem:[#allocation2 + $0x958] sm:$0xff]
    %v535 = vld [vmem:[#allocation2 + $0x960] sm:$0xff]
    %v536 = vld [vmem:[#allocation2 + $0x968] sm:$0xff]
    %v537 = vld [vmem:[#allocation2 + $0x970] sm:$0xff]
    %v538 = vld [vmem:[#allocation2 + $0x978] sm:$0xff]
    %v539 = vld [vmem:[#allocation2 + $0x980] sm:$0xff]
    %v540 = vld [vmem:[#allocation2 + $0x988] sm:$0xff]
    %v541 = vld [vmem:[#allocation2 + $0x990] sm:$0xff]
    %v542 = vld [vmem:[#allocation2 + $0x998] sm:$0xff]
    %v543 = vld [vmem:[#allocation2 + $0x9a0] sm:$0xff]
    %v544 = vld [vmem:[#allocation2 + $0x9a8] sm:$0xff]
    %v545 = vld [vmem:[#allocation2 + $0x9b0] sm:$0xff]
    %v546 = vld [vmem:[#allocation2 + $0x9b8] sm:$0xff]
    %v547 = vld [vmem:[#allocation2 + $0x9c0] sm:$0xff]
    %v548 = vld [vmem:[#allocation2 + $0x9c8] sm:$0xff]
    %v549 = vld [vmem:[#allocation2 + $0x9d0] sm:$0xff]
    %v550 = vld [vmem:[#allocation2 + $0x9d8] sm:$0xff]
    %v551 = vld [vmem:[#allocation2 + $0x9e0] sm:$0xff]
    %v552 = vld [vmem:[#allocation2 + $0x9e8] sm:$0xff]
    %v553 = vld [vmem:[#allocation2 + $0x9f0] sm:$0xff]
    %v554 = vld [vmem:[#allocation2 + $0x9f8] sm:$0xff]
    %v555 = vld [vmem:[#allocation4] sm:$0xf]
    %v557 = vlaneseq
    %v558 = vshrl.u32 %v557, 7
    %v559 = vsub.s32 0, %v558
    %v560 = vrot.slane %v555, %v559
    %v561 = vlaneseq
    %v562 = vshrl.u32 %v561, 7
    %v563 = vsub.s32 1, %v562
    %v564 = vrot.slane %v555, %v563
    %v565 = vlaneseq
    %v566 = vshrl.u32 %v565, 7
    %v567 = vsub.s32 2, %v566
    %v568 = vrot.slane %v555, %v567
    %v569 = vlaneseq
    %v570 = vshrl.u32 %v569, 7
    %v571 = vsub.s32 3, %v570
    %v572 = vrot.slane %v555, %v571
    %577 = vmatprep.subr.mxu0 %v236
    %578 = vmatpush1.msra.mxu0 %v235
    %579 = vmatprep.subr.mxu0 %v240
    %580 = vmatpush1.msra.mxu0 %v239
    %581 = vmatprep.subr.mxu0 %v244
    %582 = vmatpush1.msra.mxu0 %v243
    %583 = vmatprep.subr.mxu0 %v248
    %584 = vmatpush1.msra.mxu0 %v247
    %585 = vmatprep.subr.mxu0 %v252
    %586 = vmatpush1.msra.mxu0 %v251
    %587 = vmatprep.subr.mxu0 %v256
    %588 = vmatpush1.msra.mxu0 %v255
    %589 = vmatprep.subr.mxu0 %v260
    %590 = vmatpush1.msra.mxu0 %v259
    %591 = vmatprep.subr.mxu0 %v264
    %592 = vmatpush1.msra.mxu0 %v263
    %593 = vmatprep.subr.mxu0 %v268
    %594 = vmatpush1.msra.mxu0 %v267
    %595 = vmatprep.subr.mxu0 %v272
    %596 = vmatpush1.msra.mxu0 %v271
    %597 = vmatprep.subr.mxu0 %v276
    %598 = vmatpush1.msra.mxu0 %v275
    %599 = vmatprep.subr.mxu0 %v280
    %600 = vmatpush1.msra.mxu0 %v279
    %601 = vmatprep.subr.mxu0 %v284
    %602 = vmatpush1.msra.mxu0 %v283
    %603 = vmatprep.subr.mxu0 %v288
    %604 = vmatpush1.msra.mxu0 %v287
    %605 = vmatprep.subr.mxu0 %v292
    %606 = vmatpush1.msra.mxu0 %v291
    %607 = vmatprep.subr.mxu0 %v296
    %608 = vmatpush1.msra.mxu0 %v295
    %609 = vmatprep.subr.mxu0 %v300
    %610 = vmatpush1.msra.mxu0 %v299
    %611 = vmatprep.subr.mxu0 %v304
    %612 = vmatpush1.msra.mxu0 %v303
    %613 = vmatprep.subr.mxu0 %v308
    %614 = vmatpush1.msra.mxu0 %v307
    %615 = vmatprep.subr.mxu0 %v312
    %616 = vmatpush1.msra.mxu0 %v311
    %617 = vmatprep.subr.mxu0 %v316
    %618 = vmatpush1.msra.mxu0 %v315
    %619 = vmatprep.subr.mxu0 %v320
    %620 = vmatpush1.msra.mxu0 %v319
    %621 = vmatprep.subr.mxu0 %v324
    %622 = vmatpush1.msra.mxu0 %v323
    %623 = vmatprep.subr.mxu0 %v328
    %624 = vmatpush1.msra.mxu0 %v327
    %625 = vmatprep.subr.mxu0 %v332
    %626 = vmatpush1.msra.mxu0 %v331
    %627 = vmatprep.subr.mxu0 %v336
    %628 = vmatpush1.msra.mxu0 %v335
    %629 = vmatprep.subr.mxu0 %v340
    %630 = vmatpush1.msra.mxu0 %v339
    %631 = vmatprep.subr.mxu0 %v344
    %632 = vmatpush1.msra.mxu0 %v343
    %633 = vmatprep.subr.mxu0 %v348
    %634 = vmatpush1.msra.mxu0 %v347
    %635 = vmatprep.subr.mxu0 %v352
    %636 = vmatpush1.msra.mxu0 %v351
    %637 = vmatprep.subr.mxu0 %v356
    %638 = vmatpush1.msra.mxu0 %v355
    %639 = vmatprep.subr.mxu0 %v360
    %640 = vmatpush1.msra.mxu0 %v359
    %641 = vmatprep.mubr.f32.mxu0 %v173
    %642 = vmatmul.mubr.f32.gmra.mrb[0].mxu0 %v164
    %v643 = vpop.f32.mrb[0].mxu0
    %v644 = vadd.f32 %v560, %v643
    %v645 = vpop.f32.mrb[0].mxu0
    %v646 = vadd.f32 %v564, %v645
    %647 = vmatprep.mubr.f32.mxu0 %v231
    %648 = vmatmul.mubr.f32.gmra.mrb[0].mxu0 %v230
    %v649 = vpop.f32.mrb[0].mxu0
    %v650 = vadd.f32 %v560, %v649
    %v651 = vpop.f32.mrb[0].mxu0
    %v652 = vadd.f32 %v564, %v651
    %653 = vmatprep.mubr.f32.mxu0 %v213
    %654 = vmatmul.mubr.f32.gmra.mrb[0].mxu0 %v207
    %v655 = vpop.f32.mrb[0].mxu0
    %v656 = vadd.f32 %v560, %v655
    %v657 = vpop.f32.mrb[0].mxu0
    %v658 = vadd.f32 %v564, %v657
    %659 = vdwg.mxu0
    %660 = vmatprep.subr.mxu0 %v364
    %661 = vmatpush1.msra.mxu0 %v363
    %662 = vmatprep.subr.mxu0 %v368
    %663 = vmatpush1.msra.mxu0 %v367
    %664 = vmatprep.subr.mxu0 %v372
    %665 = vmatpush1.msra.mxu0 %v371
    %666 = vmatprep.subr.mxu0 %v376
    %667 = vmatpush1.msra.mxu0 %v375
    %668 = vmatprep.subr.mxu0 %v380
    %669 = vmatpush1.msra.mxu0 %v379
    %670 = vmatprep.subr.mxu0 %v384
    %671 = vmatpush1.msra.mxu0 %v383
    %672 = vmatprep.subr.mxu0 %v388
    %673 = vmatpush1.msra.mxu0 %v387
    %674 = vmatprep.subr.mxu0 %v392
    %675 = vmatpush1.msra.mxu0 %v391
    %676 = vmatprep.subr.mxu0 %v396
    %677 = vmatpush1.msra.mxu0 %v395
    %678 = vmatprep.subr.mxu0 %v400
    %679 = vmatpush1.msra.mxu0 %v399
    %680 = vmatprep.subr.mxu0 %v404
    %681 = vmatpush1.msra.mxu0 %v403
    %682 = vmatprep.subr.mxu0 %v408
    %683 = vmatpush1.msra.mxu0 %v407
    %684 = vmatprep.subr.mxu0 %v412
    %685 = vmatpush1.msra.mxu0 %v411
    %686 = vmatprep.subr.mxu0 %v416
    %687 = vmatpush1.msra.mxu0 %v415
    %688 = vmatprep.subr.mxu0 %v420
    %689 = vmatpush1.msra.mxu0 %v419
    %690 = vmatprep.subr.mxu0 %v424
    %691 = vmatpush1.msra.mxu0 %v423
    %692 = vmatprep.subr.mxu0 %v428
    %693 = vmatpush1.msra.mxu0 %v427
    %694 = vmatprep.subr.mxu0 %v432
    %695 = vmatpush1.msra.mxu0 %v431
    %696 = vmatprep.subr.mxu0 %v436
    %697 = vmatpush1.msra.mxu0 %v435
    %698 = vmatprep.subr.mxu0 %v440
    %699 = vmatpush1.msra.mxu0 %v439
    %700 = vmatprep.subr.mxu0 %v444
    %701 = vmatpush1.msra.mxu0 %v443
    %702 = vmatprep.subr.mxu0 %v448
    %703 = vmatpush1.msra.mxu0 %v447
    %704 = vmatprep.subr.mxu0 %v452
    %705 = vmatpush1.msra.mxu0 %v451
    %706 = vmatprep.subr.mxu0 %v456
    %707 = vmatpush1.msra.mxu0 %v455
    %708 = vmatprep.subr.mxu0 %v460
    %709 = vmatpush1.msra.mxu0 %v459
    %710 = vmatprep.subr.mxu0 %v464
    %711 = vmatpush1.msra.mxu0 %v463
    %712 = vmatprep.subr.mxu0 %v468
    %713 = vmatpush1.msra.mxu0 %v467
    %714 = vmatprep.subr.mxu0 %v472
    %715 = vmatpush1.msra.mxu0 %v471
    %716 = vmatprep.subr.mxu0 %v476
    %717 = vmatpush1.msra.mxu0 %v475
    %718 = vmatprep.subr.mxu0 %v480
    %719 = vmatpush1.msra.mxu0 %v479
    %720 = vmatprep.subr.mxu0 %v484
    %721 = vmatpush1.msra.mxu0 %v483
    %722 = vmatprep.subr.mxu0 %v488
    %723 = vmatpush1.msra.mxu0 %v487
    %724 = vmatprep.mubr.f32.mxu0 %v185
    %725 = vmatmul.mubr.f32.gmra.mrb[0].mxu0 %v179
    %v726 = vpop.f32.mrb[0].mxu0
    %v727 = vadd.f32 %v644, %v726
    %v728 = vpop.f32.mrb[0].mxu0
    %v729 = vadd.f32 %v646, %v728
    %730 = vmatprep.mubr.f32.mxu0 %v233
    %731 = vmatmul.mubr.f32.gmra.mrb[0].mxu0 %v232
    %v732 = vpop.f32.mrb[0].mxu0
    %v733 = vadd.f32 %v650, %v732
    %v734 = vpop.f32.mrb[0].mxu0
    %v735 = vadd.f32 %v652, %v734
    %736 = vmatprep.mubr.f32.mxu0 %v217
    %737 = vmatmul.mubr.f32.gmra.mrb[0].mxu0 %v215
    %v738 = vpop.f32.mrb[0].mxu0
    %v739 = vadd.f32 %v656, %v738
    %v740 = vpop.f32.mrb[0].mxu0
    %v741 = vadd.f32 %v658, %v740
    %742 = vdwg.mxu0
    %743 = vmatprep.subr.mxu0 %v492
    %744 = vmatpush1.msra.mxu0 %v491
    %745 = vmatprep.subr.mxu0 %v496
    %746 = vmatpush1.msra.mxu0 %v495
    %747 = vmatprep.subr.mxu0 %v500
    %748 = vmatpush1.msra.mxu0 %v499
    %749 = vmatprep.subr.mxu0 %v504
    %750 = vmatpush1.msra.mxu0 %v503
    %751 = vmatprep.subr.mxu0 %v508
    %752 = vmatpush1.msra.mxu0 %v507
    %753 = vmatprep.subr.mxu0 %v512
    %754 = vmatpush1.msra.mxu0 %v511
    %755 = vmatprep.subr.mxu0 %v516
    %756 = vmatpush1.msra.mxu0 %v515
    %757 = vmatprep.subr.mxu0 %v520
    %758 = vmatpush1.msra.mxu0 %v519
    %759 = vmatprep.subr.mxu0 %v524
    %760 = vmatpush1.msra.mxu0 %v523
    %761 = vmatprep.subr.mxu0 %v528
    %762 = vmatpush1.msra.mxu0 %v527
    %763 = vmatprep.subr.mxu0 %v532
    %764 = vmatpush1.msra.mxu0 %v531
    %765 = vmatprep.subr.mxu0 %v536
    %766 = vmatpush1.msra.mxu0 %v535
    %767 = vmatprep.subr.mxu0 %v540
    %768 = vmatpush1.msra.mxu0 %v539
    %769 = vmatprep.subr.mxu0 %v544
    %770 = vmatpush1.msra.mxu0 %v543
    %771 = vmatprep.subr.mxu0 %v548
    %772 = vmatpush1.msra.mxu0 %v547
    %773 = vmatprep.subr.mxu0 %v552
    %774 = vmatpush1.msra.mxu0 %v551
    %775 = vmatprep.subr.mxu0 0.0
    %776 = vmatpush1.msra.mxu0 0.0
    %777 = vmatprep.subr.mxu0 0.0
    %778 = vmatpush1.msra.mxu0 0.0
    %779 = vmatprep.subr.mxu0 0.0
    %780 = vmatpush1.msra.mxu0 0.0
    %781 = vmatprep.subr.mxu0 0.0
    %782 = vmatpush1.msra.mxu0 0.0
    %783 = vmatprep.subr.mxu0 0.0
    %784 = vmatpush1.msra.mxu0 0.0
    %785 = vmatprep.subr.mxu0 0.0
    %786 = vmatpush1.msra.mxu0 0.0
    %787 = vmatprep.subr.mxu0 0.0
    %788 = vmatpush1.msra.mxu0 0.0
    %789 = vmatprep.subr.mxu0 0.0
    %790 = vmatpush1.msra.mxu0 0.0
    %791 = vmatprep.subr.mxu0 0.0
    %792 = vmatpush1.msra.mxu0 0.0
    %793 = vmatprep.subr.mxu0 0.0
    %794 = vmatpush1.msra.mxu0 0.0
    %795 = vmatprep.subr.mxu0 0.0
    %796 = vmatpush1.msra.mxu0 0.0
    %797 = vmatprep.subr.mxu0 0.0
    %798 = vmatpush1.msra.mxu0 0.0
    %799 = vmatprep.subr.mxu0 0.0
    %800 = vmatpush1.msra.mxu0 0.0
    %801 = vmatprep.subr.mxu0 0.0
    %802 = vmatpush1.msra.mxu0 0.0
    %803 = vmatprep.subr.mxu0 0.0
    %804 = vmatpush1.msra.mxu0 0.0
    %805 = vmatprep.subr.mxu0 0.0
    %806 = vmatpush1.msra.mxu0 0.0
    %807 = vmatprep.mubr.f32.mxu0 0.0
    %808 = vmatmul.mubr.f32.gmra.mrb[0].mxu0 %v191
    %v809 = vpop.f32.mrb[0].mxu0
    %v810 = vadd.f32 %v727, %v809
    %v811 = vpop.f32.mrb[0].mxu0
    %v812 = vadd.f32 %v729, %v811
    %813 = vmatprep.mubr.f32.mxu0 0.0
    %814 = vmatmul.mubr.f32.gmra.mrb[0].mxu0 %v234
    %v815 = vpop.f32.mrb[0].mxu0
    %v816 = vadd.f32 %v733, %v815
    %v817 = vpop.f32.mrb[0].mxu0
    %v818 = vadd.f32 %v735, %v817
    %819 = vmatprep.mubr.f32.mxu0 0.0
    %820 = vmatmul.mubr.f32.gmra.mrb[0].mxu0 %v219
    %v821 = vpop.f32.mrb[0].mxu0
    %v822 = vadd.f32 %v739, %v821
    %v823 = vpop.f32.mrb[0].mxu0
    %v824 = vadd.f32 %v741, %v823
    %825 = vdwg.mxu0
    %826 = vmatprep.subr.mxu0 %v238
    %827 = vmatpush1.msra.mxu0 %v237
    %828 = vmatprep.subr.mxu0 %v242
    %829 = vmatpush1.msra.mxu0 %v241
    %830 = vmatprep.subr.mxu0 %v246
    %831 = vmatpush1.msra.mxu0 %v245
    %832 = vmatprep.subr.mxu0 %v250
    %833 = vmatpush1.msra.mxu0 %v249
    %834 = vmatprep.subr.mxu0 %v254
    %835 = vmatpush1.msra.mxu0 %v253
    %836 = vmatprep.subr.mxu0 %v258
    %837 = vmatpush1.msra.mxu0 %v257
    %838 = vmatprep.subr.mxu0 %v262
    %839 = vmatpush1.msra.mxu0 %v261
    %840 = vmatprep.subr.mxu0 %v266
    %841 = vmatpush1.msra.mxu0 %v265
    %842 = vmatprep.subr.mxu0 %v270
    %843 = vmatpush1.msra.mxu0 %v269
    %844 = vmatprep.subr.mxu0 %v274
    %845 = vmatpush1.msra.mxu0 %v273
    %846 = vmatprep.subr.mxu0 %v278
    %847 = vmatpush1.msra.mxu0 %v277
    %848 = vmatprep.subr.mxu0 %v282
    %849 = vmatpush1.msra.mxu0 %v281
    %850 = vmatprep.subr.mxu0 %v286
    %851 = vmatpush1.msra.mxu0 %v285
    %852 = vmatprep.subr.mxu0 %v290
    %853 = vmatpush1.msra.mxu0 %v289
    %854 = vmatprep.subr.mxu0 %v294
    %855 = vmatpush1.msra.mxu0 %v293
    %856 = vmatprep.subr.mxu0 %v298
    %857 = vmatpush1.msra.mxu0 %v297
    %858 = vmatprep.subr.mxu0 %v302
    %859 = vmatpush1.msra.mxu0 %v301
    %860 = vmatprep.subr.mxu0 %v306
    %861 = vmatpush1.msra.mxu0 %v305
    %862 = vmatprep.subr.mxu0 %v310
    %863 = vmatpush1.msra.mxu0 %v309
    %864 = vmatprep.subr.mxu0 %v314
    %865 = vmatpush1.msra.mxu0 %v313
    %866 = vmatprep.subr.mxu0 %v318
    %867 = vmatpush1.msra.mxu0 %v317
    %868 = vmatprep.subr.mxu0 %v322
    %869 = vmatpush1.msra.mxu0 %v321
    %870 = vmatprep.subr.mxu0 %v326
    %871 = vmatpush1.msra.mxu0 %v325
    %872 = vmatprep.subr.mxu0 %v330
    %873 = vmatpush1.msra.mxu0 %v329
    %874 = vmatprep.subr.mxu0 %v334
    %875 = vmatpush1.msra.mxu0 %v333
    %876 = vmatprep.subr.mxu0 %v338
    %877 = vmatpush1.msra.mxu0 %v337
    %878 = vmatprep.subr.mxu0 %v342
    %879 = vmatpush1.msra.mxu0 %v341
    %880 = vmatprep.subr.mxu0 %v346
    %881 = vmatpush1.msra.mxu0 %v345
    %882 = vmatprep.subr.mxu0 %v350
    %883 = vmatpush1.msra.mxu0 %v349
    %884 = vmatprep.subr.mxu0 %v354
    %885 = vmatpush1.msra.mxu0 %v353
    %886 = vmatprep.subr.mxu0 %v358
    %887 = vmatpush1.msra.mxu0 %v357
    %888 = vmatprep.subr.mxu0 %v362
    %889 = vmatpush1.msra.mxu0 %v361
    %890 = vmatprep.mubr.f32.mxu0 %v173
    %891 = vmatmul.mubr.f32.gmra.mrb[0].mxu0 %v164
    %v892 = vpop.f32.mrb[0].mxu0
    %v893 = vadd.f32 %v568, %v892
    %v894 = vpop.f32.mrb[0].mxu0
    %v895 = vadd.f32 %v572, %v894
    %896 = vmatprep.mubr.f32.mxu0 %v231
    %897 = vmatmul.mubr.f32.gmra.mrb[0].mxu0 %v230
    %v898 = vpop.f32.mrb[0].mxu0
    %v899 = vadd.f32 %v568, %v898
    %v900 = vpop.f32.mrb[0].mxu0
    %v901 = vadd.f32 %v572, %v900
    %902 = vmatprep.mubr.f32.mxu0 %v213
    %903 = vmatmul.mubr.f32.gmra.mrb[0].mxu0 %v207
    %v904 = vpop.f32.mrb[0].mxu0
    %v905 = vadd.f32 %v568, %v904
    %v906 = vpop.f32.mrb[0].mxu0
    %v907 = vadd.f32 %v572, %v906
    %908 = vdwg.mxu0
    %909 = vmatprep.subr.mxu0 %v366
    %910 = vmatpush1.msra.mxu0 %v365
    %911 = vmatprep.subr.mxu0 %v370
    %912 = vmatpush1.msra.mxu0 %v369
    %913 = vmatprep.subr.mxu0 %v374
    %914 = vmatpush1.msra.mxu0 %v373
    %915 = vmatprep.subr.mxu0 %v378
    %916 = vmatpush1.msra.mxu0 %v377
    %917 = vmatprep.subr.mxu0 %v382
    %918 = vmatpush1.msra.mxu0 %v381
    %919 = vmatprep.subr.mxu0 %v386
    %920 = vmatpush1.msra.mxu0 %v385
    %921 = vmatprep.subr.mxu0 %v390
    %922 = vmatpush1.msra.mxu0 %v389
    %923 = vmatprep.subr.mxu0 %v394
    %924 = vmatpush1.msra.mxu0 %v393
    %925 = vmatprep.subr.mxu0 %v398
    %926 = vmatpush1.msra.mxu0 %v397
    %927 = vmatprep.subr.mxu0 %v402
    %928 = vmatpush1.msra.mxu0 %v401
    %929 = vmatprep.subr.mxu0 %v406
    %930 = vmatpush1.msra.mxu0 %v405
    %931 = vmatprep.subr.mxu0 %v410
    %932 = vmatpush1.msra.mxu0 %v409
    %933 = vmatprep.subr.mxu0 %v414
    %934 = vmatpush1.msra.mxu0 %v413
    %935 = vmatprep.subr.mxu0 %v418
    %936 = vmatpush1.msra.mxu0 %v417
    %937 = vmatprep.subr.mxu0 %v422
    %938 = vmatpush1.msra.mxu0 %v421
    %939 = vmatprep.subr.mxu0 %v426
    %940 = vmatpush1.msra.mxu0 %v425
    %941 = vmatprep.subr.mxu0 %v430
    %942 = vmatpush1.msra.mxu0 %v429
    %943 = vmatprep.subr.mxu0 %v434
    %944 = vmatpush1.msra.mxu0 %v433
    %945 = vmatprep.subr.mxu0 %v438
    %946 = vmatpush1.msra.mxu0 %v437
    %947 = vmatprep.subr.mxu0 %v442
    %948 = vmatpush1.msra.mxu0 %v441
    %949 = vmatprep.subr.mxu0 %v446
    %950 = vmatpush1.msra.mxu0 %v445
    %951 = vmatprep.subr.mxu0 %v450
    %952 = vmatpush1.msra.mxu0 %v449
    %953 = vmatprep.subr.mxu0 %v454
    %954 = vmatpush1.msra.mxu0 %v453
    %955 = vmatprep.subr.mxu0 %v458
    %956 = vmatpush1.msra.mxu0 %v457
    %957 = vmatprep.subr.mxu0 %v462
    %958 = vmatpush1.msra.mxu0 %v461
    %959 = vmatprep.subr.mxu0 %v466
    %960 = vmatpush1.msra.mxu0 %v465
    %961 = vmatprep.subr.mxu0 %v470
    %962 = vmatpush1.msra.mxu0 %v469
    %963 = vmatprep.subr.mxu0 %v474
    %964 = vmatpush1.msra.mxu0 %v473
    %965 = vmatprep.subr.mxu0 %v478
    %966 = vmatpush1.msra.mxu0 %v477
    %967 = vmatprep.subr.mxu0 %v482
    %968 = vmatpush1.msra.mxu0 %v481
    %969 = vmatprep.subr.mxu0 %v486
    %970 = vmatpush1.msra.mxu0 %v485
    %971 = vmatprep.subr.mxu0 %v490
    %972 = vmatpush1.msra.mxu0 %v489
    %973 = vmatprep.mubr.f32.mxu0 %v185
    %974 = vmatmul.mubr.f32.gmra.mrb[0].mxu0 %v179
    %v975 = vpop.f32.mrb[0].mxu0
    %v976 = vadd.f32 %v893, %v975
    %v977 = vpop.f32.mrb[0].mxu0
    %v978 = vadd.f32 %v895, %v977
    %979 = vmatprep.mubr.f32.mxu0 %v233
    %980 = vmatmul.mubr.f32.gmra.mrb[0].mxu0 %v232
    %v981 = vpop.f32.mrb[0].mxu0
    %v982 = vadd.f32 %v899, %v981
    %v983 = vpop.f32.mrb[0].mxu0
    %v984 = vadd.f32 %v901, %v983
    %985 = vmatprep.mubr.f32.mxu0 %v217
    %986 = vmatmul.mubr.f32.gmra.mrb[0].mxu0 %v215
    %v987 = vpop.f32.mrb[0].mxu0
    %v988 = vadd.f32 %v905, %v987
    %v989 = vpop.f32.mrb[0].mxu0
    %v990 = vadd.f32 %v907, %v989
    %991 = vdwg.mxu0
    %992 = vmatprep.subr.mxu0 %v494
    %993 = vmatpush1.msra.mxu0 %v493
    %994 = vmatprep.subr.mxu0 %v498
    %995 = vmatpush1.msra.mxu0 %v497
    %996 = vmatprep.subr.mxu0 %v502
    %997 = vmatpush1.msra.mxu0 %v501
    %998 = vmatprep.subr.mxu0 %v506
    %999 = vmatpush1.msra.mxu0 %v505
    %1000 = vmatprep.subr.mxu0 %v510
    %1001 = vmatpush1.msra.mxu0 %v509
    %1002 = vmatprep.subr.mxu0 %v514
    %1003 = vmatpush1.msra.mxu0 %v513
    %1004 = vmatprep.subr.mxu0 %v518
    %1005 = vmatpush1.msra.mxu0 %v517
    %1006 = vmatprep.subr.mxu0 %v522
    %1007 = vmatpush1.msra.mxu0 %v521
    %1008 = vmatprep.subr.mxu0 %v526
    %1009 = vmatpush1.msra.mxu0 %v525
    %1010 = vmatprep.subr.mxu0 %v530
    %1011 = vmatpush1.msra.mxu0 %v529
    %1012 = vmatprep.subr.mxu0 %v534
    %1013 = vmatpush1.msra.mxu0 %v533
    %1014 = vmatprep.subr.mxu0 %v538
    %1015 = vmatpush1.msra.mxu0 %v537
    %1016 = vmatprep.subr.mxu0 %v542
    %1017 = vmatpush1.msra.mxu0 %v541
    %1018 = vmatprep.subr.mxu0 %v546
    %1019 = vmatpush1.msra.mxu0 %v545
    %1020 = vmatprep.subr.mxu0 %v550
    %1021 = vmatpush1.msra.mxu0 %v549
    %1022 = vmatprep.subr.mxu0 %v554
    %1023 = vmatpush1.msra.mxu0 %v553
    %1024 = vmatprep.subr.mxu0 0.0
    %1025 = vmatpush1.msra.mxu0 0.0
    %1026 = vmatprep.subr.mxu0 0.0
    %1027 = vmatpush1.msra.mxu0 0.0
    %1028 = vmatprep.subr.mxu0 0.0
    %1029 = vmatpush1.msra.mxu0 0.0
    %1030 = vmatprep.subr.mxu0 0.0
    %1031 = vmatpush1.msra.mxu0 0.0
    %1032 = vmatprep.subr.mxu0 0.0
    %1033 = vmatpush1.msra.mxu0 0.0
    %1034 = vmatprep.subr.mxu0 0.0
    %1035 = vmatpush1.msra.mxu0 0.0
    %1036 = vmatprep.subr.mxu0 0.0
    %1037 = vmatpush1.msra.mxu0 0.0
    %1038 = vmatprep.subr.mxu0 0.0
    %1039 = vmatpush1.msra.mxu0 0.0
    %1040 = vmatprep.subr.mxu0 0.0
    %1041 = vmatpush1.msra.mxu0 0.0
    %1042 = vmatprep.subr.mxu0 0.0
    %1043 = vmatpush1.msra.mxu0 0.0
    %1044 = vmatprep.subr.mxu0 0.0
    %1045 = vmatpush1.msra.mxu0 0.0
    %1046 = vmatprep.subr.mxu0 0.0
    %1047 = vmatpush1.msra.mxu0 0.0
    %1048 = vmatprep.subr.mxu0 0.0
    %1049 = vmatpush1.msra.mxu0 0.0
    %1050 = vmatprep.subr.mxu0 0.0
    %1051 = vmatpush1.msra.mxu0 0.0
    %1052 = vmatprep.subr.mxu0 0.0
    %1053 = vmatpush1.msra.mxu0 0.0
    %1054 = vmatprep.subr.mxu0 0.0
    %1055 = vmatpush1.msra.mxu0 0.0
    %1056 = vmatprep.mubr.f32.mxu0 0.0
    %1057 = vmatmul.mubr.f32.gmra.mrb[0].mxu0 %v191
    %v1058 = vpop.f32.mrb[0].mxu0
    %v1059 = vadd.f32 %v976, %v1058
    %v1060 = vpop.f32.mrb[0].mxu0
    %v1061 = vadd.f32 %v978, %v1060
    %1062 = vmatprep.mubr.f32.mxu0 0.0
    %1063 = vmatmul.mubr.f32.gmra.mrb[0].mxu0 %v234
    %v1064 = vpop.f32.mrb[0].mxu0
    %v1065 = vadd.f32 %v982, %v1064
    %v1066 = vpop.f32.mrb[0].mxu0
    %v1067 = vadd.f32 %v984, %v1066
    %1068 = vmatprep.mubr.f32.mxu0 0.0
    %1069 = vmatmul.mubr.f32.gmra.mrb[0].mxu0 %v219
    %v1070 = vpop.f32.mrb[0].mxu0
    %v1071 = vadd.f32 %v988, %v1070
    %v1072 = vpop.f32.mrb[0].mxu0
    %v1073 = vadd.f32 %v990, %v1072
    %1074 = vdwg.mxu0
    %v1075 = vmax.f32 %v810, 0.0
    %v1076 = vmax.f32 %v812, 0.0
    %v1077 = vmax.f32 %v1059, 0.0
    %v1078 = vmax.f32 %v1061, 0.0
    %v1079 = vmax.f32 %v816, 0.0
    %v1080 = vmax.f32 %v818, 0.0
    %v1081 = vmax.f32 %v1065, 0.0
    %v1082 = vmax.f32 %v1067, 0.0
    %v1083 = vmax.f32 %v822, 0.0
    %v1084 = vmax.f32 %v824, 0.0
    %v1085 = vmax.f32 %v1071, 0.0
    %v1086 = vmax.f32 %v1073, 0.0
    %v1099 = vrot.slane %v1075, 1
    %v1100 = vrot.slane %v1079, 1
    %v1101 = vsel %vm170, %v1099, %v1100
    %v1102 = vrot.slane %v1076, 1
    %v1103 = vrot.slane %v1080, 1
    %v1104 = vsel %vm170, %v1102, %v1103
    %v1105 = vrot.slane %v1077, 1
    %v1106 = vrot.slane %v1081, 1
    %v1107 = vsel %vm170, %v1105, %v1106
    %v1108 = vrot.slane %v1078, 1
    %v1109 = vrot.slane %v1082, 1
    %v1110 = vsel %vm170, %v1108, %v1109
    %v1111 = vrot.slane %v1083, 1
    %v1112 = vsel %vm170, %v1100, %v1111
    %v1113 = vrot.slane %v1084, 1
    %v1114 = vsel %vm170, %v1103, %v1113
    %v1115 = vrot.slane %v1085, 1
    %v1116 = vsel %vm170, %v1106, %v1115
    %v1117 = vrot.slane %v1086, 1
    %v1118 = vsel %vm170, %v1109, %v1117
    %v1131 = vmax.f32 %v1075, %v1101
    %v1132 = vmax.f32 %v1076, %v1104
    %v1133 = vmax.f32 %v1077, %v1107
    %v1134 = vmax.f32 %v1078, %v1110
    %v1135 = vmax.f32 %v1079, %v1112
    %v1136 = vmax.f32 %v1080, %v1114
    %v1137 = vmax.f32 %v1081, %v1116
    %v1138 = vmax.f32 %v1082, %v1118
    %v1139 = vmax.f32 %v1083, %v1111
    %v1140 = vmax.f32 %v1084, %v1113
    %v1141 = vmax.f32 %v1085, %v1115
    %v1142 = vmax.f32 %v1086, %v1117
    %v1143 = vld [vmem:[#allocation6] sm:$0xff]
    %v1144 = vld [vmem:[#allocation6 + $0x8] sm:$0xff]
    %v1145 = vld [vmem:[#allocation6 + $0x10] sm:$0xff]
    %v1146 = vld [vmem:[#allocation6 + $0x18] sm:$0xff]
    %v1147 = vld [vmem:[#allocation6 + $0x20] sm:$0xff]
    %v1148 = vld [vmem:[#allocation6 + $0x28] sm:$0xff]
    %v1149 = vld [vmem:[#allocation6 + $0x30] sm:$0xff]
    %v1150 = vld [vmem:[#allocation6 + $0x38] sm:$0xff]
    %v1151 = vld [vmem:[#allocation6 + $0x40] sm:$0xff]
    %v1152 = vld [vmem:[#allocation6 + $0x48] sm:$0xff]
    %v1153 = vld [vmem:[#allocation6 + $0x50] sm:$0xff]
    %v1154 = vld [vmem:[#allocation6 + $0x58] sm:$0xff]
    %v1155 = vld [vmem:[#allocation6 + $0x60] sm:$0xff]
    %v1156 = vld [vmem:[#allocation6 + $0x68] sm:$0xff]
    %v1157 = vld [vmem:[#allocation6 + $0x70] sm:$0xff]
    %v1158 = vld [vmem:[#allocation6 + $0x78] sm:$0xff]
    %v1159 = vld [vmem:[#allocation6 + $0x80] sm:$0xff]
    %v1160 = vld [vmem:[#allocation6 + $0x88] sm:$0xff]
    %v1161 = vld [vmem:[#allocation6 + $0x90] sm:$0xff]
    %v1162 = vld [vmem:[#allocation6 + $0x98] sm:$0xff]
    %v1163 = vld [vmem:[#allocation6 + $0xa0] sm:$0xff]
    %v1164 = vld [vmem:[#allocation6 + $0xa8] sm:$0xff]
    %v1165 = vld [vmem:[#allocation6 + $0xb0] sm:$0xff]
    %v1166 = vld [vmem:[#allocation6 + $0xb8] sm:$0xff]
    %v1167 = vld [vmem:[#allocation6 + $0xc0] sm:$0xff]
    %v1168 = vld [vmem:[#allocation6 + $0xc8] sm:$0xff]
    %v1169 = vld [vmem:[#allocation6 + $0xd0] sm:$0xff]
    %v1170 = vld [vmem:[#allocation6 + $0xd8] sm:$0xff]
    %v1171 = vld [vmem:[#allocation6 + $0xe0] sm:$0xff]
    %v1172 = vld [vmem:[#allocation6 + $0xe8] sm:$0xff]
    %v1173 = vld [vmem:[#allocation6 + $0xf0] sm:$0xff]
    %v1174 = vld [vmem:[#allocation6 + $0xf8] sm:$0xff]
    %v1175 = vld [vmem:[#allocation6 + $0x100] sm:$0xff]
    %v1176 = vld [vmem:[#allocation6 + $0x108] sm:$0xff]
    %v1177 = vld [vmem:[#allocation6 + $0x110] sm:$0xff]
    %v1178 = vld [vmem:[#allocation6 + $0x118] sm:$0xff]
    %v1179 = vld [vmem:[#allocation6 + $0x120] sm:$0xff]
    %v1180 = vld [vmem:[#allocation6 + $0x128] sm:$0xff]
    %v1181 = vld [vmem:[#allocation6 + $0x130] sm:$0xff]
    %v1182 = vld [vmem:[#allocation6 + $0x138] sm:$0xff]
    %v1183 = vld [vmem:[#allocation6 + $0x140] sm:$0xff]
    %v1184 = vld [vmem:[#allocation6 + $0x148] sm:$0xff]
    %v1185 = vld [vmem:[#allocation6 + $0x150] sm:$0xff]
    %v1186 = vld [vmem:[#allocation6 + $0x158] sm:$0xff]
    %v1187 = vld [vmem:[#allocation6 + $0x160] sm:$0xff]
    %v1188 = vld [vmem:[#allocation6 + $0x168] sm:$0xff]
    %v1189 = vld [vmem:[#allocation6 + $0x170] sm:$0xff]
    %v1190 = vld [vmem:[#allocation6 + $0x178] sm:$0xff]
    %v1191 = vld [vmem:[#allocation6 + $0x180] sm:$0xff]
    %v1192 = vld [vmem:[#allocation6 + $0x188] sm:$0xff]
    %v1193 = vld [vmem:[#allocation6 + $0x190] sm:$0xff]
    %v1194 = vld [vmem:[#allocation6 + $0x198] sm:$0xff]
    %v1195 = vld [vmem:[#allocation6 + $0x1a0] sm:$0xff]
    %v1196 = vld [vmem:[#allocation6 + $0x1a8] sm:$0xff]
    %v1197 = vld [vmem:[#allocation6 + $0x1b0] sm:$0xff]
    %v1198 = vld [vmem:[#allocation6 + $0x1b8] sm:$0xff]
    %v1199 = vld [vmem:[#allocation6 + $0x1c0] sm:$0xff]
    %v1200 = vld [vmem:[#allocation6 + $0x1c8] sm:$0xff]
    %v1201 = vld [vmem:[#allocation6 + $0x1d0] sm:$0xff]
    %v1202 = vld [vmem:[#allocation6 + $0x1d8] sm:$0xff]
    %v1203 = vld [vmem:[#allocation6 + $0x1e0] sm:$0xff]
    %v1204 = vld [vmem:[#allocation6 + $0x1e8] sm:$0xff]
    %v1205 = vld [vmem:[#allocation6 + $0x1f0] sm:$0xff]
    %v1206 = vld [vmem:[#allocation6 + $0x1f8] sm:$0xff]
    %v1207 = vld [vmem:[#allocation6 + $0x200] sm:$0xff]
    %v1208 = vld [vmem:[#allocation6 + $0x208] sm:$0xff]
    %v1209 = vld [vmem:[#allocation6 + $0x210] sm:$0xff]
    %v1210 = vld [vmem:[#allocation6 + $0x218] sm:$0xff]
    %v1211 = vld [vmem:[#allocation6 + $0x220] sm:$0xff]
    %v1212 = vld [vmem:[#allocation6 + $0x228] sm:$0xff]
    %v1213 = vld [vmem:[#allocation6 + $0x230] sm:$0xff]
    %v1214 = vld [vmem:[#allocation6 + $0x238] sm:$0xff]
    %v1215 = vld [vmem:[#allocation6 + $0x240] sm:$0xff]
    %v1216 = vld [vmem:[#allocation6 + $0x248] sm:$0xff]
    %v1217 = vld [vmem:[#allocation6 + $0x250] sm:$0xff]
    %v1218 = vld [vmem:[#allocation6 + $0x258] sm:$0xff]
    %v1219 = vld [vmem:[#allocation6 + $0x260] sm:$0xff]
    %v1220 = vld [vmem:[#allocation6 + $0x268] sm:$0xff]
    %v1221 = vld [vmem:[#allocation6 + $0x270] sm:$0xff]
    %v1222 = vld [vmem:[#allocation6 + $0x278] sm:$0xff]
    %v1223 = vld [vmem:[#allocation6 + $0x280] sm:$0xff]
    %v1224 = vld [vmem:[#allocation6 + $0x288] sm:$0xff]
    %v1225 = vld [vmem:[#allocation6 + $0x290] sm:$0xff]
    %v1226 = vld [vmem:[#allocation6 + $0x298] sm:$0xff]
    %v1227 = vld [vmem:[#allocation6 + $0x2a0] sm:$0xff]
    %v1228 = vld [vmem:[#allocation6 + $0x2a8] sm:$0xff]
    %v1229 = vld [vmem:[#allocation6 + $0x2b0] sm:$0xff]
    %v1230 = vld [vmem:[#allocation6 + $0x2b8] sm:$0xff]
    %v1231 = vld [vmem:[#allocation6 + $0x2c0] sm:$0xff]
    %v1232 = vld [vmem:[#allocation6 + $0x2c8] sm:$0xff]
    %v1233 = vld [vmem:[#allocation6 + $0x2d0] sm:$0xff]
    %v1234 = vld [vmem:[#allocation6 + $0x2d8] sm:$0xff]
    %v1235 = vld [vmem:[#allocation6 + $0x2e0] sm:$0xff]
    %v1236 = vld [vmem:[#allocation6 + $0x2e8] sm:$0xff]
    %v1237 = vld [vmem:[#allocation6 + $0x2f0] sm:$0xff]
    %v1238 = vld [vmem:[#allocation6 + $0x2f8] sm:$0xff]
    %v1239 = vld [vmem:[#allocation6 + $0x300] sm:$0xff]
    %v1240 = vld [vmem:[#allocation6 + $0x308] sm:$0xff]
    %v1241 = vld [vmem:[#allocation6 + $0x310] sm:$0xff]
    %v1242 = vld [vmem:[#allocation6 + $0x318] sm:$0xff]
    %v1243 = vld [vmem:[#allocation6 + $0x320] sm:$0xff]
    %v1244 = vld [vmem:[#allocation6 + $0x328] sm:$0xff]
    %v1245 = vld [vmem:[#allocation6 + $0x330] sm:$0xff]
    %v1246 = vld [vmem:[#allocation6 + $0x338] sm:$0xff]
    %v1247 = vld [vmem:[#allocation6 + $0x340] sm:$0xff]
    %v1248 = vld [vmem:[#allocation6 + $0x348] sm:$0xff]
    %v1249 = vld [vmem:[#allocation6 + $0x350] sm:$0xff]
    %v1250 = vld [vmem:[#allocation6 + $0x358] sm:$0xff]
    %v1251 = vld [vmem:[#allocation6 + $0x360] sm:$0xff]
    %v1252 = vld [vmem:[#allocation6 + $0x368] sm:$0xff]
    %v1253 = vld [vmem:[#allocation6 + $0x370] sm:$0xff]
    %v1254 = vld [vmem:[#allocation6 + $0x378] sm:$0xff]
    %v1255 = vld [vmem:[#allocation6 + $0x380] sm:$0xff]
    %v1256 = vld [vmem:[#allocation6 + $0x388] sm:$0xff]
    %v1257 = vld [vmem:[#allocation6 + $0x390] sm:$0xff]
    %v1258 = vld [vmem:[#allocation6 + $0x398] sm:$0xff]
    %v1259 = vld [vmem:[#allocation6 + $0x3a0] sm:$0xff]
    %v1260 = vld [vmem:[#allocation6 + $0x3a8] sm:$0xff]
    %v1261 = vld [vmem:[#allocation6 + $0x3b0] sm:$0xff]
    %v1262 = vld [vmem:[#allocation6 + $0x3b8] sm:$0xff]
    %v1263 = vld [vmem:[#allocation6 + $0x3c0] sm:$0xff]
    %v1264 = vld [vmem:[#allocation6 + $0x3c8] sm:$0xff]
    %v1265 = vld [vmem:[#allocation6 + $0x3d0] sm:$0xff]
    %v1266 = vld [vmem:[#allocation6 + $0x3d8] sm:$0xff]
    %v1267 = vld [vmem:[#allocation6 + $0x3e0] sm:$0xff]
    %v1268 = vld [vmem:[#allocation6 + $0x3e8] sm:$0xff]
    %v1269 = vld [vmem:[#allocation6 + $0x3f0] sm:$0xff]
    %v1270 = vld [vmem:[#allocation6 + $0x3f8] sm:$0xff]
    %v1271 = vld [vmem:[#allocation6 + $0x400] sm:$0xff]
    %v1272 = vld [vmem:[#allocation6 + $0x408] sm:$0xff]
    %v1273 = vld [vmem:[#allocation6 + $0x410] sm:$0xff]
    %v1274 = vld [vmem:[#allocation6 + $0x418] sm:$0xff]
    %v1275 = vld [vmem:[#allocation6 + $0x420] sm:$0xff]
    %v1276 = vld [vmem:[#allocation6 + $0x428] sm:$0xff]
    %v1277 = vld [vmem:[#allocation6 + $0x430] sm:$0xff]
    %v1278 = vld [vmem:[#allocation6 + $0x438] sm:$0xff]
    %v1279 = vld [vmem:[#allocation6 + $0x440] sm:$0xff]
    %v1280 = vld [vmem:[#allocation6 + $0x448] sm:$0xff]
    %v1281 = vld [vmem:[#allocation6 + $0x450] sm:$0xff]
    %v1282 = vld [vmem:[#allocation6 + $0x458] sm:$0xff]
    %v1283 = vld [vmem:[#allocation6 + $0x460] sm:$0xff]
    %v1284 = vld [vmem:[#allocation6 + $0x468] sm:$0xff]
    %v1285 = vld [vmem:[#allocation6 + $0x470] sm:$0xff]
    %v1286 = vld [vmem:[#allocation6 + $0x478] sm:$0xff]
    %v1287 = vld [vmem:[#allocation6 + $0x480] sm:$0xff]
    %v1288 = vld [vmem:[#allocation6 + $0x488] sm:$0xff]
    %v1289 = vld [vmem:[#allocation6 + $0x490] sm:$0xff]
    %v1290 = vld [vmem:[#allocation6 + $0x498] sm:$0xff]
    %v1291 = vld [vmem:[#allocation6 + $0x4a0] sm:$0xff]
    %v1292 = vld [vmem:[#allocation6 + $0x4a8] sm:$0xff]
    %v1293 = vld [vmem:[#allocation6 + $0x4b0] sm:$0xff]
    %v1294 = vld [vmem:[#allocation6 + $0x4b8] sm:$0xff]
    %v1295 = vld [vmem:[#allocation6 + $0x4c0] sm:$0xff]
    %v1296 = vld [vmem:[#allocation6 + $0x4c8] sm:$0xff]
    %v1297 = vld [vmem:[#allocation6 + $0x4d0] sm:$0xff]
    %v1298 = vld [vmem:[#allocation6 + $0x4d8] sm:$0xff]
    %v1299 = vld [vmem:[#allocation6 + $0x4e0] sm:$0xff]
    %v1300 = vld [vmem:[#allocation6 + $0x4e8] sm:$0xff]
    %v1301 = vld [vmem:[#allocation6 + $0x4f0] sm:$0xff]
    %v1302 = vld [vmem:[#allocation6 + $0x4f8] sm:$0xff]
    %v1303 = vld [vmem:[#allocation6 + $0x500] sm:$0xff]
    %v1304 = vld [vmem:[#allocation6 + $0x508] sm:$0xff]
    %v1305 = vld [vmem:[#allocation6 + $0x510] sm:$0xff]
    %v1306 = vld [vmem:[#allocation6 + $0x518] sm:$0xff]
    %v1307 = vld [vmem:[#allocation6 + $0x520] sm:$0xff]
    %v1308 = vld [vmem:[#allocation6 + $0x528] sm:$0xff]
    %v1309 = vld [vmem:[#allocation6 + $0x530] sm:$0xff]
    %v1310 = vld [vmem:[#allocation6 + $0x538] sm:$0xff]
    %v1311 = vld [vmem:[#allocation6 + $0x540] sm:$0xff]
    %v1312 = vld [vmem:[#allocation6 + $0x548] sm:$0xff]
    %v1313 = vld [vmem:[#allocation6 + $0x550] sm:$0xff]
    %v1314 = vld [vmem:[#allocation6 + $0x558] sm:$0xff]
    %v1315 = vld [vmem:[#allocation6 + $0x560] sm:$0xff]
    %v1316 = vld [vmem:[#allocation6 + $0x568] sm:$0xff]
    %v1317 = vld [vmem:[#allocation6 + $0x570] sm:$0xff]
    %v1318 = vld [vmem:[#allocation6 + $0x578] sm:$0xff]
    %v1319 = vld [vmem:[#allocation6 + $0x580] sm:$0xff]
    %v1320 = vld [vmem:[#allocation6 + $0x588] sm:$0xff]
    %v1321 = vld [vmem:[#allocation6 + $0x590] sm:$0xff]
    %v1322 = vld [vmem:[#allocation6 + $0x598] sm:$0xff]
    %v1323 = vld [vmem:[#allocation6 + $0x5a0] sm:$0xff]
    %v1324 = vld [vmem:[#allocation6 + $0x5a8] sm:$0xff]
    %v1325 = vld [vmem:[#allocation6 + $0x5b0] sm:$0xff]
    %v1326 = vld [vmem:[#allocation6 + $0x5b8] sm:$0xff]
    %v1327 = vld [vmem:[#allocation6 + $0x5c0] sm:$0xff]
    %v1328 = vld [vmem:[#allocation6 + $0x5c8] sm:$0xff]
    %v1329 = vld [vmem:[#allocation6 + $0x5d0] sm:$0xff]
    %v1330 = vld [vmem:[#allocation6 + $0x5d8] sm:$0xff]
    %v1331 = vld [vmem:[#allocation6 + $0x5e0] sm:$0xff]
    %v1332 = vld [vmem:[#allocation6 + $0x5e8] sm:$0xff]
    %v1333 = vld [vmem:[#allocation6 + $0x5f0] sm:$0xff]
    %v1334 = vld [vmem:[#allocation6 + $0x5f8] sm:$0xff]
    %v1335 = vld [vmem:[#allocation7] sm:$0x7]
    %v1337 = vlaneseq
    %v1338 = vshrl.u32 %v1337, 7
    %v1339 = vsub.s32 0, %v1338
    %v1340 = vrot.slane %v1335, %v1339
    %v1341 = vlaneseq
    %v1342 = vshrl.u32 %v1341, 7
    %v1343 = vsub.s32 1, %v1342
    %v1344 = vrot.slane %v1335, %v1343
    %v1345 = vlaneseq
    %v1346 = vshrl.u32 %v1345, 7
    %v1347 = vsub.s32 2, %v1346
    %v1348 = vrot.slane %v1335, %v1347
    %1352 = vmatprep.subr.mxu0 %v1144
    %1353 = vmatpush1.msra.mxu0 %v1143
    %1354 = vmatprep.subr.mxu0 %v1147
    %1355 = vmatpush1.msra.mxu0 %v1146
    %1356 = vmatprep.subr.mxu0 %v1150
    %1357 = vmatpush1.msra.mxu0 %v1149
    %1358 = vmatprep.subr.mxu0 %v1153
    %1359 = vmatpush1.msra.mxu0 %v1152
    %1360 = vmatprep.subr.mxu0 %v1156
    %1361 = vmatpush1.msra.mxu0 %v1155
    %1362 = vmatprep.subr.mxu0 %v1159
    %1363 = vmatpush1.msra.mxu0 %v1158
    %1364 = vmatprep.subr.mxu0 %v1162
    %1365 = vmatpush1.msra.mxu0 %v1161
    %1366 = vmatprep.subr.mxu0 %v1165
    %1367 = vmatpush1.msra.mxu0 %v1164
    %1368 = vmatprep.subr.mxu0 %v1168
    %1369 = vmatpush1.msra.mxu0 %v1167
    %1370 = vmatprep.subr.mxu0 %v1171
    %1371 = vmatpush1.msra.mxu0 %v1170
    %1372 = vmatprep.subr.mxu0 %v1174
    %1373 = vmatpush1.msra.mxu0 %v1173
    %1374 = vmatprep.subr.mxu0 %v1177
    %1375 = vmatpush1.msra.mxu0 %v1176
    %1376 = vmatprep.subr.mxu0 %v1180
    %1377 = vmatpush1.msra.mxu0 %v1179
    %1378 = vmatprep.subr.mxu0 %v1183
    %1379 = vmatpush1.msra.mxu0 %v1182
    %1380 = vmatprep.subr.mxu0 %v1186
    %1381 = vmatpush1.msra.mxu0 %v1185
    %1382 = vmatprep.subr.mxu0 %v1189
    %1383 = vmatpush1.msra.mxu0 %v1188
    %1384 = vmatprep.subr.mxu0 %v1192
    %1385 = vmatpush1.msra.mxu0 %v1191
    %1386 = vmatprep.subr.mxu0 %v1195
    %1387 = vmatpush1.msra.mxu0 %v1194
    %1388 = vmatprep.subr.mxu0 %v1198
    %1389 = vmatpush1.msra.mxu0 %v1197
    %1390 = vmatprep.subr.mxu0 %v1201
    %1391 = vmatpush1.msra.mxu0 %v1200
    %1392 = vmatprep.subr.mxu0 %v1204
    %1393 = vmatpush1.msra.mxu0 %v1203
    %1394 = vmatprep.subr.mxu0 %v1207
    %1395 = vmatpush1.msra.mxu0 %v1206
    %1396 = vmatprep.subr.mxu0 %v1210
    %1397 = vmatpush1.msra.mxu0 %v1209
    %1398 = vmatprep.subr.mxu0 %v1213
    %1399 = vmatpush1.msra.mxu0 %v1212
    %1400 = vmatprep.subr.mxu0 %v1216
    %1401 = vmatpush1.msra.mxu0 %v1215
    %1402 = vmatprep.subr.mxu0 %v1219
    %1403 = vmatpush1.msra.mxu0 %v1218
    %1404 = vmatprep.subr.mxu0 %v1222
    %1405 = vmatpush1.msra.mxu0 %v1221
    %1406 = vmatprep.subr.mxu0 %v1225
    %1407 = vmatpush1.msra.mxu0 %v1224
    %1408 = vmatprep.subr.mxu0 %v1228
    %1409 = vmatpush1.msra.mxu0 %v1227
    %1410 = vmatprep.subr.mxu0 %v1231
    %1411 = vmatpush1.msra.mxu0 %v1230
    %1412 = vmatprep.subr.mxu0 %v1234
    %1413 = vmatpush1.msra.mxu0 %v1233
    %1414 = vmatprep.subr.mxu0 %v1237
    %1415 = vmatpush1.msra.mxu0 %v1236
    %1416 = vmatprep.mubr.f32.mxu0 %v1132
    %1417 = vmatmul.mubr.f32.gmra.mrb[0].mxu0 %v1131
    %v1418 = vpop.f32.mrb[0].mxu0
    %v1419 = vadd.f32 %v1340, %v1418
    %v1420 = vpop.f32.mrb[0].mxu0
    %v1421 = vadd.f32 %v1344, %v1420
    %1422 = vmatprep.mubr.f32.mxu0 %v1136
    %1423 = vmatmul.mubr.f32.gmra.mrb[0].mxu0 %v1135
    %v1424 = vpop.f32.mrb[0].mxu0
    %v1425 = vadd.f32 %v1340, %v1424
    %v1426 = vpop.f32.mrb[0].mxu0
    %v1427 = vadd.f32 %v1344, %v1426
    %1428 = vmatprep.mubr.f32.mxu0 %v1140
    %1429 = vmatmul.mubr.f32.gmra.mrb[0].mxu0 %v1139
    %v1430 = vpop.f32.mrb[0].mxu0
    %v1431 = vadd.f32 %v1340, %v1430
    %v1432 = vpop.f32.mrb[0].mxu0
    %v1433 = vadd.f32 %v1344, %v1432
    %1434 = vdwg.mxu0
    %1435 = vmatprep.subr.mxu0 %v1240
    %1436 = vmatpush1.msra.mxu0 %v1239
    %1437 = vmatprep.subr.mxu0 %v1243
    %1438 = vmatpush1.msra.mxu0 %v1242
    %1439 = vmatprep.subr.mxu0 %v1246
    %1440 = vmatpush1.msra.mxu0 %v1245
    %1441 = vmatprep.subr.mxu0 %v1249
    %1442 = vmatpush1.msra.mxu0 %v1248
    %1443 = vmatprep.subr.mxu0 %v1252
    %1444 = vmatpush1.msra.mxu0 %v1251
    %1445 = vmatprep.subr.mxu0 %v1255
    %1446 = vmatpush1.msra.mxu0 %v1254
    %1447 = vmatprep.subr.mxu0 %v1258
    %1448 = vmatpush1.msra.mxu0 %v1257
    %1449 = vmatprep.subr.mxu0 %v1261
    %1450 = vmatpush1.msra.mxu0 %v1260
    %1451 = vmatprep.subr.mxu0 %v1264
    %1452 = vmatpush1.msra.mxu0 %v1263
    %1453 = vmatprep.subr.mxu0 %v1267
    %1454 = vmatpush1.msra.mxu0 %v1266
    %1455 = vmatprep.subr.mxu0 %v1270
    %1456 = vmatpush1.msra.mxu0 %v1269
    %1457 = vmatprep.subr.mxu0 %v1273
    %1458 = vmatpush1.msra.mxu0 %v1272
    %1459 = vmatprep.subr.mxu0 %v1276
    %1460 = vmatpush1.msra.mxu0 %v1275
    %1461 = vmatprep.subr.mxu0 %v1279
    %1462 = vmatpush1.msra.mxu0 %v1278
    %1463 = vmatprep.subr.mxu0 %v1282
    %1464 = vmatpush1.msra.mxu0 %v1281
    %1465 = vmatprep.subr.mxu0 %v1285
    %1466 = vmatpush1.msra.mxu0 %v1284
    %1467 = vmatprep.subr.mxu0 %v1288
    %1468 = vmatpush1.msra.mxu0 %v1287
    %1469 = vmatprep.subr.mxu0 %v1291
    %1470 = vmatpush1.msra.mxu0 %v1290
    %1471 = vmatprep.subr.mxu0 %v1294
    %1472 = vmatpush1.msra.mxu0 %v1293
    %1473 = vmatprep.subr.mxu0 %v1297
    %1474 = vmatpush1.msra.mxu0 %v1296
    %1475 = vmatprep.subr.mxu0 %v1300
    %1476 = vmatpush1.msra.mxu0 %v1299
    %1477 = vmatprep.subr.mxu0 %v1303
    %1478 = vmatpush1.msra.mxu0 %v1302
    %1479 = vmatprep.subr.mxu0 %v1306
    %1480 = vmatpush1.msra.mxu0 %v1305
    %1481 = vmatprep.subr.mxu0 %v1309
    %1482 = vmatpush1.msra.mxu0 %v1308
    %1483 = vmatprep.subr.mxu0 %v1312
    %1484 = vmatpush1.msra.mxu0 %v1311
    %1485 = vmatprep.subr.mxu0 %v1315
    %1486 = vmatpush1.msra.mxu0 %v1314
    %1487 = vmatprep.subr.mxu0 %v1318
    %1488 = vmatpush1.msra.mxu0 %v1317
    %1489 = vmatprep.subr.mxu0 %v1321
    %1490 = vmatpush1.msra.mxu0 %v1320
    %1491 = vmatprep.subr.mxu0 %v1324
    %1492 = vmatpush1.msra.mxu0 %v1323
    %1493 = vmatprep.subr.mxu0 %v1327
    %1494 = vmatpush1.msra.mxu0 %v1326
    %1495 = vmatprep.subr.mxu0 %v1330
    %1496 = vmatpush1.msra.mxu0 %v1329
    %1497 = vmatprep.subr.mxu0 %v1333
    %1498 = vmatpush1.msra.mxu0 %v1332
    %1499 = vmatprep.mubr.f32.mxu0 %v1134
    %1500 = vmatmul.mubr.f32.gmra.mrb[0].mxu0 %v1133
    %v1501 = vpop.f32.mrb[0].mxu0
    %v1502 = vadd.f32 %v1419, %v1501
    %v1503 = vpop.f32.mrb[0].mxu0
    %v1504 = vadd.f32 %v1421, %v1503
    %1505 = vmatprep.mubr.f32.mxu0 %v1138
    %1506 = vmatmul.mubr.f32.gmra.mrb[0].mxu0 %v1137
    %v1507 = vpop.f32.mrb[0].mxu0
    %v1508 = vadd.f32 %v1425, %v1507
    %v1509 = vpop.f32.mrb[0].mxu0
    %v1510 = vadd.f32 %v1427, %v1509
    %1511 = vmatprep.mubr.f32.mxu0 %v1142
    %1512 = vmatmul.mubr.f32.gmra.mrb[0].mxu0 %v1141
    %v1513 = vpop.f32.mrb[0].mxu0
    %v1514 = vadd.f32 %v1431, %v1513
    %v1515 = vpop.f32.mrb[0].mxu0
    %v1516 = vadd.f32 %v1433, %v1515
    %1517 = vdwg.mxu0
    %1518 = vmatprep.subr.mxu0 0.0
    %1519 = vmatpush1.msra.mxu0 %v1145
    %1520 = vmatprep.subr.mxu0 0.0
    %1521 = vmatpush1.msra.mxu0 %v1148
    %1522 = vmatprep.subr.mxu0 0.0
    %1523 = vmatpush1.msra.mxu0 %v1151
    %1524 = vmatprep.subr.mxu0 0.0
    %1525 = vmatpush1.msra.mxu0 %v1154
    %1526 = vmatprep.subr.mxu0 0.0
    %1527 = vmatpush1.msra.mxu0 %v1157
    %1528 = vmatprep.subr.mxu0 0.0
    %1529 = vmatpush1.msra.mxu0 %v1160
    %1530 = vmatprep.subr.mxu0 0.0
    %1531 = vmatpush1.msra.mxu0 %v1163
    %1532 = vmatprep.subr.mxu0 0.0
    %1533 = vmatpush1.msra.mxu0 %v1166
    %1534 = vmatprep.subr.mxu0 0.0
    %1535 = vmatpush1.msra.mxu0 %v1169
    %1536 = vmatprep.subr.mxu0 0.0
    %1537 = vmatpush1.msra.mxu0 %v1172
    %1538 = vmatprep.subr.mxu0 0.0
    %1539 = vmatpush1.msra.mxu0 %v1175
    %1540 = vmatprep.subr.mxu0 0.0
    %1541 = vmatpush1.msra.mxu0 %v1178
    %1542 = vmatprep.subr.mxu0 0.0
    %1543 = vmatpush1.msra.mxu0 %v1181
    %1544 = vmatprep.subr.mxu0 0.0
    %1545 = vmatpush1.msra.mxu0 %v1184
    %1546 = vmatprep.subr.mxu0 0.0
    %1547 = vmatpush1.msra.mxu0 %v1187
    %1548 = vmatprep.subr.mxu0 0.0
    %1549 = vmatpush1.msra.mxu0 %v1190
    %1550 = vmatprep.subr.mxu0 0.0
    %1551 = vmatpush1.msra.mxu0 %v1193
    %1552 = vmatprep.subr.mxu0 0.0
    %1553 = vmatpush1.msra.mxu0 %v1196
    %1554 = vmatprep.subr.mxu0 0.0
    %1555 = vmatpush1.msra.mxu0 %v1199
    %1556 = vmatprep.subr.mxu0 0.0
    %1557 = vmatpush1.msra.mxu0 %v1202
    %1558 = vmatprep.subr.mxu0 0.0
    %1559 = vmatpush1.msra.mxu0 %v1205
    %1560 = vmatprep.subr.mxu0 0.0
    %1561 = vmatpush1.msra.mxu0 %v1208
    %1562 = vmatprep.subr.mxu0 0.0
    %1563 = vmatpush1.msra.mxu0 %v1211
    %1564 = vmatprep.subr.mxu0 0.0
    %1565 = vmatpush1.msra.mxu0 %v1214
    %1566 = vmatprep.subr.mxu0 0.0
    %1567 = vmatpush1.msra.mxu0 %v1217
    %1568 = vmatprep.subr.mxu0 0.0
    %1569 = vmatpush1.msra.mxu0 %v1220
    %1570 = vmatprep.subr.mxu0 0.0
    %1571 = vmatpush1.msra.mxu0 %v1223
    %1572 = vmatprep.subr.mxu0 0.0
    %1573 = vmatpush1.msra.mxu0 %v1226
    %1574 = vmatprep.subr.mxu0 0.0
    %1575 = vmatpush1.msra.mxu0 %v1229
    %1576 = vmatprep.subr.mxu0 0.0
    %1577 = vmatpush1.msra.mxu0 %v1232
    %1578 = vmatprep.subr.mxu0 0.0
    %1579 = vmatpush1.msra.mxu0 %v1235
    %1580 = vmatprep.subr.mxu0 0.0
    %1581 = vmatpush1.msra.mxu0 %v1238
    %1582 = vmatprep.mubr.f32.mxu0 %v1132
    %1583 = vmatmul.mubr.f32.gmra.mrb[0].mxu0 %v1131
    %v1584 = vpop.f32.mrb[0].mxu0
    %v1585 = vadd.f32 %v1348, %v1584
    %v1586 = vpop.f32.mrb[0].mxu0
    %1587 = vmatprep.mubr.f32.mxu0 %v1136
    %1588 = vmatmul.mubr.f32.gmra.mrb[0].mxu0 %v1135
    %v1589 = vpop.f32.mrb[0].mxu0
    %v1590 = vadd.f32 %v1348, %v1589
    %v1591 = vpop.f32.mrb[0].mxu0
    %1592 = vmatprep.mubr.f32.mxu0 %v1140
    %1593 = vmatmul.mubr.f32.gmra.mrb[0].mxu0 %v1139
    %v1594 = vpop.f32.mrb[0].mxu0
    %v1595 = vadd.f32 %v1348, %v1594
    %v1596 = vpop.f32.mrb[0].mxu0
    %1597 = vdwg.mxu0
    %1598 = vmatprep.subr.mxu0 0.0
    %1599 = vmatpush1.msra.mxu0 %v1241
    %1600 = vmatprep.subr.mxu0 0.0
    %1601 = vmatpush1.msra.mxu0 %v1244
    %1602 = vmatprep.subr.mxu0 0.0
    %1603 = vmatpush1.msra.mxu0 %v1247
    %1604 = vmatprep.subr.mxu0 0.0
    %1605 = vmatpush1.msra.mxu0 %v1250
    %1606 = vmatprep.subr.mxu0 0.0
    %1607 = vmatpush1.msra.mxu0 %v1253
    %1608 = vmatprep.subr.mxu0 0.0
    %1609 = vmatpush1.msra.mxu0 %v1256
    %1610 = vmatprep.subr.mxu0 0.0
    %1611 = vmatpush1.msra.mxu0 %v1259
    %1612 = vmatprep.subr.mxu0 0.0
    %1613 = vmatpush1.msra.mxu0 %v1262
    %1614 = vmatprep.subr.mxu0 0.0
    %1615 = vmatpush1.msra.mxu0 %v1265
    %1616 = vmatprep.subr.mxu0 0.0
    %1617 = vmatpush1.msra.mxu0 %v1268
    %1618 = vmatprep.subr.mxu0 0.0
    %1619 = vmatpush1.msra.mxu0 %v1271
    %1620 = vmatprep.subr.mxu0 0.0
    %1621 = vmatpush1.msra.mxu0 %v1274
    %1622 = vmatprep.subr.mxu0 0.0
    %1623 = vmatpush1.msra.mxu0 %v1277
    %1624 = vmatprep.subr.mxu0 0.0
    %1625 = vmatpush1.msra.mxu0 %v1280
    %1626 = vmatprep.subr.mxu0 0.0
    %1627 = vmatpush1.msra.mxu0 %v1283
    %1628 = vmatprep.subr.mxu0 0.0
    %1629 = vmatpush1.msra.mxu0 %v1286
    %1630 = vmatprep.subr.mxu0 0.0
    %1631 = vmatpush1.msra.mxu0 %v1289
    %1632 = vmatprep.subr.mxu0 0.0
    %1633 = vmatpush1.msra.mxu0 %v1292
    %1634 = vmatprep.subr.mxu0 0.0
    %1635 = vmatpush1.msra.mxu0 %v1295
    %1636 = vmatprep.subr.mxu0 0.0
    %1637 = vmatpush1.msra.mxu0 %v1298
    %1638 = vmatprep.subr.mxu0 0.0
    %1639 = vmatpush1.msra.mxu0 %v1301
    %1640 = vmatprep.subr.mxu0 0.0
    %1641 = vmatpush1.msra.mxu0 %v1304
    %1642 = vmatprep.subr.mxu0 0.0
    %1643 = vmatpush1.msra.mxu0 %v1307
    %1644 = vmatprep.subr.mxu0 0.0
    %1645 = vmatpush1.msra.mxu0 %v1310
    %1646 = vmatprep.subr.mxu0 0.0
    %1647 = vmatpush1.msra.mxu0 %v1313
    %1648 = vmatprep.subr.mxu0 0.0
    %1649 = vmatpush1.msra.mxu0 %v1316
    %1650 = vmatprep.subr.mxu0 0.0
    %1651 = vmatpush1.msra.mxu0 %v1319
    %1652 = vmatprep.subr.mxu0 0.0
    %1653 = vmatpush1.msra.mxu0 %v1322
    %1654 = vmatprep.subr.mxu0 0.0
    %1655 = vmatpush1.msra.mxu0 %v1325
    %1656 = vmatprep.subr.mxu0 0.0
    %1657 = vmatpush1.msra.mxu0 %v1328
    %1658 = vmatprep.subr.mxu0 0.0
    %1659 = vmatpush1.msra.mxu0 %v1331
    %1660 = vmatprep.subr.mxu0 0.0
    %1661 = vmatpush1.msra.mxu0 %v1334
    %1662 = vmatprep.mubr.f32.mxu0 %v1134
    %1663 = vmatmul.mubr.f32.gmra.mrb[0].mxu0 %v1133
    %v1664 = vpop.f32.mrb[0].mxu0
    %v1665 = vadd.f32 %v1585, %v1664
    %v1666 = vpop.f32.mrb[0].mxu0
    %1667 = vmatprep.mubr.f32.mxu0 %v1138
    %1668 = vmatmul.mubr.f32.gmra.mrb[0].mxu0 %v1137
    %v1669 = vpop.f32.mrb[0].mxu0
    %v1670 = vadd.f32 %v1590, %v1669
    %v1671 = vpop.f32.mrb[0].mxu0
    %1672 = vmatprep.mubr.f32.mxu0 %v1142
    %1673 = vmatmul.mubr.f32.gmra.mrb[0].mxu0 %v1141
    %v1674 = vpop.f32.mrb[0].mxu0
    %v1675 = vadd.f32 %v1595, %v1674
    %v1676 = vpop.f32.mrb[0].mxu0
    %1677 = vdwg.mxu0
    %v1678 = vld [vmem:[#allocation9] sm:$0xff]
    %v1679 = vld [vmem:[#allocation9 + $0x8] sm:$0xff]
    %v1680 = vld [vmem:[#allocation9 + $0x10] sm:$0xff]
    %v1681 = vld [vmem:[#allocation9 + $0x18] sm:$0xff]
    %v1682 = vld [vmem:[#allocation9 + $0x20] sm:$0xff]
    %v1683 = vld [vmem:[#allocation9 + $0x28] sm:$0xff]
    %v1684 = vld [vmem:[#allocation9 + $0x30] sm:$0xff]
    %v1685 = vld [vmem:[#allocation9 + $0x38] sm:$0xff]
    %v1686 = vld [vmem:[#allocation9 + $0x40] sm:$0xff]
    %v1687 = vld [vmem:[#allocation9 + $0x48] sm:$0xff]
    %v1688 = vld [vmem:[#allocation9 + $0x50] sm:$0xff]
    %v1689 = vld [vmem:[#allocation9 + $0x58] sm:$0xff]
    %v1690 = vld [vmem:[#allocation9 + $0x60] sm:$0xff]
    %v1691 = vld [vmem:[#allocation9 + $0x68] sm:$0xff]
    %v1692 = vld [vmem:[#allocation9 + $0x70] sm:$0xff]
    %v1693 = vld [vmem:[#allocation9 + $0x78] sm:$0xff]
    %v1694 = vld [vmem:[#allocation9 + $0x80] sm:$0xff]
    %v1695 = vld [vmem:[#allocation9 + $0x88] sm:$0xff]
    %v1696 = vld [vmem:[#allocation9 + $0x90] sm:$0xff]
    %v1697 = vld [vmem:[#allocation9 + $0x98] sm:$0xff]
    %v1698 = vld [vmem:[#allocation9 + $0xa0] sm:$0xff]
    %v1699 = vld [vmem:[#allocation9 + $0xa8] sm:$0xff]
    %v1700 = vld [vmem:[#allocation9 + $0xb0] sm:$0xff]
    %v1701 = vld [vmem:[#allocation9 + $0xb8] sm:$0xff]
    %v1702 = vld [vmem:[#allocation9 + $0xc0] sm:$0xff]
    %v1703 = vld [vmem:[#allocation9 + $0xc8] sm:$0xff]
    %v1704 = vld [vmem:[#allocation9 + $0xd0] sm:$0xff]
    %v1705 = vld [vmem:[#allocation9 + $0xd8] sm:$0xff]
    %v1706 = vld [vmem:[#allocation9 + $0xe0] sm:$0xff]
    %v1707 = vld [vmem:[#allocation9 + $0xe8] sm:$0xff]
    %v1708 = vld [vmem:[#allocation9 + $0xf0] sm:$0xff]
    %v1709 = vld [vmem:[#allocation9 + $0xf8] sm:$0xff]
    %v1710 = vld [vmem:[#allocation9 + $0x100] sm:$0xff]
    %v1711 = vld [vmem:[#allocation9 + $0x108] sm:$0xff]
    %v1712 = vld [vmem:[#allocation9 + $0x110] sm:$0xff]
    %v1713 = vld [vmem:[#allocation9 + $0x118] sm:$0xff]
    %v1714 = vld [vmem:[#allocation9 + $0x120] sm:$0xff]
    %v1715 = vld [vmem:[#allocation9 + $0x128] sm:$0xff]
    %v1716 = vld [vmem:[#allocation9 + $0x130] sm:$0xff]
    %v1717 = vld [vmem:[#allocation9 + $0x138] sm:$0xff]
    %v1718 = vld [vmem:[#allocation9 + $0x140] sm:$0xff]
    %v1719 = vld [vmem:[#allocation9 + $0x148] sm:$0xff]
    %v1720 = vld [vmem:[#allocation9 + $0x150] sm:$0xff]
    %v1721 = vld [vmem:[#allocation9 + $0x158] sm:$0xff]
    %v1722 = vld [vmem:[#allocation9 + $0x160] sm:$0xff]
    %v1723 = vld [vmem:[#allocation9 + $0x168] sm:$0xff]
    %v1724 = vld [vmem:[#allocation9 + $0x170] sm:$0xff]
    %v1725 = vld [vmem:[#allocation9 + $0x178] sm:$0xff]
    %v1726 = vld [vmem:[#allocation10] sm:$0x7]
    %v1728 = vlaneseq
    %v1729 = vshrl.u32 %v1728, 7
    %v1730 = vsub.s32 0, %v1729
    %v1731 = vrot.slane %v1726, %v1730
    %v1732 = vlaneseq
    %v1733 = vshrl.u32 %v1732, 7
    %v1734 = vsub.s32 1, %v1733
    %v1735 = vrot.slane %v1726, %v1734
    %v1736 = vlaneseq
    %v1737 = vshrl.u32 %v1736, 7
    %v1738 = vsub.s32 2, %v1737
    %v1739 = vrot.slane %v1726, %v1738
    %v1746 = vrot.slane %v1508, 3
    %v1747 = vrot.slane %v1510, 3
    %v1748 = vrot.slane %v1670, 3
    %vm1752 = vcmask 1040384
    %v1753 = vsel %vm1752, %v1502, %v1746
    %v1754 = vsel %vm1752, %v1504, %v1747
    %v1755 = vsel %vm1752, %v1665, %v1748
    %1756 = vmatprep.subr.mxu0 %v1679
    %1757 = vmatpush1.msra.mxu0 %v1678
    %1758 = vmatprep.subr.mxu0 %v1682
    %1759 = vmatpush1.msra.mxu0 %v1681
    %1760 = vmatprep.subr.mxu0 %v1685
    %1761 = vmatpush1.msra.mxu0 %v1684
    %1762 = vmatprep.subr.mxu0 %v1688
    %1763 = vmatpush1.msra.mxu0 %v1687
    %1764 = vmatprep.subr.mxu0 %v1691
    %1765 = vmatpush1.msra.mxu0 %v1690
    %1766 = vmatprep.subr.mxu0 %v1694
    %1767 = vmatpush1.msra.mxu0 %v1693
    %1768 = vmatprep.subr.mxu0 %v1697
    %1769 = vmatpush1.msra.mxu0 %v1696
    %1770 = vmatprep.subr.mxu0 %v1700
    %1771 = vmatpush1.msra.mxu0 %v1699
    %1772 = vmatprep.subr.mxu0 %v1703
    %1773 = vmatpush1.msra.mxu0 %v1702
    %1774 = vmatprep.subr.mxu0 %v1706
    %1775 = vmatpush1.msra.mxu0 %v1705
    %1776 = vmatprep.subr.mxu0 %v1709
    %1777 = vmatpush1.msra.mxu0 %v1708
    %1778 = vmatprep.subr.mxu0 %v1712
    %1779 = vmatpush1.msra.mxu0 %v1711
    %1780 = vmatprep.subr.mxu0 %v1715
    %1781 = vmatpush1.msra.mxu0 %v1714
    %1782 = vmatprep.subr.mxu0 %v1718
    %1783 = vmatpush1.msra.mxu0 %v1717
    %1784 = vmatprep.subr.mxu0 %v1721
    %1785 = vmatpush1.msra.mxu0 %v1720
    %1786 = vmatprep.subr.mxu0 %v1724
    %1787 = vmatpush1.msra.mxu0 %v1723
    %1788 = vmatprep.subr.mxu0 0.0
    %1789 = vmatpush1.msra.mxu0 0.0
    %1790 = vmatprep.subr.mxu0 0.0
    %1791 = vmatpush1.msra.mxu0 0.0
    %1792 = vmatprep.subr.mxu0 0.0
    %1793 = vmatpush1.msra.mxu0 0.0
    %1794 = vmatprep.subr.mxu0 0.0
    %1795 = vmatpush1.msra.mxu0 0.0
    %1796 = vmatprep.subr.mxu0 0.0
    %1797 = vmatpush1.msra.mxu0 0.0
    %1798 = vmatprep.subr.mxu0 0.0
    %1799 = vmatpush1.msra.mxu0 0.0
    %1800 = vmatprep.subr.mxu0 0.0
    %1801 = vmatpush1.msra.mxu0 0.0
    %1802 = vmatprep.subr.mxu0 0.0
    %1803 = vmatpush1.msra.mxu0 0.0
    %1804 = vmatprep.subr.mxu0 0.0
    %1805 = vmatpush1.msra.mxu0 0.0
    %1806 = vmatprep.subr.mxu0 0.0
    %1807 = vmatpush1.msra.mxu0 0.0
    %1808 = vmatprep.subr.mxu0 0.0
    %1809 = vmatpush1.msra.mxu0 0.0
    %1810 = vmatprep.subr.mxu0 0.0
    %1811 = vmatpush1.msra.mxu0 0.0
    %1812 = vmatprep.subr.mxu0 0.0
    %1813 = vmatpush1.msra.mxu0 0.0
    %1814 = vmatprep.subr.mxu0 0.0
    %1815 = vmatpush1.msra.mxu0 0.0
    %1816 = vmatprep.subr.mxu0 0.0
    %1817 = vmatpush1.msra.mxu0 0.0
    %1818 = vmatprep.subr.mxu0 0.0
    %1819 = vmatpush1.msra.mxu0 0.0
    %1820 = vmatprep.mubr.f32.mxu0 0.0
    %1821 = vmatmul.mubr.f32.gmra.mrb[0].mxu0 0.0
    %v1822 = vpop.f32.mrb[0].mxu0
    %v1823 = vadd.f32 %v1731, %v1822
    %v1824 = vpop.f32.mrb[0].mxu0
    %v1825 = vadd.f32 %v1735, %v1824
    %1826 = vdwg.mxu0
    %1827 = vmatprep.subr.mxu0 0.0
    %1828 = vmatpush1.msra.mxu0 %v1680
    %1829 = vmatprep.subr.mxu0 0.0
    %1830 = vmatpush1.msra.mxu0 %v1683
    %1831 = vmatprep.subr.mxu0 0.0
    %1832 = vmatpush1.msra.mxu0 %v1686
    %1833 = vmatprep.subr.mxu0 0.0
    %1834 = vmatpush1.msra.mxu0 %v1689
    %1835 = vmatprep.subr.mxu0 0.0
    %1836 = vmatpush1.msra.mxu0 %v1692
    %1837 = vmatprep.subr.mxu0 0.0
    %1838 = vmatpush1.msra.mxu0 %v1695
    %1839 = vmatprep.subr.mxu0 0.0
    %1840 = vmatpush1.msra.mxu0 %v1698
    %1841 = vmatprep.subr.mxu0 0.0
    %1842 = vmatpush1.msra.mxu0 %v1701
    %1843 = vmatprep.subr.mxu0 0.0
    %1844 = vmatpush1.msra.mxu0 %v1704
    %1845 = vmatprep.subr.mxu0 0.0
    %1846 = vmatpush1.msra.mxu0 %v1707
    %1847 = vmatprep.subr.mxu0 0.0
    %1848 = vmatpush1.msra.mxu0 %v1710
    %1849 = vmatprep.subr.mxu0 0.0
    %1850 = vmatpush1.msra.mxu0 %v1713
    %1851 = vmatprep.subr.mxu0 0.0
    %1852 = vmatpush1.msra.mxu0 %v1716
    %1853 = vmatprep.subr.mxu0 0.0
    %1854 = vmatpush1.msra.mxu0 %v1719
    %1855 = vmatprep.subr.mxu0 0.0
    %1856 = vmatpush1.msra.mxu0 %v1722
    %1857 = vmatprep.subr.mxu0 0.0
    %1858 = vmatpush1.msra.mxu0 %v1725
    %1859 = vmatprep.subr.mxu0 0.0
    %1860 = vmatpush1.msra.mxu0 0.0
    %1861 = vmatprep.subr.mxu0 0.0
    %1862 = vmatpush1.msra.mxu0 0.0
    %1863 = vmatprep.subr.mxu0 0.0
    %1864 = vmatpush1.msra.mxu0 0.0
    %1865 = vmatprep.subr.mxu0 0.0
    %1866 = vmatpush1.msra.mxu0 0.0
    %1867 = vmatprep.subr.mxu0 0.0
    %1868 = vmatpush1.msra.mxu0 0.0
    %1869 = vmatprep.subr.mxu0 0.0
    %1870 = vmatpush1.msra.mxu0 0.0
    %1871 = vmatprep.subr.mxu0 0.0
    %1872 = vmatpush1.msra.mxu0 0.0
    %1873 = vmatprep.subr.mxu0 0.0
    %1874 = vmatpush1.msra.mxu0 0.0
    %1875 = vmatprep.subr.mxu0 0.0
    %1876 = vmatpush1.msra.mxu0 0.0
    %1877 = vmatprep.subr.mxu0 0.0
    %1878 = vmatpush1.msra.mxu0 0.0
    %1879 = vmatprep.subr.mxu0 0.0
    %1880 = vmatpush1.msra.mxu0 0.0
    %1881 = vmatprep.subr.mxu0 0.0
    %1882 = vmatpush1.msra.mxu0 0.0
    %1883 = vmatprep.subr.mxu0 0.0
    %1884 = vmatpush1.msra.mxu0 0.0
    %1885 = vmatprep.subr.mxu0 0.0
    %1886 = vmatpush1.msra.mxu0 0.0
    %1887 = vmatprep.subr.mxu0 0.0
    %1888 = vmatpush1.msra.mxu0 0.0
    %1889 = vmatprep.subr.mxu0 0.0
    %1890 = vmatpush1.msra.mxu0 0.0
    %1891 = vmatprep.mubr.f32.mxu0 0.0
    %1892 = vmatmul.mubr.f32.gmra.mrb[0].mxu0 0.0
    %v1893 = vpop.f32.mrb[0].mxu0
    %v1894 = vadd.f32 %v1739, %v1893
    %v1895 = vpop.f32.mrb[0].mxu0
    %1896 = vdwg.mxu0
    %v1897 = vadd.f32 %v1753, %v1823
    %v1898 = vxor.u32 %v1897, 2147483648
    %v1899 = vmul.f32 %v1898, 1.442695
    %v1900 = vpow.pop %v1899
    %v1901 = vadd.f32 %v1900, 1.0
    %v1902 = vrcp.pop %v1901
    %v1903 = vmul.f32 1.0, %v1902
    %v1904 = vadd.f32 %v1754, %v1825
    %v1905 = vxor.u32 %v1904, 2147483648
    %v1906 = vmul.f32 %v1905, 1.442695
    %v1907 = vpow.pop %v1906
    %v1908 = vadd.f32 %v1907, 1.0
    %v1909 = vrcp.pop %v1908
    %v1910 = vmul.f32 1.0, %v1909
    %v1911 = vmul.f32 %v1903, %v1894
    %v1912 = vadd.f32 %v1755, %v1911
    %v1913 = vtanh.pop %v1912
    %v1914 = vsub.f32 1.0, %v1910
    %v1915 = vmul.f32 %v1914, %v1913
    %v1916 = vmul.f32 %v1910, 0.0
    %v1917 = vadd.f32 %v1915, %v1916
    %v1921 = vrot.slane %v1502, 2
    %v1922 = vrot.slane %v1504, 2
    %v1923 = vrot.slane %v1665, 2
    %v1927 = vrot.slane %v1508, 5
    %v1928 = vrot.slane %v1510, 5
    %v1929 = vrot.slane %v1670, 5
    %v1933 = vsel %vm1752, %v1921, %v1927
    %v1934 = vsel %vm1752, %v1922, %v1928
    %v1935 = vsel %vm1752, %v1923, %v1929
    %1936 = vmatprep.subr.mxu0 %v1679
    %1937 = vmatpush1.msra.mxu0 %v1678
    %1938 = vmatprep.subr.mxu0 %v1682
    %1939 = vmatpush1.msra.mxu0 %v1681
    %1940 = vmatprep.subr.mxu0 %v1685
    %1941 = vmatpush1.msra.mxu0 %v1684
    %1942 = vmatprep.subr.mxu0 %v1688
    %1943 = vmatpush1.msra.mxu0 %v1687
    %1944 = vmatprep.subr.mxu0 %v1691
    %1945 = vmatpush1.msra.mxu0 %v1690
    %1946 = vmatprep.subr.mxu0 %v1694
    %1947 = vmatpush1.msra.mxu0 %v1693
    %1948 = vmatprep.subr.mxu0 %v1697
    %1949 = vmatpush1.msra.mxu0 %v1696
    %1950 = vmatprep.subr.mxu0 %v1700
    %1951 = vmatpush1.msra.mxu0 %v1699
    %1952 = vmatprep.subr.mxu0 %v1703
    %1953 = vmatpush1.msra.mxu0 %v1702
    %1954 = vmatprep.subr.mxu0 %v1706
    %1955 = vmatpush1.msra.mxu0 %v1705
    %1956 = vmatprep.subr.mxu0 %v1709
    %1957 = vmatpush1.msra.mxu0 %v1708
    %1958 = vmatprep.subr.mxu0 %v1712
    %1959 = vmatpush1.msra.mxu0 %v1711
    %1960 = vmatprep.subr.mxu0 %v1715
    %1961 = vmatpush1.msra.mxu0 %v1714
    %1962 = vmatprep.subr.mxu0 %v1718
    %1963 = vmatpush1.msra.mxu0 %v1717
    %1964 = vmatprep.subr.mxu0 %v1721
    %1965 = vmatpush1.msra.mxu0 %v1720
    %1966 = vmatprep.subr.mxu0 %v1724
    %1967 = vmatpush1.msra.mxu0 %v1723
    %1968 = vmatprep.subr.mxu0 0.0
    %1969 = vmatpush1.msra.mxu0 0.0
    %1970 = vmatprep.subr.mxu0 0.0
    %1971 = vmatpush1.msra.mxu0 0.0
    %1972 = vmatprep.subr.mxu0 0.0
    %1973 = vmatpush1.msra.mxu0 0.0
    %1974 = vmatprep.subr.mxu0 0.0
    %1975 = vmatpush1.msra.mxu0 0.0
    %1976 = vmatprep.subr.mxu0 0.0
    %1977 = vmatpush1.msra.mxu0 0.0
    %1978 = vmatprep.subr.mxu0 0.0
    %1979 = vmatpush1.msra.mxu0 0.0
    %1980 = vmatprep.subr.mxu0 0.0
    %1981 = vmatpush1.msra.mxu0 0.0
    %1982 = vmatprep.subr.mxu0 0.0
    %1983 = vmatpush1.msra.mxu0 0.0
    %1984 = vmatprep.subr.mxu0 0.0
    %1985 = vmatpush1.msra.mxu0 0.0
    %1986 = vmatprep.subr.mxu0 0.0
    %1987 = vmatpush1.msra.mxu0 0.0
    %1988 = vmatprep.subr.mxu0 0.0
    %1989 = vmatpush1.msra.mxu0 0.0
    %1990 = vmatprep.subr.mxu0 0.0
    %1991 = vmatpush1.msra.mxu0 0.0
    %1992 = vmatprep.subr.mxu0 0.0
    %1993 = vmatpush1.msra.mxu0 0.0
    %1994 = vmatprep.subr.mxu0 0.0
    %1995 = vmatpush1.msra.mxu0 0.0
    %1996 = vmatprep.subr.mxu0 0.0
    %1997 = vmatpush1.msra.mxu0 0.0
    %1998 = vmatprep.subr.mxu0 0.0
    %1999 = vmatpush1.msra.mxu0 0.0
    %2000 = vmatprep.mubr.f32.mxu0 0.0
    %2001 = vmatmul.mubr.f32.gmra.mrb[0].mxu0 %v1917
    %v2002 = vpop.f32.mrb[0].mxu0
    %v2003 = vadd.f32 %v1731, %v2002
    %v2004 = vpop.f32.mrb[0].mxu0
    %v2005 = vadd.f32 %v1735, %v2004
    %2006 = vdwg.mxu0
    %2007 = vmatprep.subr.mxu0 0.0
    %2008 = vmatpush1.msra.mxu0 %v1680
    %2009 = vmatprep.subr.mxu0 0.0
    %2010 = vmatpush1.msra.mxu0 %v1683
    %2011 = vmatprep.subr.mxu0 0.0
    %2012 = vmatpush1.msra.mxu0 %v1686
    %2013 = vmatprep.subr.mxu0 0.0
    %2014 = vmatpush1.msra.mxu0 %v1689
    %2015 = vmatprep.subr.mxu0 0.0
    %2016 = vmatpush1.msra.mxu0 %v1692
    %2017 = vmatprep.subr.mxu0 0.0
    %2018 = vmatpush1.msra.mxu0 %v1695
    %2019 = vmatprep.subr.mxu0 0.0
    %2020 = vmatpush1.msra.mxu0 %v1698
    %2021 = vmatprep.subr.mxu0 0.0
    %2022 = vmatpush1.msra.mxu0 %v1701
    %2023 = vmatprep.subr.mxu0 0.0
    %2024 = vmatpush1.msra.mxu0 %v1704
    %2025 = vmatprep.subr.mxu0 0.0
    %2026 = vmatpush1.msra.mxu0 %v1707
    %2027 = vmatprep.subr.mxu0 0.0
    %2028 = vmatpush1.msra.mxu0 %v1710
    %2029 = vmatprep.subr.mxu0 0.0
    %2030 = vmatpush1.msra.mxu0 %v1713
    %2031 = vmatprep.subr.mxu0 0.0
    %2032 = vmatpush1.msra.mxu0 %v1716
    %2033 = vmatprep.subr.mxu0 0.0
    %2034 = vmatpush1.msra.mxu0 %v1719
    %2035 = vmatprep.subr.mxu0 0.0
    %2036 = vmatpush1.msra.mxu0 %v1722
    %2037 = vmatprep.subr.mxu0 0.0
    %2038 = vmatpush1.msra.mxu0 %v1725
    %2039 = vmatprep.subr.mxu0 0.0
    %2040 = vmatpush1.msra.mxu0 0.0
    %2041 = vmatprep.subr.mxu0 0.0
    %2042 = vmatpush1.msra.mxu0 0.0
    %2043 = vmatprep.subr.mxu0 0.0
    %2044 = vmatpush1.msra.mxu0 0.0
    %2045 = vmatprep.subr.mxu0 0.0
    %2046 = vmatpush1.msra.mxu0 0.0
    %2047 = vmatprep.subr.mxu0 0.0
    %2048 = vmatpush1.msra.mxu0 0.0
    %2049 = vmatprep.subr.mxu0 0.0
    %2050 = vmatpush1.msra.mxu0 0.0
    %2051 = vmatprep.subr.mxu0 0.0
    %2052 = vmatpush1.msra.mxu0 0.0
    %2053 = vmatprep.subr.mxu0 0.0
    %2054 = vmatpush1.msra.mxu0 0.0
    %2055 = vmatprep.subr.mxu0 0.0
    %2056 = vmatpush1.msra.mxu0 0.0
    %2057 = vmatprep.subr.mxu0 0.0
    %2058 = vmatpush1.msra.mxu0 0.0
    %2059 = vmatprep.subr.mxu0 0.0
    %2060 = vmatpush1.msra.mxu0 0.0
    %2061 = vmatprep.subr.mxu0 0.0
    %2062 = vmatpush1.msra.mxu0 0.0
    %2063 = vmatprep.subr.mxu0 0.0
    %2064 = vmatpush1.msra.mxu0 0.0
    %2065 = vmatprep.subr.mxu0 0.0
    %2066 = vmatpush1.msra.mxu0 0.0
    %2067 = vmatprep.subr.mxu0 0.0
    %2068 = vmatpush1.msra.mxu0 0.0
    %2069 = vmatprep.subr.mxu0 0.0
    %2070 = vmatpush1.msra.mxu0 0.0
    %2071 = vmatprep.mubr.f32.mxu0 0.0
    %2072 = vmatmul.mubr.f32.gmra.mrb[0].mxu0 %v1917
    %v2073 = vpop.f32.mrb[0].mxu0
    %v2074 = vadd.f32 %v1739, %v2073
    %v2075 = vpop.f32.mrb[0].mxu0
    %2076 = vdwg.mxu0
    %v2077 = vadd.f32 %v1933, %v2003
    %v2078 = vxor.u32 %v2077, 2147483648
    %v2079 = vmul.f32 %v2078, 1.442695
    %v2080 = vpow.pop %v2079
    %v2081 = vadd.f32 %v2080, 1.0
    %v2082 = vrcp.pop %v2081
    %v2083 = vmul.f32 1.0, %v2082
    %v2084 = vadd.f32 %v1934, %v2005
    %v2085 = vxor.u32 %v2084, 2147483648
    %v2086 = vmul.f32 %v2085, 1.442695
    %v2087 = vpow.pop %v2086
    %v2088 = vadd.f32 %v2087, 1.0
    %v2089 = vrcp.pop %v2088
    %v2090 = vmul.f32 1.0, %v2089
    %v2091 = vmul.f32 %v2083, %v2074
    %v2092 = vadd.f32 %v1935, %v2091
    %v2093 = vtanh.pop %v2092
    %v2094 = vsub.f32 1.0, %v2090
    %v2095 = vmul.f32 %v2094, %v2093
    %v2096 = vmul.f32 %v2090, %v1917
    %v2097 = vadd.f32 %v2095, %v2096
    %v2098 = vrot.slane %v1502, 4
    %v2099 = vrot.slane %v1504, 4
    %v2100 = vrot.slane %v1665, 4
    %v2107 = vrot.slane %v1514, 7
    %v2108 = vrot.slane %v1516, 7
    %v2109 = vrot.slane %v1675, 7
    %v2113 = vsel %vm1752, %v2098, %v2107
    %v2114 = vsel %vm1752, %v2099, %v2108
    %v2115 = vsel %vm1752, %v2100, %v2109
    %2116 = vmatprep.subr.mxu0 %v1679
    %2117 = vmatpush1.msra.mxu0 %v1678
    %2118 = vmatprep.subr.mxu0 %v1682
    %2119 = vmatpush1.msra.mxu0 %v1681
    %2120 = vmatprep.subr.mxu0 %v1685
    %2121 = vmatpush1.msra.mxu0 %v1684
    %2122 = vmatprep.subr.mxu0 %v1688
    %2123 = vmatpush1.msra.mxu0 %v1687
    %2124 = vmatprep.subr.mxu0 %v1691
    %2125 = vmatpush1.msra.mxu0 %v1690
    %2126 = vmatprep.subr.mxu0 %v1694
    %2127 = vmatpush1.msra.mxu0 %v1693
    %2128 = vmatprep.subr.mxu0 %v1697
    %2129 = vmatpush1.msra.mxu0 %v1696
    %2130 = vmatprep.subr.mxu0 %v1700
    %2131 = vmatpush1.msra.mxu0 %v1699
    %2132 = vmatprep.subr.mxu0 %v1703
    %2133 = vmatpush1.msra.mxu0 %v1702
    %2134 = vmatprep.subr.mxu0 %v1706
    %2135 = vmatpush1.msra.mxu0 %v1705
    %2136 = vmatprep.subr.mxu0 %v1709
    %2137 = vmatpush1.msra.mxu0 %v1708
    %2138 = vmatprep.subr.mxu0 %v1712
    %2139 = vmatpush1.msra.mxu0 %v1711
    %2140 = vmatprep.subr.mxu0 %v1715
    %2141 = vmatpush1.msra.mxu0 %v1714
    %2142 = vmatprep.subr.mxu0 %v1718
    %2143 = vmatpush1.msra.mxu0 %v1717
    %2144 = vmatprep.subr.mxu0 %v1721
    %2145 = vmatpush1.msra.mxu0 %v1720
    %2146 = vmatprep.subr.mxu0 %v1724
    %2147 = vmatpush1.msra.mxu0 %v1723
    %2148 = vmatprep.subr.mxu0 0.0
    %2149 = vmatpush1.msra.mxu0 0.0
    %2150 = vmatprep.subr.mxu0 0.0
    %2151 = vmatpush1.msra.mxu0 0.0
    %2152 = vmatprep.subr.mxu0 0.0
    %2153 = vmatpush1.msra.mxu0 0.0
    %2154 = vmatprep.subr.mxu0 0.0
    %2155 = vmatpush1.msra.mxu0 0.0
    %2156 = vmatprep.subr.mxu0 0.0
    %2157 = vmatpush1.msra.mxu0 0.0
    %2158 = vmatprep.subr.mxu0 0.0
    %2159 = vmatpush1.msra.mxu0 0.0
    %2160 = vmatprep.subr.mxu0 0.0
    %2161 = vmatpush1.msra.mxu0 0.0
    %2162 = vmatprep.subr.mxu0 0.0
    %2163 = vmatpush1.msra.mxu0 0.0
    %2164 = vmatprep.subr.mxu0 0.0
    %2165 = vmatpush1.msra.mxu0 0.0
    %2166 = vmatprep.subr.mxu0 0.0
    %2167 = vmatpush1.msra.mxu0 0.0
    %2168 = vmatprep.subr.mxu0 0.0
    %2169 = vmatpush1.msra.mxu0 0.0
    %2170 = vmatprep.subr.mxu0 0.0
    %2171 = vmatpush1.msra.mxu0 0.0
    %2172 = vmatprep.subr.mxu0 0.0
    %2173 = vmatpush1.msra.mxu0 0.0
    %2174 = vmatprep.subr.mxu0 0.0
    %2175 = vmatpush1.msra.mxu0 0.0
    %2176 = vmatprep.subr.mxu0 0.0
    %2177 = vmatpush1.msra.mxu0 0.0
    %2178 = vmatprep.subr.mxu0 0.0
    %2179 = vmatpush1.msra.mxu0 0.0
    %2180 = vmatprep.mubr.f32.mxu0 0.0
    %2181 = vmatmul.mubr.f32.gmra.mrb[0].mxu0 %v2097
    %v2182 = vpop.f32.mrb[0].mxu0
    %v2183 = vadd.f32 %v1731, %v2182
    %v2184 = vpop.f32.mrb[0].mxu0
    %v2185 = vadd.f32 %v1735, %v2184
    %2186 = vdwg.mxu0
    %2187 = vmatprep.subr.mxu0 0.0
    %2188 = vmatpush1.msra.mxu0 %v1680
    %2189 = vmatprep.subr.mxu0 0.0
    %2190 = vmatpush1.msra.mxu0 %v1683
    %2191 = vmatprep.subr.mxu0 0.0
    %2192 = vmatpush1.msra.mxu0 %v1686
    %2193 = vmatprep.subr.mxu0 0.0
    %2194 = vmatpush1.msra.mxu0 %v1689
    %2195 = vmatprep.subr.mxu0 0.0
    %2196 = vmatpush1.msra.mxu0 %v1692
    %2197 = vmatprep.subr.mxu0 0.0
    %2198 = vmatpush1.msra.mxu0 %v1695
    %2199 = vmatprep.subr.mxu0 0.0
    %2200 = vmatpush1.msra.mxu0 %v1698
    %2201 = vmatprep.subr.mxu0 0.0
    %2202 = vmatpush1.msra.mxu0 %v1701
    %2203 = vmatprep.subr.mxu0 0.0
    %2204 = vmatpush1.msra.mxu0 %v1704
    %2205 = vmatprep.subr.mxu0 0.0
    %2206 = vmatpush1.msra.mxu0 %v1707
    %2207 = vmatprep.subr.mxu0 0.0
    %2208 = vmatpush1.msra.mxu0 %v1710
    %2209 = vmatprep.subr.mxu0 0.0
    %2210 = vmatpush1.msra.mxu0 %v1713
    %2211 = vmatprep.subr.mxu0 0.0
    %2212 = vmatpush1.msra.mxu0 %v1716
    %2213 = vmatprep.subr.mxu0 0.0
    %2214 = vmatpush1.msra.mxu0 %v1719
    %2215 = vmatprep.subr.mxu0 0.0
    %2216 = vmatpush1.msra.mxu0 %v1722
    %2217 = vmatprep.subr.mxu0 0.0
    %2218 = vmatpush1.msra.mxu0 %v1725
    %2219 = vmatprep.subr.mxu0 0.0
    %2220 = vmatpush1.msra.mxu0 0.0
    %2221 = vmatprep.subr.mxu0 0.0
    %2222 = vmatpush1.msra.mxu0 0.0
    %2223 = vmatprep.subr.mxu0 0.0
    %2224 = vmatpush1.msra.mxu0 0.0
    %2225 = vmatprep.subr.mxu0 0.0
    %2226 = vmatpush1.msra.mxu0 0.0
    %2227 = vmatprep.subr.mxu0 0.0
    %2228 = vmatpush1.msra.mxu0 0.0
    %2229 = vmatprep.subr.mxu0 0.0
    %2230 = vmatpush1.msra.mxu0 0.0
    %2231 = vmatprep.subr.mxu0 0.0
    %2232 = vmatpush1.msra.mxu0 0.0
    %2233 = vmatprep.subr.mxu0 0.0
    %2234 = vmatpush1.msra.mxu0 0.0
    %2235 = vmatprep.subr.mxu0 0.0
    %2236 = vmatpush1.msra.mxu0 0.0
    %2237 = vmatprep.subr.mxu0 0.0
    %2238 = vmatpush1.msra.mxu0 0.0
    %2239 = vmatprep.subr.mxu0 0.0
    %2240 = vmatpush1.msra.mxu0 0.0
    %2241 = vmatprep.subr.mxu0 0.0
    %2242 = vmatpush1.msra.mxu0 0.0
    %2243 = vmatprep.subr.mxu0 0.0
    %2244 = vmatpush1.msra.mxu0 0.0
    %2245 = vmatprep.subr.mxu0 0.0
    %2246 = vmatpush1.msra.mxu0 0.0
    %2247 = vmatprep.subr.mxu0 0.0
    %2248 = vmatpush1.msra.mxu0 0.0
    %2249 = vmatprep.subr.mxu0 0.0
    %2250 = vmatpush1.msra.mxu0 0.0
    %2251 = vmatprep.mubr.f32.mxu0 0.0
    %2252 = vmatmul.mubr.f32.gmra.mrb[0].mxu0 %v2097
    %v2253 = vpop.f32.mrb[0].mxu0
    %v2254 = vadd.f32 %v1739, %v2253
    %v2255 = vpop.f32.mrb[0].mxu0
    %2256 = vdwg.mxu0
    %v2257 = vadd.f32 %v2113, %v2183
    %v2258 = vxor.u32 %v2257, 2147483648
    %v2259 = vmul.f32 %v2258, 1.442695
    %v2260 = vpow.pop %v2259
    %v2261 = vadd.f32 %v2260, 1.0
    %v2262 = vrcp.pop %v2261
    %v2263 = vmul.f32 1.0, %v2262
    %v2264 = vadd.f32 %v2114, %v2185
    %v2265 = vxor.u32 %v2264, 2147483648
    %v2266 = vmul.f32 %v2265, 1.442695
    %v2267 = vpow.pop %v2266
    %v2268 = vadd.f32 %v2267, 1.0
    %v2269 = vrcp.pop %v2268
    %v2270 = vmul.f32 1.0, %v2269
    %v2271 = vmul.f32 %v2263, %v2254
    %v2272 = vadd.f32 %v2115, %v2271
    %v2273 = vtanh.pop %v2272
    %v2274 = vsub.f32 1.0, %v2270
    %v2275 = vmul.f32 %v2274, %v2273
    %v2276 = vmul.f32 %v2270, %v2097
    %v2277 = vadd.f32 %v2275, %v2276
    %v2278 = vrot.slane %v1502, 6
    %v2279 = vrot.slane %v1504, 6
    %v2280 = vrot.slane %v1665, 6
    %v2284 = vrot.slane %v1514, 1
    %v2285 = vrot.slane %v1516, 1
    %v2286 = vrot.slane %v1675, 1
    %v2290 = vsel %vm1752, %v2278, %v2284
    %v2291 = vsel %vm1752, %v2279, %v2285
    %v2292 = vsel %vm1752, %v2280, %v2286
    %2293 = vmatprep.subr.mxu0 %v1679
    %2294 = vmatpush1.msra.mxu0 %v1678
    %2295 = vmatprep.subr.mxu0 %v1682
    %2296 = vmatpush1.msra.mxu0 %v1681
    %2297 = vmatprep.subr.mxu0 %v1685
    %2298 = vmatpush1.msra.mxu0 %v1684
    %2299 = vmatprep.subr.mxu0 %v1688
    %2300 = vmatpush1.msra.mxu0 %v1687
    %2301 = vmatprep.subr.mxu0 %v1691
    %2302 = vmatpush1.msra.mxu0 %v1690
    %2303 = vmatprep.subr.mxu0 %v1694
    %2304 = vmatpush1.msra.mxu0 %v1693
    %2305 = vmatprep.subr.mxu0 %v1697
    %2306 = vmatpush1.msra.mxu0 %v1696
    %2307 = vmatprep.subr.mxu0 %v1700
    %2308 = vmatpush1.msra.mxu0 %v1699
    %2309 = vmatprep.subr.mxu0 %v1703
    %2310 = vmatpush1.msra.mxu0 %v1702
    %2311 = vmatprep.subr.mxu0 %v1706
    %2312 = vmatpush1.msra.mxu0 %v1705
    %2313 = vmatprep.subr.mxu0 %v1709
    %2314 = vmatpush1.msra.mxu0 %v1708
    %2315 = vmatprep.subr.mxu0 %v1712
    %2316 = vmatpush1.msra.mxu0 %v1711
    %2317 = vmatprep.subr.mxu0 %v1715
    %2318 = vmatpush1.msra.mxu0 %v1714
    %2319 = vmatprep.subr.mxu0 %v1718
    %2320 = vmatpush1.msra.mxu0 %v1717
    %2321 = vmatprep.subr.mxu0 %v1721
    %2322 = vmatpush1.msra.mxu0 %v1720
    %2323 = vmatprep.subr.mxu0 %v1724
    %2324 = vmatpush1.msra.mxu0 %v1723
    %2325 = vmatprep.subr.mxu0 0.0
    %2326 = vmatpush1.msra.mxu0 0.0
    %2327 = vmatprep.subr.mxu0 0.0
    %2328 = vmatpush1.msra.mxu0 0.0
    %2329 = vmatprep.subr.mxu0 0.0
    %2330 = vmatpush1.msra.mxu0 0.0
    %2331 = vmatprep.subr.mxu0 0.0
    %2332 = vmatpush1.msra.mxu0 0.0
    %2333 = vmatprep.subr.mxu0 0.0
    %2334 = vmatpush1.msra.mxu0 0.0
    %2335 = vmatprep.subr.mxu0 0.0
    %2336 = vmatpush1.msra.mxu0 0.0
    %2337 = vmatprep.subr.mxu0 0.0
    %2338 = vmatpush1.msra.mxu0 0.0
    %2339 = vmatprep.subr.mxu0 0.0
    %2340 = vmatpush1.msra.mxu0 0.0
    %2341 = vmatprep.subr.mxu0 0.0
    %2342 = vmatpush1.msra.mxu0 0.0
    %2343 = vmatprep.subr.mxu0 0.0
    %2344 = vmatpush1.msra.mxu0 0.0
    %2345 = vmatprep.subr.mxu0 0.0
    %2346 = vmatpush1.msra.mxu0 0.0
    %2347 = vmatprep.subr.mxu0 0.0
    %2348 = vmatpush1.msra.mxu0 0.0
    %2349 = vmatprep.subr.mxu0 0.0
    %2350 = vmatpush1.msra.mxu0 0.0
    %2351 = vmatprep.subr.mxu0 0.0
    %2352 = vmatpush1.msra.mxu0 0.0
    %2353 = vmatprep.subr.mxu0 0.0
    %2354 = vmatpush1.msra.mxu0 0.0
    %2355 = vmatprep.subr.mxu0 0.0
    %2356 = vmatpush1.msra.mxu0 0.0
    %2357 = vmatprep.mubr.f32.mxu0 0.0
    %2358 = vmatmul.mubr.f32.gmra.mrb[0].mxu0 %v2277
    %v2359 = vpop.f32.mrb[0].mxu0
    %v2360 = vadd.f32 %v1731, %v2359
    %v2361 = vpop.f32.mrb[0].mxu0
    %v2362 = vadd.f32 %v1735, %v2361
    %2363 = vdwg.mxu0
    %2364 = vmatprep.subr.mxu0 0.0
    %2365 = vmatpush1.msra.mxu0 %v1680
    %2366 = vmatprep.subr.mxu0 0.0
    %2367 = vmatpush1.msra.mxu0 %v1683
    %2368 = vmatprep.subr.mxu0 0.0
    %2369 = vmatpush1.msra.mxu0 %v1686
    %2370 = vmatprep.subr.mxu0 0.0
    %2371 = vmatpush1.msra.mxu0 %v1689
    %2372 = vmatprep.subr.mxu0 0.0
    %2373 = vmatpush1.msra.mxu0 %v1692
    %2374 = vmatprep.subr.mxu0 0.0
    %2375 = vmatpush1.msra.mxu0 %v1695
    %2376 = vmatprep.subr.mxu0 0.0
    %2377 = vmatpush1.msra.mxu0 %v1698
    %2378 = vmatprep.subr.mxu0 0.0
    %2379 = vmatpush1.msra.mxu0 %v1701
    %2380 = vmatprep.subr.mxu0 0.0
    %2381 = vmatpush1.msra.mxu0 %v1704
    %2382 = vmatprep.subr.mxu0 0.0
    %2383 = vmatpush1.msra.mxu0 %v1707
    %2384 = vmatprep.subr.mxu0 0.0
    %2385 = vmatpush1.msra.mxu0 %v1710
    %2386 = vmatprep.subr.mxu0 0.0
    %2387 = vmatpush1.msra.mxu0 %v1713
    %2388 = vmatprep.subr.mxu0 0.0
    %2389 = vmatpush1.msra.mxu0 %v1716
    %2390 = vmatprep.subr.mxu0 0.0
    %2391 = vmatpush1.msra.mxu0 %v1719
    %2392 = vmatprep.subr.mxu0 0.0
    %2393 = vmatpush1.msra.mxu0 %v1722
    %2394 = vmatprep.subr.mxu0 0.0
    %2395 = vmatpush1.msra.mxu0 %v1725
    %2396 = vmatprep.subr.mxu0 0.0
    %2397 = vmatpush1.msra.mxu0 0.0
    %2398 = vmatprep.subr.mxu0 0.0
    %2399 = vmatpush1.msra.mxu0 0.0
    %2400 = vmatprep.subr.mxu0 0.0
    %2401 = vmatpush1.msra.mxu0 0.0
    %2402 = vmatprep.subr.mxu0 0.0
    %2403 = vmatpush1.msra.mxu0 0.0
    %2404 = vmatprep.subr.mxu0 0.0
    %2405 = vmatpush1.msra.mxu0 0.0
    %2406 = vmatprep.subr.mxu0 0.0
    %2407 = vmatpush1.msra.mxu0 0.0
    %2408 = vmatprep.subr.mxu0 0.0
    %2409 = vmatpush1.msra.mxu0 0.0
    %2410 = vmatprep.subr.mxu0 0.0
    %2411 = vmatpush1.msra.mxu0 0.0
    %2412 = vmatprep.subr.mxu0 0.0
    %2413 = vmatpush1.msra.mxu0 0.0
    %2414 = vmatprep.subr.mxu0 0.0
    %2415 = vmatpush1.msra.mxu0 0.0
    %2416 = vmatprep.subr.mxu0 0.0
    %2417 = vmatpush1.msra.mxu0 0.0
    %2418 = vmatprep.subr.mxu0 0.0
    %2419 = vmatpush1.msra.mxu0 0.0
    %2420 = vmatprep.subr.mxu0 0.0
    %2421 = vmatpush1.msra.mxu0 0.0
    %2422 = vmatprep.subr.mxu0 0.0
    %2423 = vmatpush1.msra.mxu0 0.0
    %2424 = vmatprep.subr.mxu0 0.0
    %2425 = vmatpush1.msra.mxu0 0.0
    %2426 = vmatprep.subr.mxu0 0.0
    %2427 = vmatpush1.msra.mxu0 0.0
    %2428 = vmatprep.mubr.f32.mxu0 0.0
    %2429 = vmatmul.mubr.f32.gmra.mrb[0].mxu0 %v2277
    %v2430 = vpop.f32.mrb[0].mxu0
    %v2431 = vadd.f32 %v1739, %v2430
    %v2432 = vpop.f32.mrb[0].mxu0
    %2433 = vdwg.mxu0
    %v2434 = vadd.f32 %v2290, %v2360
    %v2435 = vxor.u32 %v2434, 2147483648
    %v2436 = vmul.f32 %v2435, 1.442695
    %v2437 = vpow.pop %v2436
    %v2438 = vadd.f32 %v2437, 1.0
    %v2439 = vrcp.pop %v2438
    %v2440 = vmul.f32 1.0, %v2439
    %v2441 = vadd.f32 %v2291, %v2362
    %v2442 = vxor.u32 %v2441, 2147483648
    %v2443 = vmul.f32 %v2442, 1.442695
    %v2444 = vpow.pop %v2443
    %v2445 = vadd.f32 %v2444, 1.0
    %v2446 = vrcp.pop %v2445
    %v2447 = vmul.f32 1.0, %v2446
    %v2448 = vmul.f32 %v2440, %v2431
    %v2449 = vadd.f32 %v2292, %v2448
    %v2450 = vtanh.pop %v2449
    %v2451 = vsub.f32 1.0, %v2447
    %v2452 = vmul.f32 %v2451, %v2450
    %v2453 = vmul.f32 %v2447, %v2277
    %v2454 = vadd.f32 %v2452, %v2453
    %v2455 = vrot.slane %v1514, 3
    %v2456 = vrot.slane %v1516, 3
    %v2457 = vrot.slane %v1675, 3
    %v2461 = vsel %vm1752, %v1508, %v2455
    %v2462 = vsel %vm1752, %v1510, %v2456
    %v2463 = vsel %vm1752, %v1670, %v2457
    %2464 = vmatprep.subr.mxu0 %v1679
    %2465 = vmatpush1.msra.mxu0 %v1678
    %2466 = vmatprep.subr.mxu0 %v1682
    %2467 = vmatpush1.msra.mxu0 %v1681
    %2468 = vmatprep.subr.mxu0 %v1685
    %2469 = vmatpush1.msra.mxu0 %v1684
    %2470 = vmatprep.subr.mxu0 %v1688
    %2471 = vmatpush1.msra.mxu0 %v1687
    %2472 = vmatprep.subr.mxu0 %v1691
    %2473 = vmatpush1.msra.mxu0 %v1690
    %2474 = vmatprep.subr.mxu0 %v1694
    %2475 = vmatpush1.msra.mxu0 %v1693
    %2476 = vmatprep.subr.mxu0 %v1697
    %2477 = vmatpush1.msra.mxu0 %v1696
    %2478 = vmatprep.subr.mxu0 %v1700
    %2479 = vmatpush1.msra.mxu0 %v1699
    %2480 = vmatprep.subr.mxu0 %v1703
    %2481 = vmatpush1.msra.mxu0 %v1702
    %2482 = vmatprep.subr.mxu0 %v1706
    %2483 = vmatpush1.msra.mxu0 %v1705
    %2484 = vmatprep.subr.mxu0 %v1709
    %2485 = vmatpush1.msra.mxu0 %v1708
    %2486 = vmatprep.subr.mxu0 %v1712
    %2487 = vmatpush1.msra.mxu0 %v1711
    %2488 = vmatprep.subr.mxu0 %v1715
    %2489 = vmatpush1.msra.mxu0 %v1714
    %2490 = vmatprep.subr.mxu0 %v1718
    %2491 = vmatpush1.msra.mxu0 %v1717
    %2492 = vmatprep.subr.mxu0 %v1721
    %2493 = vmatpush1.msra.mxu0 %v1720
    %2494 = vmatprep.subr.mxu0 %v1724
    %2495 = vmatpush1.msra.mxu0 %v1723
    %2496 = vmatprep.subr.mxu0 0.0
    %2497 = vmatpush1.msra.mxu0 0.0
    %2498 = vmatprep.subr.mxu0 0.0
    %2499 = vmatpush1.msra.mxu0 0.0
    %2500 = vmatprep.subr.mxu0 0.0
    %2501 = vmatpush1.msra.mxu0 0.0
    %2502 = vmatprep.subr.mxu0 0.0
    %2503 = vmatpush1.msra.mxu0 0.0
    %2504 = vmatprep.subr.mxu0 0.0
    %2505 = vmatpush1.msra.mxu0 0.0
    %2506 = vmatprep.subr.mxu0 0.0
    %2507 = vmatpush1.msra.mxu0 0.0
    %2508 = vmatprep.subr.mxu0 0.0
    %2509 = vmatpush1.msra.mxu0 0.0
    %2510 = vmatprep.subr.mxu0 0.0
    %2511 = vmatpush1.msra.mxu0 0.0
    %2512 = vmatprep.subr.mxu0 0.0
    %2513 = vmatpush1.msra.mxu0 0.0
    %2514 = vmatprep.subr.mxu0 0.0
    %2515 = vmatpush1.msra.mxu0 0.0
    %2516 = vmatprep.subr.mxu0 0.0
    %2517 = vmatpush1.msra.mxu0 0.0
    %2518 = vmatprep.subr.mxu0 0.0
    %2519 = vmatpush1.msra.mxu0 0.0
    %2520 = vmatprep.subr.mxu0 0.0
    %2521 = vmatpush1.msra.mxu0 0.0
    %2522 = vmatprep.subr.mxu0 0.0
    %2523 = vmatpush1.msra.mxu0 0.0
    %2524 = vmatprep.subr.mxu0 0.0
    %2525 = vmatpush1.msra.mxu0 0.0
    %2526 = vmatprep.subr.mxu0 0.0
    %2527 = vmatpush1.msra.mxu0 0.0
    %2528 = vmatprep.mubr.f32.mxu0 0.0
    %2529 = vmatmul.mubr.f32.gmra.mrb[0].mxu0 %v2454
    %v2530 = vpop.f32.mrb[0].mxu0
    %v2531 = vadd.f32 %v1731, %v2530
    %v2532 = vpop.f32.mrb[0].mxu0
    %v2533 = vadd.f32 %v1735, %v2532
    %2534 = vdwg.mxu0
    %2535 = vmatprep.subr.mxu0 0.0
    %2536 = vmatpush1.msra.mxu0 %v1680
    %2537 = vmatprep.subr.mxu0 0.0
    %2538 = vmatpush1.msra.mxu0 %v1683
    %2539 = vmatprep.subr.mxu0 0.0
    %2540 = vmatpush1.msra.mxu0 %v1686
    %2541 = vmatprep.subr.mxu0 0.0
    %2542 = vmatpush1.msra.mxu0 %v1689
    %2543 = vmatprep.subr.mxu0 0.0
    %2544 = vmatpush1.msra.mxu0 %v1692
    %2545 = vmatprep.subr.mxu0 0.0
    %2546 = vmatpush1.msra.mxu0 %v1695
    %2547 = vmatprep.subr.mxu0 0.0
    %2548 = vmatpush1.msra.mxu0 %v1698
    %2549 = vmatprep.subr.mxu0 0.0
    %2550 = vmatpush1.msra.mxu0 %v1701
    %2551 = vmatprep.subr.mxu0 0.0
    %2552 = vmatpush1.msra.mxu0 %v1704
    %2553 = vmatprep.subr.mxu0 0.0
    %2554 = vmatpush1.msra.mxu0 %v1707
    %2555 = vmatprep.subr.mxu0 0.0
    %2556 = vmatpush1.msra.mxu0 %v1710
    %2557 = vmatprep.subr.mxu0 0.0
    %2558 = vmatpush1.msra.mxu0 %v1713
    %2559 = vmatprep.subr.mxu0 0.0
    %2560 = vmatpush1.msra.mxu0 %v1716
    %2561 = vmatprep.subr.mxu0 0.0
    %2562 = vmatpush1.msra.mxu0 %v1719
    %2563 = vmatprep.subr.mxu0 0.0
    %2564 = vmatpush1.msra.mxu0 %v1722
    %2565 = vmatprep.subr.mxu0 0.0
    %2566 = vmatpush1.msra.mxu0 %v1725
    %2567 = vmatprep.subr.mxu0 0.0
    %2568 = vmatpush1.msra.mxu0 0.0
    %2569 = vmatprep.subr.mxu0 0.0
    %2570 = vmatpush1.msra.mxu0 0.0
    %2571 = vmatprep.subr.mxu0 0.0
    %2572 = vmatpush1.msra.mxu0 0.0
    %2573 = vmatprep.subr.mxu0 0.0
    %2574 = vmatpush1.msra.mxu0 0.0
    %2575 = vmatprep.subr.mxu0 0.0
    %2576 = vmatpush1.msra.mxu0 0.0
    %2577 = vmatprep.subr.mxu0 0.0
    %2578 = vmatpush1.msra.mxu0 0.0
    %2579 = vmatprep.subr.mxu0 0.0
    %2580 = vmatpush1.msra.mxu0 0.0
    %2581 = vmatprep.subr.mxu0 0.0
    %2582 = vmatpush1.msra.mxu0 0.0
    %2583 = vmatprep.subr.mxu0 0.0
    %2584 = vmatpush1.msra.mxu0 0.0
    %2585 = vmatprep.subr.mxu0 0.0
    %2586 = vmatpush1.msra.mxu0 0.0
    %2587 = vmatprep.subr.mxu0 0.0
    %2588 = vmatpush1.msra.mxu0 0.0
    %2589 = vmatprep.subr.mxu0 0.0
    %2590 = vmatpush1.msra.mxu0 0.0
    %2591 = vmatprep.subr.mxu0 0.0
    %2592 = vmatpush1.msra.mxu0 0.0
    %2593 = vmatprep.subr.mxu0 0.0
    %2594 = vmatpush1.msra.mxu0 0.0
    %2595 = vmatprep.subr.mxu0 0.0
    %2596 = vmatpush1.msra.mxu0 0.0
    %2597 = vmatprep.subr.mxu0 0.0
    %2598 = vmatpush1.msra.mxu0 0.0
    %2599 = vmatprep.mubr.f32.mxu0 0.0
    %2600 = vmatmul.mubr.f32.gmra.mrb[0].mxu0 %v2454
    %v2601 = vpop.f32.mrb[0].mxu0
    %v2602 = vadd.f32 %v1739, %v2601
    %v2603 = vpop.f32.mrb[0].mxu0
    %2604 = vdwg.mxu0
    %v2605 = vadd.f32 %v2461, %v2531
    %v2606 = vxor.u32 %v2605, 2147483648
    %v2607 = vmul.f32 %v2606, 1.442695
    %v2608 = vpow.pop %v2607
    %v2609 = vadd.f32 %v2608, 1.0
    %v2610 = vrcp.pop %v2609
    %v2611 = vmul.f32 1.0, %v2610
    %v2612 = vadd.f32 %v2462, %v2533
    %v2613 = vxor.u32 %v2612, 2147483648
    %v2614 = vmul.f32 %v2613, 1.442695
    %v2615 = vpow.pop %v2614
    %v2616 = vadd.f32 %v2615, 1.0
    %v2617 = vrcp.pop %v2616
    %v2618 = vmul.f32 1.0, %v2617
    %v2619 = vmul.f32 %v2611, %v2602
    %v2620 = vadd.f32 %v2463, %v2619
    %v2621 = vtanh.pop %v2620
    %v2622 = vsub.f32 1.0, %v2618
    %v2623 = vmul.f32 %v2622, %v2621
    %v2624 = vmul.f32 %v2618, %v2454
    %v2625 = vadd.f32 %v2623, %v2624
    %v2626 = vrot.slane %v1508, 2
    %v2627 = vrot.slane %v1510, 2
    %v2628 = vrot.slane %v1670, 2
    %v2632 = vrot.slane %v1514, 5
    %v2633 = vrot.slane %v1516, 5
    %v2634 = vrot.slane %v1675, 5
    %v2638 = vsel %vm1752, %v2626, %v2632
    %v2639 = vsel %vm1752, %v2627, %v2633
    %v2640 = vsel %vm1752, %v2628, %v2634
    %2641 = vmatprep.subr.mxu0 %v1679
    %2642 = vmatpush1.msra.mxu0 %v1678
    %2643 = vmatprep.subr.mxu0 %v1682
    %2644 = vmatpush1.msra.mxu0 %v1681
    %2645 = vmatprep.subr.mxu0 %v1685
    %2646 = vmatpush1.msra.mxu0 %v1684
    %2647 = vmatprep.subr.mxu0 %v1688
    %2648 = vmatpush1.msra.mxu0 %v1687
    %2649 = vmatprep.subr.mxu0 %v1691
    %2650 = vmatpush1.msra.mxu0 %v1690
    %2651 = vmatprep.subr.mxu0 %v1694
    %2652 = vmatpush1.msra.mxu0 %v1693
    %2653 = vmatprep.subr.mxu0 %v1697
    %2654 = vmatpush1.msra.mxu0 %v1696
    %2655 = vmatprep.subr.mxu0 %v1700
    %2656 = vmatpush1.msra.mxu0 %v1699
    %2657 = vmatprep.subr.mxu0 %v1703
    %2658 = vmatpush1.msra.mxu0 %v1702
    %2659 = vmatprep.subr.mxu0 %v1706
    %2660 = vmatpush1.msra.mxu0 %v1705
    %2661 = vmatprep.subr.mxu0 %v1709
    %2662 = vmatpush1.msra.mxu0 %v1708
    %2663 = vmatprep.subr.mxu0 %v1712
    %2664 = vmatpush1.msra.mxu0 %v1711
    %2665 = vmatprep.subr.mxu0 %v1715
    %2666 = vmatpush1.msra.mxu0 %v1714
    %2667 = vmatprep.subr.mxu0 %v1718
    %2668 = vmatpush1.msra.mxu0 %v1717
    %2669 = vmatprep.subr.mxu0 %v1721
    %2670 = vmatpush1.msra.mxu0 %v1720
    %2671 = vmatprep.subr.mxu0 %v1724
    %2672 = vmatpush1.msra.mxu0 %v1723
    %2673 = vmatprep.subr.mxu0 0.0
    %2674 = vmatpush1.msra.mxu0 0.0
    %2675 = vmatprep.subr.mxu0 0.0
    %2676 = vmatpush1.msra.mxu0 0.0
    %2677 = vmatprep.subr.mxu0 0.0
    %2678 = vmatpush1.msra.mxu0 0.0
    %2679 = vmatprep.subr.mxu0 0.0
    %2680 = vmatpush1.msra.mxu0 0.0
    %2681 = vmatprep.subr.mxu0 0.0
    %2682 = vmatpush1.msra.mxu0 0.0
    %2683 = vmatprep.subr.mxu0 0.0
    %2684 = vmatpush1.msra.mxu0 0.0
    %2685 = vmatprep.subr.mxu0 0.0
    %2686 = vmatpush1.msra.mxu0 0.0
    %2687 = vmatprep.subr.mxu0 0.0
    %2688 = vmatpush1.msra.mxu0 0.0
    %2689 = vmatprep.subr.mxu0 0.0
    %2690 = vmatpush1.msra.mxu0 0.0
    %2691 = vmatprep.subr.mxu0 0.0
    %2692 = vmatpush1.msra.mxu0 0.0
    %2693 = vmatprep.subr.mxu0 0.0
    %2694 = vmatpush1.msra.mxu0 0.0
    %2695 = vmatprep.subr.mxu0 0.0
    %2696 = vmatpush1.msra.mxu0 0.0
    %2697 = vmatprep.subr.mxu0 0.0
    %2698 = vmatpush1.msra.mxu0 0.0
    %2699 = vmatprep.subr.mxu0 0.0
    %2700 = vmatpush1.msra.mxu0 0.0
    %2701 = vmatprep.subr.mxu0 0.0
    %2702 = vmatpush1.msra.mxu0 0.0
    %2703 = vmatprep.subr.mxu0 0.0
    %2704 = vmatpush1.msra.mxu0 0.0
    %2705 = vmatprep.mubr.f32.mxu0 0.0
    %2706 = vmatmul.mubr.f32.gmra.mrb[0].mxu0 %v2625
    %v2707 = vpop.f32.mrb[0].mxu0
    %v2708 = vadd.f32 %v1731, %v2707
    %v2709 = vpop.f32.mrb[0].mxu0
    %v2710 = vadd.f32 %v1735, %v2709
    %2711 = vdwg.mxu0
    %2712 = vmatprep.subr.mxu0 0.0
    %2713 = vmatpush1.msra.mxu0 %v1680
    %2714 = vmatprep.subr.mxu0 0.0
    %2715 = vmatpush1.msra.mxu0 %v1683
    %2716 = vmatprep.subr.mxu0 0.0
    %2717 = vmatpush1.msra.mxu0 %v1686
    %2718 = vmatprep.subr.mxu0 0.0
    %2719 = vmatpush1.msra.mxu0 %v1689
    %2720 = vmatprep.subr.mxu0 0.0
    %2721 = vmatpush1.msra.mxu0 %v1692
    %2722 = vmatprep.subr.mxu0 0.0
    %2723 = vmatpush1.msra.mxu0 %v1695
    %2724 = vmatprep.subr.mxu0 0.0
    %2725 = vmatpush1.msra.mxu0 %v1698
    %2726 = vmatprep.subr.mxu0 0.0
    %2727 = vmatpush1.msra.mxu0 %v1701
    %2728 = vmatprep.subr.mxu0 0.0
    %2729 = vmatpush1.msra.mxu0 %v1704
    %2730 = vmatprep.subr.mxu0 0.0
    %2731 = vmatpush1.msra.mxu0 %v1707
    %2732 = vmatprep.subr.mxu0 0.0
    %2733 = vmatpush1.msra.mxu0 %v1710
    %2734 = vmatprep.subr.mxu0 0.0
    %2735 = vmatpush1.msra.mxu0 %v1713
    %2736 = vmatprep.subr.mxu0 0.0
    %2737 = vmatpush1.msra.mxu0 %v1716
    %2738 = vmatprep.subr.mxu0 0.0
    %2739 = vmatpush1.msra.mxu0 %v1719
    %2740 = vmatprep.subr.mxu0 0.0
    %2741 = vmatpush1.msra.mxu0 %v1722
    %2742 = vmatprep.subr.mxu0 0.0
    %2743 = vmatpush1.msra.mxu0 %v1725
    %2744 = vmatprep.subr.mxu0 0.0
    %2745 = vmatpush1.msra.mxu0 0.0
    %2746 = vmatprep.subr.mxu0 0.0
    %2747 = vmatpush1.msra.mxu0 0.0
    %2748 = vmatprep.subr.mxu0 0.0
    %2749 = vmatpush1.msra.mxu0 0.0
    %2750 = vmatprep.subr.mxu0 0.0
    %2751 = vmatpush1.msra.mxu0 0.0
    %2752 = vmatprep.subr.mxu0 0.0
    %2753 = vmatpush1.msra.mxu0 0.0
    %2754 = vmatprep.subr.mxu0 0.0
    %2755 = vmatpush1.msra.mxu0 0.0
    %2756 = vmatprep.subr.mxu0 0.0
    %2757 = vmatpush1.msra.mxu0 0.0
    %2758 = vmatprep.subr.mxu0 0.0
    %2759 = vmatpush1.msra.mxu0 0.0
    %2760 = vmatprep.subr.mxu0 0.0
    %2761 = vmatpush1.msra.mxu0 0.0
    %2762 = vmatprep.subr.mxu0 0.0
    %2763 = vmatpush1.msra.mxu0 0.0
    %2764 = vmatprep.subr.mxu0 0.0
    %2765 = vmatpush1.msra.mxu0 0.0
    %2766 = vmatprep.subr.mxu0 0.0
    %2767 = vmatpush1.msra.mxu0 0.0
    %2768 = vmatprep.subr.mxu0 0.0
    %2769 = vmatpush1.msra.mxu0 0.0
    %2770 = vmatprep.subr.mxu0 0.0
    %2771 = vmatpush1.msra.mxu0 0.0
    %2772 = vmatprep.subr.mxu0 0.0
    %2773 = vmatpush1.msra.mxu0 0.0
    %2774 = vmatprep.subr.mxu0 0.0
    %2775 = vmatpush1.msra.mxu0 0.0
    %2776 = vmatprep.mubr.f32.mxu0 0.0
    %2777 = vmatmul.mubr.f32.gmra.mrb[0].mxu0 %v2625
    %v2778 = vpop.f32.mrb[0].mxu0
    %v2779 = vadd.f32 %v1739, %v2778
    %v2780 = vpop.f32.mrb[0].mxu0
    %2781 = vdwg.mxu0
    %v2782 = vadd.f32 %v2638, %v2708
    %v2783 = vxor.u32 %v2782, 2147483648
    %v2784 = vmul.f32 %v2783, 1.442695
    %v2785 = vpow.pop %v2784
    %v2786 = vadd.f32 %v2785, 1.0
    %v2787 = vrcp.pop %v2786
    %v2788 = vmul.f32 1.0, %v2787
    %v2789 = vadd.f32 %v2639, %v2710
    %v2790 = vxor.u32 %v2789, 2147483648
    %v2791 = vmul.f32 %v2790, 1.442695
    %v2792 = vpow.pop %v2791
    %v2793 = vadd.f32 %v2792, 1.0
    %v2794 = vrcp.pop %v2793
    %v2795 = vmul.f32 1.0, %v2794
    %v2796 = vmul.f32 %v2788, %v2779
    %v2797 = vadd.f32 %v2640, %v2796
    %v2798 = vtanh.pop %v2797
    %v2799 = vsub.f32 1.0, %v2795
    %v2800 = vmul.f32 %v2799, %v2798
    %v2801 = vmul.f32 %v2795, %v2625
    %v2802 = vadd.f32 %v2800, %v2801
    %v2803 = vld [vmem:[#allocation12] sm:$0xff]
    %v2804 = vld [vmem:[#allocation12 + $0x8] sm:$0xff]
    %v2805 = vld [vmem:[#allocation12 + $0x10] sm:$0xff]
    %v2806 = vld [vmem:[#allocation12 + $0x18] sm:$0xff]
    %v2807 = vld [vmem:[#allocation12 + $0x20] sm:$0xff]
    %v2808 = vld [vmem:[#allocation12 + $0x28] sm:$0xff]
    %v2809 = vld [vmem:[#allocation12 + $0x30] sm:$0xff]
    %v2810 = vld [vmem:[#allocation12 + $0x38] sm:$0xff]
    %v2811 = vld [vmem:[#allocation12 + $0x40] sm:$0xff]
    %v2812 = vld [vmem:[#allocation12 + $0x48] sm:$0xff]
    %v2813 = vld [vmem:[#allocation12 + $0x50] sm:$0xff]
    %v2814 = vld [vmem:[#allocation12 + $0x58] sm:$0xff]
    %v2815 = vld [vmem:[#allocation12 + $0x60] sm:$0xff]
    %v2816 = vld [vmem:[#allocation12 + $0x68] sm:$0xff]
    %v2817 = vld [vmem:[#allocation12 + $0x70] sm:$0xff]
    %v2818 = vld [vmem:[#allocation12 + $0x78] sm:$0xff]
    %v2819 = vld [vmem:[#allocation12 + $0x80] sm:$0xff]
    %v2820 = vld [vmem:[#allocation12 + $0x88] sm:$0xff]
    %v2821 = vld [vmem:[#allocation12 + $0x90] sm:$0xff]
    %v2822 = vld [vmem:[#allocation12 + $0x98] sm:$0xff]
    %v2823 = vld [vmem:[#allocation12 + $0xa0] sm:$0xff]
    %v2824 = vld [vmem:[#allocation12 + $0xa8] sm:$0xff]
    %v2825 = vld [vmem:[#allocation12 + $0xb0] sm:$0xff]
    %v2826 = vld [vmem:[#allocation12 + $0xb8] sm:$0xff]
    %v2827 = vld [vmem:[#allocation12 + $0xc0] sm:$0xff]
    %v2828 = vld [vmem:[#allocation12 + $0xc8] sm:$0xff]
    %v2829 = vld [vmem:[#allocation12 + $0xd0] sm:$0xff]
    %v2830 = vld [vmem:[#allocation12 + $0xd8] sm:$0xff]
    %v2831 = vld [vmem:[#allocation12 + $0xe0] sm:$0xff]
    %v2832 = vld [vmem:[#allocation12 + $0xe8] sm:$0xff]
    %v2833 = vld [vmem:[#allocation12 + $0xf0] sm:$0xff]
    %v2834 = vld [vmem:[#allocation12 + $0xf8] sm:$0xff]
    %v2835 = vld [vmem:[#allocation12 + $0x100] sm:$0xff]
    %v2836 = vld [vmem:[#allocation12 + $0x108] sm:$0xff]
    %v2837 = vld [vmem:[#allocation12 + $0x110] sm:$0xff]
    %v2838 = vld [vmem:[#allocation12 + $0x118] sm:$0xff]
    %v2839 = vld [vmem:[#allocation12 + $0x120] sm:$0xff]
    %v2840 = vld [vmem:[#allocation12 + $0x128] sm:$0xff]
    %v2841 = vld [vmem:[#allocation12 + $0x130] sm:$0xff]
    %v2842 = vld [vmem:[#allocation12 + $0x138] sm:$0xff]
    %v2843 = vld [vmem:[#allocation12 + $0x140] sm:$0xff]
    %v2844 = vld [vmem:[#allocation12 + $0x148] sm:$0xff]
    %v2845 = vld [vmem:[#allocation12 + $0x150] sm:$0xff]
    %v2846 = vld [vmem:[#allocation12 + $0x158] sm:$0xff]
    %v2847 = vld [vmem:[#allocation12 + $0x160] sm:$0xff]
    %v2848 = vld [vmem:[#allocation12 + $0x168] sm:$0xff]
    %v2849 = vld [vmem:[#allocation12 + $0x170] sm:$0xff]
    %v2850 = vld [vmem:[#allocation12 + $0x178] sm:$0xff]
    %v2851 = vld [vmem:[#allocation12 + $0x180] sm:$0xff]
    %v2852 = vld [vmem:[#allocation12 + $0x188] sm:$0xff]
    %v2853 = vld [vmem:[#allocation12 + $0x190] sm:$0xff]
    %v2854 = vld [vmem:[#allocation12 + $0x198] sm:$0xff]
    %v2855 = vld [vmem:[#allocation12 + $0x1a0] sm:$0xff]
    %v2856 = vld [vmem:[#allocation12 + $0x1a8] sm:$0xff]
    %v2857 = vld [vmem:[#allocation12 + $0x1b0] sm:$0xff]
    %v2858 = vld [vmem:[#allocation12 + $0x1b8] sm:$0xff]
    %v2859 = vld [vmem:[#allocation12 + $0x1c0] sm:$0xff]
    %v2860 = vld [vmem:[#allocation12 + $0x1c8] sm:$0xff]
    %v2861 = vld [vmem:[#allocation12 + $0x1d0] sm:$0xff]
    %v2862 = vld [vmem:[#allocation12 + $0x1d8] sm:$0xff]
    %v2863 = vld [vmem:[#allocation12 + $0x1e0] sm:$0xff]
    %v2864 = vld [vmem:[#allocation12 + $0x1e8] sm:$0xff]
    %v2865 = vld [vmem:[#allocation12 + $0x1f0] sm:$0xff]
    %v2866 = vld [vmem:[#allocation12 + $0x1f8] sm:$0xff]
    %v2867 = vld [vmem:[#allocation13] sm:$0xf]
    %v2869 = vlaneseq
    %v2870 = vshrl.u32 %v2869, 7
    %v2871 = vsub.s32 0, %v2870
    %v2872 = vrot.slane %v2867, %v2871
    %v2873 = vlaneseq
    %v2874 = vshrl.u32 %v2873, 7
    %v2875 = vsub.s32 1, %v2874
    %v2876 = vrot.slane %v2867, %v2875
    %v2877 = vlaneseq
    %v2878 = vshrl.u32 %v2877, 7
    %v2879 = vsub.s32 2, %v2878
    %v2880 = vrot.slane %v2867, %v2879
    %v2881 = vlaneseq
    %v2882 = vshrl.u32 %v2881, 7
    %v2883 = vsub.s32 3, %v2882
    %v2884 = vrot.slane %v2867, %v2883
    %2889 = vmatprep.subr.mxu0 %v2804
    %2890 = vmatpush1.msra.mxu0 %v2803
    %2891 = vmatprep.subr.mxu0 %v2808
    %2892 = vmatpush1.msra.mxu0 %v2807
    %2893 = vmatprep.subr.mxu0 %v2812
    %2894 = vmatpush1.msra.mxu0 %v2811
    %2895 = vmatprep.subr.mxu0 %v2816
    %2896 = vmatpush1.msra.mxu0 %v2815
    %2897 = vmatprep.subr.mxu0 %v2820
    %2898 = vmatpush1.msra.mxu0 %v2819
    %2899 = vmatprep.subr.mxu0 %v2824
    %2900 = vmatpush1.msra.mxu0 %v2823
    %2901 = vmatprep.subr.mxu0 %v2828
    %2902 = vmatpush1.msra.mxu0 %v2827
    %2903 = vmatprep.subr.mxu0 %v2832
    %2904 = vmatpush1.msra.mxu0 %v2831
    %2905 = vmatprep.subr.mxu0 %v2836
    %2906 = vmatpush1.msra.mxu0 %v2835
    %2907 = vmatprep.subr.mxu0 %v2840
    %2908 = vmatpush1.msra.mxu0 %v2839
    %2909 = vmatprep.subr.mxu0 %v2844
    %2910 = vmatpush1.msra.mxu0 %v2843
    %2911 = vmatprep.subr.mxu0 %v2848
    %2912 = vmatpush1.msra.mxu0 %v2847
    %2913 = vmatprep.subr.mxu0 %v2852
    %2914 = vmatpush1.msra.mxu0 %v2851
    %2915 = vmatprep.subr.mxu0 %v2856
    %2916 = vmatpush1.msra.mxu0 %v2855
    %2917 = vmatprep.subr.mxu0 %v2860
    %2918 = vmatpush1.msra.mxu0 %v2859
    %2919 = vmatprep.subr.mxu0 %v2864
    %2920 = vmatpush1.msra.mxu0 %v2863
    %2921 = vmatprep.subr.mxu0 0.0
    %2922 = vmatpush1.msra.mxu0 0.0
    %2923 = vmatprep.subr.mxu0 0.0
    %2924 = vmatpush1.msra.mxu0 0.0
    %2925 = vmatprep.subr.mxu0 0.0
    %2926 = vmatpush1.msra.mxu0 0.0
    %2927 = vmatprep.subr.mxu0 0.0
    %2928 = vmatpush1.msra.mxu0 0.0
    %2929 = vmatprep.subr.mxu0 0.0
    %2930 = vmatpush1.msra.mxu0 0.0
    %2931 = vmatprep.subr.mxu0 0.0
    %2932 = vmatpush1.msra.mxu0 0.0
    %2933 = vmatprep.subr.mxu0 0.0
    %2934 = vmatpush1.msra.mxu0 0.0
    %2935 = vmatprep.subr.mxu0 0.0
    %2936 = vmatpush1.msra.mxu0 0.0
    %2937 = vmatprep.subr.mxu0 0.0
    %2938 = vmatpush1.msra.mxu0 0.0
    %2939 = vmatprep.subr.mxu0 0.0
    %2940 = vmatpush1.msra.mxu0 0.0
    %2941 = vmatprep.subr.mxu0 0.0
    %2942 = vmatpush1.msra.mxu0 0.0
    %2943 = vmatprep.subr.mxu0 0.0
    %2944 = vmatpush1.msra.mxu0 0.0
    %2945 = vmatprep.subr.mxu0 0.0
    %2946 = vmatpush1.msra.mxu0 0.0
    %2947 = vmatprep.subr.mxu0 0.0
    %2948 = vmatpush1.msra.mxu0 0.0
    %2949 = vmatprep.subr.mxu0 0.0
    %2950 = vmatpush1.msra.mxu0 0.0
    %2951 = vmatprep.subr.mxu0 0.0
    %2952 = vmatpush1.msra.mxu0 0.0
    %2953 = vmatprep.mubr.f32.mxu0 0.0
    %2954 = vmatmul.mubr.f32.gmra.mrb[0].mxu0 %v2802
    %v2955 = vpop.f32.mrb[0].mxu0
    %v2956 = vadd.f32 %v2872, %v2955
    %v2957 = vpop.f32.mrb[0].mxu0
    %v2958 = vadd.f32 %v2876, %v2957
    %2959 = vdwg.mxu0
    %2960 = vmatprep.subr.mxu0 %v2806
    %2961 = vmatpush1.msra.mxu0 %v2805
    %2962 = vmatprep.subr.mxu0 %v2810
    %2963 = vmatpush1.msra.mxu0 %v2809
    %2964 = vmatprep.subr.mxu0 %v2814
    %2965 = vmatpush1.msra.mxu0 %v2813
    %2966 = vmatprep.subr.mxu0 %v2818
    %2967 = vmatpush1.msra.mxu0 %v2817
    %2968 = vmatprep.subr.mxu0 %v2822
    %2969 = vmatpush1.msra.mxu0 %v2821
    %2970 = vmatprep.subr.mxu0 %v2826
    %2971 = vmatpush1.msra.mxu0 %v2825
    %2972 = vmatprep.subr.mxu0 %v2830
    %2973 = vmatpush1.msra.mxu0 %v2829
    %2974 = vmatprep.subr.mxu0 %v2834
    %2975 = vmatpush1.msra.mxu0 %v2833
    %2976 = vmatprep.subr.mxu0 %v2838
    %2977 = vmatpush1.msra.mxu0 %v2837
    %2978 = vmatprep.subr.mxu0 %v2842
    %2979 = vmatpush1.msra.mxu0 %v2841
    %2980 = vmatprep.subr.mxu0 %v2846
    %2981 = vmatpush1.msra.mxu0 %v2845
    %2982 = vmatprep.subr.mxu0 %v2850
    %2983 = vmatpush1.msra.mxu0 %v2849
    %2984 = vmatprep.subr.mxu0 %v2854
    %2985 = vmatpush1.msra.mxu0 %v2853
    %2986 = vmatprep.subr.mxu0 %v2858
    %2987 = vmatpush1.msra.mxu0 %v2857
    %2988 = vmatprep.subr.mxu0 %v2862
    %2989 = vmatpush1.msra.mxu0 %v2861
    %2990 = vmatprep.subr.mxu0 %v2866
    %2991 = vmatpush1.msra.mxu0 %v2865
    %2992 = vmatprep.subr.mxu0 0.0
    %2993 = vmatpush1.msra.mxu0 0.0
    %2994 = vmatprep.subr.mxu0 0.0
    %2995 = vmatpush1.msra.mxu0 0.0
    %2996 = vmatprep.subr.mxu0 0.0
    %2997 = vmatpush1.msra.mxu0 0.0
    %2998 = vmatprep.subr.mxu0 0.0
    %2999 = vmatpush1.msra.mxu0 0.0
    %3000 = vmatprep.subr.mxu0 0.0
    %3001 = vmatpush1.msra.mxu0 0.0
    %3002 = vmatprep.subr.mxu0 0.0
    %3003 = vmatpush1.msra.mxu0 0.0
    %3004 = vmatprep.subr.mxu0 0.0
    %3005 = vmatpush1.msra.mxu0 0.0
    %3006 = vmatprep.subr.mxu0 0.0
    %3007 = vmatpush1.msra.mxu0 0.0
    %3008 = vmatprep.subr.mxu0 0.0
    %3009 = vmatpush1.msra.mxu0 0.0
    %3010 = vmatprep.subr.mxu0 0.0
    %3011 = vmatpush1.msra.mxu0 0.0
    %3012 = vmatprep.subr.mxu0 0.0
    %3013 = vmatpush1.msra.mxu0 0.0
    %3014 = vmatprep.subr.mxu0 0.0
    %3015 = vmatpush1.msra.mxu0 0.0
    %3016 = vmatprep.subr.mxu0 0.0
    %3017 = vmatpush1.msra.mxu0 0.0
    %3018 = vmatprep.subr.mxu0 0.0
    %3019 = vmatpush1.msra.mxu0 0.0
    %3020 = vmatprep.subr.mxu0 0.0
    %3021 = vmatpush1.msra.mxu0 0.0
    %3022 = vmatprep.subr.mxu0 0.0
    %3023 = vmatpush1.msra.mxu0 0.0
    %3024 = vmatprep.mubr.f32.mxu0 0.0
    %3025 = vmatmul.mubr.f32.gmra.mrb[0].mxu0 %v2802
    %v3026 = vpop.f32.mrb[0].mxu0
    %v3027 = vadd.f32 %v2880, %v3026
    %v3028 = vpop.f32.mrb[0].mxu0
    %v3029 = vadd.f32 %v2884, %v3028
    %3030 = vdwg.mxu0
    %v3031 = vmax.f32 %v2956, 0.0
    %v3032 = vmax.f32 %v2958, 0.0
    %v3033 = vmax.f32 %v3027, 0.0
    %v3034 = vmax.f32 %v3029, 0.0
    %v3035 = vld [vmem:[#allocation15] sm:$0xff]
    %v3036 = vld [vmem:[#allocation15 + $0x8] sm:$0xff]
    %v3037 = vld [vmem:[#allocation15 + $0x10] sm:$0xff]
    %v3038 = vld [vmem:[#allocation15 + $0x18] sm:$0xff]
    %v3039 = vld [vmem:[#allocation15 + $0x20] sm:$0xff]
    %v3040 = vld [vmem:[#allocation15 + $0x28] sm:$0xff]
    %v3041 = vld [vmem:[#allocation15 + $0x30] sm:$0xff]
    %v3042 = vld [vmem:[#allocation15 + $0x38] sm:$0xff]
    %v3043 = vld [vmem:[#allocation15 + $0x40] sm:$0xff]
    %v3044 = vld [vmem:[#allocation15 + $0x48] sm:$0xff]
    %v3045 = vld [vmem:[#allocation15 + $0x50] sm:$0xff]
    %v3046 = vld [vmem:[#allocation15 + $0x58] sm:$0xff]
    %v3047 = vld [vmem:[#allocation15 + $0x60] sm:$0xff]
    %v3048 = vld [vmem:[#allocation15 + $0x68] sm:$0xff]
    %v3049 = vld [vmem:[#allocation15 + $0x70] sm:$0xff]
    %v3050 = vld [vmem:[#allocation15 + $0x78] sm:$0xff]
    %v3051 = vld [vmem:[#allocation15 + $0x80] sm:$0xff]
    %v3052 = vld [vmem:[#allocation15 + $0x88] sm:$0xff]
    %v3053 = vld [vmem:[#allocation15 + $0x90] sm:$0xff]
    %v3054 = vld [vmem:[#allocation15 + $0x98] sm:$0xff]
    %v3055 = vld [vmem:[#allocation15 + $0xa0] sm:$0xff]
    %v3056 = vld [vmem:[#allocation15 + $0xa8] sm:$0xff]
    %v3057 = vld [vmem:[#allocation15 + $0xb0] sm:$0xff]
    %v3058 = vld [vmem:[#allocation15 + $0xb8] sm:$0xff]
    %v3059 = vld [vmem:[#allocation15 + $0xc0] sm:$0xff]
    %v3060 = vld [vmem:[#allocation15 + $0xc8] sm:$0xff]
    %v3061 = vld [vmem:[#allocation15 + $0xd0] sm:$0xff]
    %v3062 = vld [vmem:[#allocation15 + $0xd8] sm:$0xff]
    %v3063 = vld [vmem:[#allocation15 + $0xe0] sm:$0xff]
    %v3064 = vld [vmem:[#allocation15 + $0xe8] sm:$0xff]
    %v3065 = vld [vmem:[#allocation15 + $0xf0] sm:$0xff]
    %v3066 = vld [vmem:[#allocation15 + $0xf8] sm:$0xff]
    %v3067 = vld [vmem:[#allocation15 + $0x100] sm:$0xff]
    %v3068 = vld [vmem:[#allocation15 + $0x108] sm:$0xff]
    %v3069 = vld [vmem:[#allocation15 + $0x110] sm:$0xff]
    %v3070 = vld [vmem:[#allocation15 + $0x118] sm:$0xff]
    %v3071 = vld [vmem:[#allocation15 + $0x120] sm:$0xff]
    %v3072 = vld [vmem:[#allocation15 + $0x128] sm:$0xff]
    %v3073 = vld [vmem:[#allocation15 + $0x130] sm:$0xff]
    %v3074 = vld [vmem:[#allocation15 + $0x138] sm:$0xff]
    %v3075 = vld [vmem:[#allocation15 + $0x140] sm:$0xff]
    %v3076 = vld [vmem:[#allocation15 + $0x148] sm:$0xff]
    %v3077 = vld [vmem:[#allocation15 + $0x150] sm:$0xff]
    %v3078 = vld [vmem:[#allocation15 + $0x158] sm:$0xff]
    %v3079 = vld [vmem:[#allocation15 + $0x160] sm:$0xff]
    %v3080 = vld [vmem:[#allocation15 + $0x168] sm:$0xff]
    %v3081 = vld [vmem:[#allocation15 + $0x170] sm:$0xff]
    %v3082 = vld [vmem:[#allocation15 + $0x178] sm:$0xff]
    %v3083 = vld [vmem:[#allocation15 + $0x180] sm:$0xff]
    %v3084 = vld [vmem:[#allocation15 + $0x188] sm:$0xff]
    %v3085 = vld [vmem:[#allocation15 + $0x190] sm:$0xff]
    %v3086 = vld [vmem:[#allocation15 + $0x198] sm:$0xff]
    %v3087 = vld [vmem:[#allocation15 + $0x1a0] sm:$0xff]
    %v3088 = vld [vmem:[#allocation15 + $0x1a8] sm:$0xff]
    %v3089 = vld [vmem:[#allocation15 + $0x1b0] sm:$0xff]
    %v3090 = vld [vmem:[#allocation15 + $0x1b8] sm:$0xff]
    %v3091 = vld [vmem:[#allocation15 + $0x1c0] sm:$0xff]
    %v3092 = vld [vmem:[#allocation15 + $0x1c8] sm:$0xff]
    %v3093 = vld [vmem:[#allocation15 + $0x1d0] sm:$0xff]
    %v3094 = vld [vmem:[#allocation15 + $0x1d8] sm:$0xff]
    %v3095 = vld [vmem:[#allocation15 + $0x1e0] sm:$0xff]
    %v3096 = vld [vmem:[#allocation15 + $0x1e8] sm:$0xff]
    %v3097 = vld [vmem:[#allocation15 + $0x1f0] sm:$0xff]
    %v3098 = vld [vmem:[#allocation15 + $0x1f8] sm:$0xff]
    %v3099 = vld [vmem:[#allocation16] sm:$0x1]
    %v3101 = vlaneseq
    %v3102 = vshrl.u32 %v3101, 7
    %v3103 = vsub.s32 0, %v3102
    %v3104 = vrot.slane %v3099, %v3103
    %3106 = vmatprep.subr.mxu0 0.0
    %3107 = vmatpush1.msra.mxu0 %v3035
    %3108 = vmatprep.subr.mxu0 0.0
    %3109 = vmatpush1.msra.mxu0 %v3036
    %3110 = vmatprep.subr.mxu0 0.0
    %3111 = vmatpush1.msra.mxu0 %v3037
    %3112 = vmatprep.subr.mxu0 0.0
    %3113 = vmatpush1.msra.mxu0 %v3038
    %3114 = vmatprep.subr.mxu0 0.0
    %3115 = vmatpush1.msra.mxu0 %v3039
    %3116 = vmatprep.subr.mxu0 0.0
    %3117 = vmatpush1.msra.mxu0 %v3040
    %3118 = vmatprep.subr.mxu0 0.0
    %3119 = vmatpush1.msra.mxu0 %v3041
    %3120 = vmatprep.subr.mxu0 0.0
    %3121 = vmatpush1.msra.mxu0 %v3042
    %3122 = vmatprep.subr.mxu0 0.0
    %3123 = vmatpush1.msra.mxu0 %v3043
    %3124 = vmatprep.subr.mxu0 0.0
    %3125 = vmatpush1.msra.mxu0 %v3044
    %3126 = vmatprep.subr.mxu0 0.0
    %3127 = vmatpush1.msra.mxu0 %v3045
    %3128 = vmatprep.subr.mxu0 0.0
    %3129 = vmatpush1.msra.mxu0 %v3046
    %3130 = vmatprep.subr.mxu0 0.0
    %3131 = vmatpush1.msra.mxu0 %v3047
    %3132 = vmatprep.subr.mxu0 0.0
    %3133 = vmatpush1.msra.mxu0 %v3048
    %3134 = vmatprep.subr.mxu0 0.0
    %3135 = vmatpush1.msra.mxu0 %v3049
    %3136 = vmatprep.subr.mxu0 0.0
    %3137 = vmatpush1.msra.mxu0 %v3050
    %3138 = vmatprep.subr.mxu0 0.0
    %3139 = vmatpush1.msra.mxu0 %v3051
    %3140 = vmatprep.subr.mxu0 0.0
    %3141 = vmatpush1.msra.mxu0 %v3052
    %3142 = vmatprep.subr.mxu0 0.0
    %3143 = vmatpush1.msra.mxu0 %v3053
    %3144 = vmatprep.subr.mxu0 0.0
    %3145 = vmatpush1.msra.mxu0 %v3054
    %3146 = vmatprep.subr.mxu0 0.0
    %3147 = vmatpush1.msra.mxu0 %v3055
    %3148 = vmatprep.subr.mxu0 0.0
    %3149 = vmatpush1.msra.mxu0 %v3056
    %3150 = vmatprep.subr.mxu0 0.0
    %3151 = vmatpush1.msra.mxu0 %v3057
    %3152 = vmatprep.subr.mxu0 0.0
    %3153 = vmatpush1.msra.mxu0 %v3058
    %3154 = vmatprep.subr.mxu0 0.0
    %3155 = vmatpush1.msra.mxu0 %v3059
    %3156 = vmatprep.subr.mxu0 0.0
    %3157 = vmatpush1.msra.mxu0 %v3060
    %3158 = vmatprep.subr.mxu0 0.0
    %3159 = vmatpush1.msra.mxu0 %v3061
    %3160 = vmatprep.subr.mxu0 0.0
    %3161 = vmatpush1.msra.mxu0 %v3062
    %3162 = vmatprep.subr.mxu0 0.0
    %3163 = vmatpush1.msra.mxu0 %v3063
    %3164 = vmatprep.subr.mxu0 0.0
    %3165 = vmatpush1.msra.mxu0 %v3064
    %3166 = vmatprep.subr.mxu0 0.0
    %3167 = vmatpush1.msra.mxu0 %v3065
    %3168 = vmatprep.subr.mxu0 0.0
    %3169 = vmatpush1.msra.mxu0 %v3066
    %3170 = vmatprep.mubr.f32.mxu0 %v3032
    %3171 = vmatmul.mubr.f32.gmra.mrb[0].mxu0 %v3031
    %v3172 = vpop.f32.mrb[0].mxu0
    %v3173 = vadd.f32 %v3104, %v3172
    %v3174 = vpop.f32.mrb[0].mxu0
    %3175 = vdwg.mxu0
    %3176 = vmatprep.subr.mxu0 0.0
    %3177 = vmatpush1.msra.mxu0 %v3067
    %3178 = vmatprep.subr.mxu0 0.0
    %3179 = vmatpush1.msra.mxu0 %v3068
    %3180 = vmatprep.subr.mxu0 0.0
    %3181 = vmatpush1.msra.mxu0 %v3069
    %3182 = vmatprep.subr.mxu0 0.0
    %3183 = vmatpush1.msra.mxu0 %v3070
    %3184 = vmatprep.subr.mxu0 0.0
    %3185 = vmatpush1.msra.mxu0 %v3071
    %3186 = vmatprep.subr.mxu0 0.0
    %3187 = vmatpush1.msra.mxu0 %v3072
    %3188 = vmatprep.subr.mxu0 0.0
    %3189 = vmatpush1.msra.mxu0 %v3073
    %3190 = vmatprep.subr.mxu0 0.0
    %3191 = vmatpush1.msra.mxu0 %v3074
    %3192 = vmatprep.subr.mxu0 0.0
    %3193 = vmatpush1.msra.mxu0 %v3075
    %3194 = vmatprep.subr.mxu0 0.0
    %3195 = vmatpush1.msra.mxu0 %v3076
    %3196 = vmatprep.subr.mxu0 0.0
    %3197 = vmatpush1.msra.mxu0 %v3077
    %3198 = vmatprep.subr.mxu0 0.0
    %3199 = vmatpush1.msra.mxu0 %v3078
    %3200 = vmatprep.subr.mxu0 0.0
    %3201 = vmatpush1.msra.mxu0 %v3079
    %3202 = vmatprep.subr.mxu0 0.0
    %3203 = vmatpush1.msra.mxu0 %v3080
    %3204 = vmatprep.subr.mxu0 0.0
    %3205 = vmatpush1.msra.mxu0 %v3081
    %3206 = vmatprep.subr.mxu0 0.0
    %3207 = vmatpush1.msra.mxu0 %v3082
    %3208 = vmatprep.subr.mxu0 0.0
    %3209 = vmatpush1.msra.mxu0 %v3083
    %3210 = vmatprep.subr.mxu0 0.0
    %3211 = vmatpush1.msra.mxu0 %v3084
    %3212 = vmatprep.subr.mxu0 0.0
    %3213 = vmatpush1.msra.mxu0 %v3085
    %3214 = vmatprep.subr.mxu0 0.0
    %3215 = vmatpush1.msra.mxu0 %v3086
    %3216 = vmatprep.subr.mxu0 0.0
    %3217 = vmatpush1.msra.mxu0 %v3087
    %3218 = vmatprep.subr.mxu0 0.0
    %3219 = vmatpush1.msra.mxu0 %v3088
    %3220 = vmatprep.subr.mxu0 0.0
    %3221 = vmatpush1.msra.mxu0 %v3089
    %3222 = vmatprep.subr.mxu0 0.0
    %3223 = vmatpush1.msra.mxu0 %v3090
    %3224 = vmatprep.subr.mxu0 0.0
    %3225 = vmatpush1.msra.mxu0 %v3091
    %3226 = vmatprep.subr.mxu0 0.0
    %3227 = vmatpush1.msra.mxu0 %v3092
    %3228 = vmatprep.subr.mxu0 0.0
    %3229 = vmatpush1.msra.mxu0 %v3093
    %3230 = vmatprep.subr.mxu0 0.0
    %3231 = vmatpush1.msra.mxu0 %v3094
    %3232 = vmatprep.subr.mxu0 0.0
    %3233 = vmatpush1.msra.mxu0 %v3095
    %3234 = vmatprep.subr.mxu0 0.0
    %3235 = vmatpush1.msra.mxu0 %v3096
    %3236 = vmatprep.subr.mxu0 0.0
    %3237 = vmatpush1.msra.mxu0 %v3097
    %3238 = vmatprep.subr.mxu0 0.0
    %3239 = vmatpush1.msra.mxu0 %v3098
    %3240 = vmatprep.mubr.f32.mxu0 %v3034
    %3241 = vmatmul.mubr.f32.gmra.mrb[0].mxu0 %v3033
    %v3242 = vpop.f32.mrb[0].mxu0
    %v3243 = vadd.f32 %v3173, %v3242
    %v3244 = vpop.f32.mrb[0].mxu0
    %3245 = vdwg.mxu0
    %v3246 = vxor.u32 %v3243, 2147483648
    %v3247 = vmul.f32 %v3246, 1.442695
    %v3248 = vpow.pop %v3247
    %v3249 = vadd.f32 %v3248, 1.0
    %v3250 = vrcp.pop %v3249
    %v3251 = vmul.f32 1.0, %v3250
    %3252 = vst [vmem:[%s11] sm:$0x3] %v3251
    // Predicated region
    $region86: #{neural_network_forward.1} parent=1 // pred_check
      _
    $region87: #{neural_network_forward.1} parent=1 // pred_check_branch
      %3254 = sbr.rel (0) target = $region89
    $region88: #{neural_network_forward.1} parent=1 // pred_region
      _
    $region89: #{neural_network_forward.1} parent=1 // pred_fallthru
      _
    // Predicated region
    $region90: #{neural_network_forward.1} parent=1 // pred_check
      _
    $region91: #{neural_network_forward.1} parent=1 // pred_check_branch
      %3256 = sbr.rel (0) target = $region93
    $region92: #{neural_network_forward.1} parent=1 // pred_region
      _
    $region93: #{neural_network_forward.1} parent=1 // pred_fallthru
      _
    %3257 = vsyncpa [#allocation3], 1
    %3258 = vsyncpa [#allocation5], 1
    %3259 = vsyncpa [#allocation8], 1
    %3260 = vsyncpa [#allocation11], 1
    %3261 = vsyncpa [#allocation14], 1
    %3262 = vsyncpa [#allocation17], 1

</llo_original>
